<compile_context>
chip_gen: v7x
topology: tpu7x:2x2x1
jax: 0.10.0
libtpu: 0.0.40
codegen_flags: <defaults>
</compile_context>

<pallas_src>
import functools

import jax
import jax.numpy as jnp
from jax.experimental import pallas as pl
from jax.experimental.pallas import tpu as pltpu


def _round_up(x, m):
    return (x + m - 1) // m * m


# Switch to the K-tiled layer-1 kernel once resident bf16 w1 would exceed this.
_KTILE_W1_BYTES = 8 * 1024 * 1024
_TK = 2048  # K tile (input-feature tile) for the K-tiled path.


# --------------------------------------------------------------------------
# Kernels
# --------------------------------------------------------------------------
def _mlp_fused_kernel(x_ref, w1_ref, b1_ref, w2_ref, b2_ref, w3_ref, b3_ref,
                      o_ref):
    """relu(relu(relu(x@w1+b1)@w2+b2)@w3+b3) on one batch tile, weights resident."""
    x = x_ref[...].astype(jnp.bfloat16)                       # cast in-register

    h1 = jnp.dot(x, w1_ref[...], preferred_element_type=jnp.float32)
    h1 = jnp.maximum(h1 + b1_ref[...], 0.0)                   # f32 epilogue

    h2 = jnp.dot(h1.astype(jnp.bfloat16), w2_ref[...],
                 preferred_element_type=jnp.float32)
    h2 = jnp.maximum(h2 + b2_ref[...], 0.0)

    h3 = jnp.dot(h2.astype(jnp.bfloat16), w3_ref[...],
                 preferred_element_type=jnp.float32)
    h3 = jnp.maximum(h3 + b3_ref[...], 0.0)

    o_ref[...] = h3.astype(o_ref.dtype)                       # bf16, lane-dense


def _mlp_ktiled_kernel(x_ref, w1_ref, b1_ref, w2_ref, b2_ref, w3_ref, b3_ref,
                       o_ref, h1_acc, *, d_in, tk):
    """Layer-1 reduction tiled over grid axis 1 (for d_in too large to hold w1)."""
    k = pl.program_id(1)

    @pl.when(k == 0)
    def _():
        h1_acc[...] = jnp.zeros_like(h1_acc)

    x = x_ref[...]
    if d_in % tk != 0:
        # Last K tile is ragged: OOB lanes hold stale VMEM -> mask them out.
        col = jax.lax.broadcasted_iota(jnp.int32, x.shape, 1) + k * tk
        x = jnp.where(col < d_in, x, 0.0)

    h1_acc[...] += jnp.dot(x.astype(jnp.bfloat16), w1_ref[...],
                           preferred_element_type=jnp.float32)

    @pl.when(k == pl.num_programs(1) - 1)
    def _():
        h1 = jnp.maximum(h1_acc[...] + b1_ref[...], 0.0)
        h2 = jnp.dot(h1.astype(jnp.bfloat16), w2_ref[...],
                     preferred_element_type=jnp.float32)
        h2 = jnp.maximum(h2 + b2_ref[...], 0.0)
        h3 = jnp.dot(h2.astype(jnp.bfloat16), w3_ref[...],
                     preferred_element_type=jnp.float32)
        h3 = jnp.maximum(h3 + b3_ref[...], 0.0)
        o_ref[...] = h3.astype(o_ref.dtype)


# --------------------------------------------------------------------------
# One-time parameter packing (padding + bf16 cast hoisted out of the fwd path)
# --------------------------------------------------------------------------
def pack_params(params, max_sequence_length, embedding_size):
    """Pad to lane-aligned shapes and cast MXU operands to bf16, once."""
    d_in = max_sequence_length * embedding_size
    w1, b1, w2, b2, w3, b3 = params
    h1_dim, h2_dim, out_dim = w1.shape[1], w2.shape[1], w3.shape[1]

    h1_p = _round_up(h1_dim, 128)    # 1500 -> 1536
    h2_p = _round_up(h2_dim, 128)    # 128  -> 128
    out_p = _round_up(out_dim, 128)  # 8    -> 128

    use_ktile = d_in * h1_p * 2 > _KTILE_W1_BYTES
    d_in_p = _round_up(d_in, _TK) if use_ktile else d_in  # K-pad only if tiled

    w1_p = jnp.zeros((d_in_p, h1_p), jnp.bfloat16)
    w1_p = w1_p.at[:d_in, :h1_dim].set(w1.astype(jnp.bfloat16))
    b1_p = jnp.zeros((1, h1_p), jnp.float32).at[0, :h1_dim].set(b1.reshape(-1))
    w2_p = jnp.zeros((h1_p, h2_p), jnp.bfloat16)
    w2_p = w2_p.at[:h1_dim, :h2_dim].set(w2.astype(jnp.bfloat16))
    b2_p = jnp.zeros((1, h2_p), jnp.float32).at[0, :h2_dim].set(b2.reshape(-1))
    w3_p = jnp.zeros((h2_p, out_p), jnp.bfloat16)
    w3_p = w3_p.at[:h2_dim, :out_dim].set(w3.astype(jnp.bfloat16))
    b3_p = jnp.zeros((1, out_p), jnp.float32).at[0, :out_dim].set(b3.reshape(-1))

    return {
        "d_in": d_in, "out_dim": out_dim,
        "h1_p": h1_p, "out_p": out_p,
        "use_ktile": use_ktile,
        "tensors": (w1_p, b1_p, w2_p, b2_p, w3_p, b3_p),
    }


# --------------------------------------------------------------------------
# Forward
# --------------------------------------------------------------------------
def low_fidelity_forward(memory_, packed):
    """memory_: (B, S, E) float32 -> (B, 8) float32."""
    B = memory_.shape[0]
    d_in = packed["d_in"]
    out_dim = packed["out_dim"]
    h1_p = packed["h1_p"]
    out_p = packed["out_p"]
    w1_p, b1_p, w2_p, b2_p, w3_p, b3_p = packed["tensors"]

    x = memory_.reshape((B, d_in)).astype(jnp.float32)  # view, no copy/pad

    # Batch tiling: 256 fills the M dim of v6e/v7x MXU passes; small batches
    # round to 16 rows (bf16 sublane packing).
    if B > 256:
        TM = 256
    else:
        TM = min(_round_up(max(B, 1), 16), 256)
    grid_m = pl.cdiv(B, TM)
    # TODO(synk): on v7x (2 TensorCores) force >=2 grid steps for small B so
    # the "parallel" axis can actually shard across both cores.

    def resident_spec(shape, index_map, single_buffer):
        if single_buffer:
            return pl.BlockSpec(shape, index_map,
                                pipeline_mode=pl.Buffered(1))
        return pl.BlockSpec(shape, index_map)

    def run(single_buffer):
        if not packed["use_ktile"]:
            # Fully fused path: all weights VMEM-resident across grid steps.
            res = lambda s: resident_spec(s, lambda i: (0, 0), single_buffer)
            return pl.pallas_call(
                _mlp_fused_kernel,
                out_shape=jax.ShapeDtypeStruct((B, out_p), jnp.bfloat16),
                grid=(grid_m,),
                in_specs=[
                    pl.BlockSpec((TM, d_in), lambda i: (i, 0)),
                    res(w1_p.shape), res(b1_p.shape),
                    res(w2_p.shape), res(b2_p.shape),
                    res(w3_p.shape), res(b3_p.shape),
                ],
                out_specs=pl.BlockSpec((TM, out_p), lambda i: (i, 0)),
                compiler_params=pltpu.CompilerParams(
                    dimension_semantics=("parallel",),
                    vmem_limit_bytes=32 * 1024 * 1024,
                ),
            )(x, w1_p, b1_p, w2_p, b2_p, w3_p, b3_p)

        # K-tiled layer-1 path (large d_in): w1 streamed in (TK, h1_p) blocks,
        # layer-1 accumulates into an f32 scratch; layers 2/3 run on the last
        # K step.  w2/w3/biases stay resident.
        kt = w1_p.shape[0] // _TK
        res = lambda s: resident_spec(s, lambda i, k: (0, 0), single_buffer)
        kern = functools.partial(_mlp_ktiled_kernel, d_in=d_in, tk=_TK)
        return pl.pallas_call(
            kern,
            out_shape=jax.ShapeDtypeStruct((B, out_p), jnp.bfloat16),
            grid=(grid_m, kt),
            in_specs=[
                pl.BlockSpec((TM, _TK), lambda i, k: (i, k)),
                pl.BlockSpec((_TK, h1_p), lambda i, k: (k, 0)),
                res(b1_p.shape),
                res(w2_p.shape), res(b2_p.shape),
                res(w3_p.shape), res(b3_p.shape),
            ],
            out_specs=pl.BlockSpec((TM, out_p), lambda i, k: (i, 0)),
            scratch_shapes=[pltpu.VMEM((TM, h1_p), jnp.float32)],
            compiler_params=pltpu.CompilerParams(
                dimension_semantics=("parallel", "arbitrary"),
                vmem_limit_bytes=32 * 1024 * 1024,
            ),
        )(x, w1_p, b1_p, w2_p, b2_p, w3_p, b3_p)

    try:
        out = run(single_buffer=True)
    except Exception:
        # pl.Buffered(1) unsupported on this jax version -> default buffering.
        out = run(single_buffer=False)

    return out[:, :out_dim].astype(jnp.float32)


# --------------------------------------------------------------------------
# Reference / params / test harness
# --------------------------------------------------------------------------
def init_params(key, max_sequence_length, embedding_size):
    """Synthetic init matching nn.Linear shapes; stored as (in, out) so the
    kernel computes x @ W directly (transpose of PyTorch's (out, in))."""
    d_in = max_sequence_length * embedding_size
    dims = [(d_in, 1500), (1500, 128), (128, 8)]
    params = []
    for fi, fo in dims:
        key, kw, kb = jax.random.split(key, 3)
        bound = 1.0 / (fi ** 0.5)
        w = jax.random.uniform(kw, (fi, fo), jnp.float32, -bound, bound)
        b = jax.random.uniform(kb, (fo,), jnp.float32, -bound, bound)
        params += [w, b]
    return tuple(params)


def reference_forward(memory_, params, max_sequence_length, embedding_size):
    B = memory_.shape[0]
    x = memory_.reshape((B, max_sequence_length * embedding_size))
    w1, b1, w2, b2, w3, b3 = params
    x = jnp.maximum(x @ w1 + b1, 0.0)
    x = jnp.maximum(x @ w2 + b2, 0.0)
    x = jnp.maximum(x @ w3 + b3, 0.0)
    return x


if __name__ == "__main__":
    max_sequence_length = 8
    embedding_size = 32
    batch = 2

    key = jax.random.PRNGKey(0)
    key, k_in = jax.random.split(key)
    memory_ = jax.random.normal(
        k_in, (batch, max_sequence_length, embedding_size), jnp.float32)

    params = init_params(key, max_sequence_length, embedding_size)
    packed = pack_params(params, max_sequence_length, embedding_size)

    out = low_fidelity_forward(memory_, packed)
    out = jax.block_until_ready(out)

    ref = reference_forward(memory_, params, max_sequence_length,
                            embedding_size)
    assert out.shape == (batch, 8), out.shape
    # bf16 MXU inputs + bf16 output store (f32 accumulation) vs f32 reference.
    assert jnp.allclose(out, ref, atol=3e-2, rtol=3e-2), (
        "mismatch vs reference")

    print("KERNEL_OK")
</pallas_src>

<mosaic_0001>
module attributes {stable_mosaic.version = 11 : i64} {
  func.func @_mlp_fused_kernel(%arg0: i32, %arg1: memref<16x256xf32, #tpu.memory_space<vmem>>, %arg2: memref<256x1536xbf16, #tpu.memory_space<vmem>>, %arg3: memref<1x1536xf32, #tpu.memory_space<vmem>>, %arg4: memref<1536x128xbf16, #tpu.memory_space<vmem>>, %arg5: memref<1x128xf32, #tpu.memory_space<vmem>>, %arg6: memref<128x128xbf16, #tpu.memory_space<vmem>>, %arg7: memref<1x128xf32, #tpu.memory_space<vmem>>, %arg8: memref<16x128xbf16, #tpu.memory_space<vmem>>) attributes {dimension_semantics = [#tpu.dimension_semantics<parallel>], iteration_bounds = array<i64: 1>, scalar_prefetch = 0 : i64, scratch_operands = 0 : i64, tpu.core_type = #tpu.core_type<tc>, window_params = [{transform_indices = @transform_0, window_bounds = array<i64: 16, 256>}, {pipeline_mode = #tpu.pipeline_mode<synchronous>, transform_indices = @transform_1, window_bounds = array<i64: 256, 1536>}, {pipeline_mode = #tpu.pipeline_mode<synchronous>, transform_indices = @transform_2, window_bounds = array<i64: 1, 1536>}, {pipeline_mode = #tpu.pipeline_mode<synchronous>, transform_indices = @transform_3, window_bounds = array<i64: 1536, 128>}, {pipeline_mode = #tpu.pipeline_mode<synchronous>, transform_indices = @transform_4, window_bounds = array<i64: 1, 128>}, {pipeline_mode = #tpu.pipeline_mode<synchronous>, transform_indices = @transform_5, window_bounds = array<i64: 128, 128>}, {pipeline_mode = #tpu.pipeline_mode<synchronous>, transform_indices = @transform_6, window_bounds = array<i64: 1, 128>}, {transform_indices = @transform_7, window_bounds = array<i64: 16, 128>}]} {
    %c0 = arith.constant 0 : index
    %c0_0 = arith.constant 0 : index
    %0 = vector.load %arg1[%c0, %c0_0] : memref<16x256xf32, #tpu.memory_space<vmem>>, vector<16x256xf32>
    %1 = arith.truncf %0 : vector<16x256xf32> to vector<16x256xbf16>
    %c0_1 = arith.constant 0 : index
    %c0_2 = arith.constant 0 : index
    %2 = vector.load %arg2[%c0_1, %c0_2] : memref<256x1536xbf16, #tpu.memory_space<vmem>>, vector<256x1536xbf16>
    %cst = arith.constant dense<0.000000e+00> : vector<16x1536xf32>
    %3 = tpu.matmul %1, %2, %cst {dimension_numbers = #tpu.dot_dimension_numbers<[1], [0], [0], [1], [0, 0, 1, 1], [], []>} : vector<16x256xbf16>, vector<256x1536xbf16>, vector<16x1536xf32> -> vector<16x1536xf32>
    %c0_3 = arith.constant 0 : index
    %c0_4 = arith.constant 0 : index
    %4 = vector.load %arg3[%c0_3, %c0_4] : memref<1x1536xf32, #tpu.memory_space<vmem>>, vector<1x1536xf32>
    %5 = vector.broadcast %4 : vector<1x1536xf32> to vector<16x1536xf32>
    %6 = arith.addf %3, %5 : vector<16x1536xf32>
    %cst_5 = arith.constant 0.000000e+00 : f32
    %7 = vector.broadcast %cst_5 : f32 to vector<16x1536xf32>
    %8 = arith.maximumf %6, %7 : vector<16x1536xf32>
    %9 = arith.truncf %8 : vector<16x1536xf32> to vector<16x1536xbf16>
    %c0_6 = arith.constant 0 : index
    %c0_7 = arith.constant 0 : index
    %10 = vector.load %arg4[%c0_6, %c0_7] : memref<1536x128xbf16, #tpu.memory_space<vmem>>, vector<1536x128xbf16>
    %cst_8 = arith.constant dense<0.000000e+00> : vector<16x128xf32>
    %11 = tpu.matmul %9, %10, %cst_8 {dimension_numbers = #tpu.dot_dimension_numbers<[1], [0], [0], [1], [0, 0, 1, 1], [], []>} : vector<16x1536xbf16>, vector<1536x128xbf16>, vector<16x128xf32> -> vector<16x128xf32>
    %c0_9 = arith.constant 0 : index
    %c0_10 = arith.constant 0 : index
    %12 = vector.load %arg5[%c0_9, %c0_10] : memref<1x128xf32, #tpu.memory_space<vmem>>, vector<1x128xf32>
    %13 = vector.broadcast %12 : vector<1x128xf32> to vector<16x128xf32>
    %14 = arith.addf %11, %13 : vector<16x128xf32>
    %cst_11 = arith.constant 0.000000e+00 : f32
    %15 = vector.broadcast %cst_11 : f32 to vector<16x128xf32>
    %16 = arith.maximumf %14, %15 : vector<16x128xf32>
    %17 = arith.truncf %16 : vector<16x128xf32> to vector<16x128xbf16>
    %c0_12 = arith.constant 0 : index
    %c0_13 = arith.constant 0 : index
    %18 = vector.load %arg6[%c0_12, %c0_13] : memref<128x128xbf16, #tpu.memory_space<vmem>>, vector<128x128xbf16>
    %cst_14 = arith.constant dense<0.000000e+00> : vector<16x128xf32>
    %19 = tpu.matmul %17, %18, %cst_14 {dimension_numbers = #tpu.dot_dimension_numbers<[1], [0], [0], [1], [0, 0, 1, 1], [], []>} : vector<16x128xbf16>, vector<128x128xbf16>, vector<16x128xf32> -> vector<16x128xf32>
    %c0_15 = arith.constant 0 : index
    %c0_16 = arith.constant 0 : index
    %20 = vector.load %arg7[%c0_15, %c0_16] : memref<1x128xf32, #tpu.memory_space<vmem>>, vector<1x128xf32>
    %21 = vector.broadcast %20 : vector<1x128xf32> to vector<16x128xf32>
    %22 = arith.addf %19, %21 : vector<16x128xf32>
    %cst_17 = arith.constant 0.000000e+00 : f32
    %23 = vector.broadcast %cst_17 : f32 to vector<16x128xf32>
    %24 = arith.maximumf %22, %23 : vector<16x128xf32>
    %25 = arith.truncf %24 : vector<16x128xf32> to vector<16x128xbf16>
    %c0_18 = arith.constant 0 : index
    %c0_19 = arith.constant 0 : index
    %26 = vector.load %arg8[%c0_18, %c0_19] : memref<16x128xbf16, #tpu.memory_space<vmem>>, vector<16x128xbf16>
    tpu.vector_store %arg8[%c0_18, %c0_19], %25 {strides = array<i32>} : memref<16x128xbf16, #tpu.memory_space<vmem>>, vector<16x128xbf16>,
    return
  }
  func.func @transform_0(%arg0: i32) -> (i32, i32) {
    %c0_i32 = arith.constant 0 : i32
    %c0_i32_0 = arith.constant 0 : i32
    return %arg0, %c0_i32 : i32, i32
  }
  func.func @transform_1(%arg0: i32) -> (i32, i32) {
    %c0_i32 = arith.constant 0 : i32
    %c0_i32_0 = arith.constant 0 : i32
    %c0_i32_1 = arith.constant 0 : i32
    return %c0_i32, %c0_i32_0 : i32, i32
  }
  func.func @transform_2(%arg0: i32) -> (i32, i32) {
    %c0_i32 = arith.constant 0 : i32
    %c0_i32_0 = arith.constant 0 : i32
    %c0_i32_1 = arith.constant 0 : i32
    return %c0_i32, %c0_i32_0 : i32, i32
  }
  func.func @transform_3(%arg0: i32) -> (i32, i32) {
    %c0_i32 = arith.constant 0 : i32
    %c0_i32_0 = arith.constant 0 : i32
    %c0_i32_1 = arith.constant 0 : i32
    return %c0_i32, %c0_i32_0 : i32, i32
  }
  func.func @transform_4(%arg0: i32) -> (i32, i32) {
    %c0_i32 = arith.constant 0 : i32
    %c0_i32_0 = arith.constant 0 : i32
    %c0_i32_1 = arith.constant 0 : i32
    return %c0_i32, %c0_i32_0 : i32, i32
  }
  func.func @transform_5(%arg0: i32) -> (i32, i32) {
    %c0_i32 = arith.constant 0 : i32
    %c0_i32_0 = arith.constant 0 : i32
    %c0_i32_1 = arith.constant 0 : i32
    return %c0_i32, %c0_i32_0 : i32, i32
  }
  func.func @transform_6(%arg0: i32) -> (i32, i32) {
    %c0_i32 = arith.constant 0 : i32
    %c0_i32_0 = arith.constant 0 : i32
    %c0_i32_1 = arith.constant 0 : i32
    return %c0_i32, %c0_i32_0 : i32, i32
  }
  func.func @transform_7(%arg0: i32) -> (i32, i32) {
    %c0_i32 = arith.constant 0 : i32
    %c0_i32_0 = arith.constant 0 : i32
    return %arg0, %c0_i32 : i32, i32
  }
}

module attributes {stable_mosaic.version = 11 : i64} {
  func.func @_mlp_fused_kernel(%arg0: i32, %arg1: memref<16x256xf32, #tpu.memory_space<vmem>>, %arg2: memref<256x1536xbf16, #tpu.memory_space<vmem>>, %arg3: memref<1x1536xf32, #tpu.memory_space<vmem>>, %arg4: memref<1536x128xbf16, #tpu.memory_space<vmem>>, %arg5: memref<1x128xf32, #tpu.memory_space<vmem>>, %arg6: memref<128x128xbf16, #tpu.memory_space<vmem>>, %arg7: memref<1x128xf32, #tpu.memory_space<vmem>>, %arg8: memref<16x128xbf16, #tpu.memory_space<vmem>>) attributes {dimension_semantics = [#tpu.dimension_semantics<parallel>], iteration_bounds = array<i64: 1>, scalar_prefetch = 0 : i64, scratch_operands = 0 : i64, tpu.core_type = #tpu.core_type<tc>, window_params = [{transform_indices = @transform_0, window_bounds = array<i64: 16, 256>}, {pipeline_mode = #tpu.pipeline_mode<synchronous>, transform_indices = @transform_1, window_bounds = array<i64: 256, 1536>}, {pipeline_mode = #tpu.pipeline_mode<synchronous>, transform_indices = @transform_2, window_bounds = array<i64: 1, 1536>}, {pipeline_mode = #tpu.pipeline_mode<synchronous>, transform_indices = @transform_3, window_bounds = array<i64: 1536, 128>}, {pipeline_mode = #tpu.pipeline_mode<synchronous>, transform_indices = @transform_4, window_bounds = array<i64: 1, 128>}, {pipeline_mode = #tpu.pipeline_mode<synchronous>, transform_indices = @transform_5, window_bounds = array<i64: 128, 128>}, {pipeline_mode = #tpu.pipeline_mode<synchronous>, transform_indices = @transform_6, window_bounds = array<i64: 1, 128>}, {transform_indices = @transform_7, window_bounds = array<i64: 16, 128>}]} {
    %c0 = arith.constant 0 : index
    %c0_0 = arith.constant 0 : index
    %0 = vector.load %arg1[%c0, %c0_0] : memref<16x256xf32, #tpu.memory_space<vmem>>, vector<16x256xf32>
    %1 = arith.truncf %0 : vector<16x256xf32> to vector<16x256xbf16>
    %c0_1 = arith.constant 0 : index
    %c0_2 = arith.constant 0 : index
    %2 = vector.load %arg2[%c0_1, %c0_2] : memref<256x1536xbf16, #tpu.memory_space<vmem>>, vector<256x1536xbf16>
    %cst = arith.constant dense<0.000000e+00> : vector<16x1536xf32>
    %3 = tpu.matmul %1, %2, %cst {dimension_numbers = #tpu.dot_dimension_numbers<[1], [0], [0], [1], [0, 0, 1, 1], [], []>} : vector<16x256xbf16>, vector<256x1536xbf16>, vector<16x1536xf32> -> vector<16x1536xf32>
    %c0_3 = arith.constant 0 : index
    %c0_4 = arith.constant 0 : index
    %4 = vector.load %arg3[%c0_3, %c0_4] : memref<1x1536xf32, #tpu.memory_space<vmem>>, vector<1x1536xf32>
    %5 = vector.broadcast %4 : vector<1x1536xf32> to vector<16x1536xf32>
    %6 = arith.addf %3, %5 : vector<16x1536xf32>
    %cst_5 = arith.constant 0.000000e+00 : f32
    %7 = vector.broadcast %cst_5 : f32 to vector<16x1536xf32>
    %8 = arith.maximumf %6, %7 : vector<16x1536xf32>
    %9 = arith.truncf %8 : vector<16x1536xf32> to vector<16x1536xbf16>
    %c0_6 = arith.constant 0 : index
    %c0_7 = arith.constant 0 : index
    %10 = vector.load %arg4[%c0_6, %c0_7] : memref<1536x128xbf16, #tpu.memory_space<vmem>>, vector<1536x128xbf16>
    %cst_8 = arith.constant dense<0.000000e+00> : vector<16x128xf32>
    %11 = tpu.matmul %9, %10, %cst_8 {dimension_numbers = #tpu.dot_dimension_numbers<[1], [0], [0], [1], [0, 0, 1, 1], [], []>} : vector<16x1536xbf16>, vector<1536x128xbf16>, vector<16x128xf32> -> vector<16x128xf32>
    %c0_9 = arith.constant 0 : index
    %c0_10 = arith.constant 0 : index
    %12 = vector.load %arg5[%c0_9, %c0_10] : memref<1x128xf32, #tpu.memory_space<vmem>>, vector<1x128xf32>
    %13 = vector.broadcast %12 : vector<1x128xf32> to vector<16x128xf32>
    %14 = arith.addf %11, %13 : vector<16x128xf32>
    %cst_11 = arith.constant 0.000000e+00 : f32
    %15 = vector.broadcast %cst_11 : f32 to vector<16x128xf32>
    %16 = arith.maximumf %14, %15 : vector<16x128xf32>
    %17 = arith.truncf %16 : vector<16x128xf32> to vector<16x128xbf16>
    %c0_12 = arith.constant 0 : index
    %c0_13 = arith.constant 0 : index
    %18 = vector.load %arg6[%c0_12, %c0_13] : memref<128x128xbf16, #tpu.memory_space<vmem>>, vector<128x128xbf16>
    %cst_14 = arith.constant dense<0.000000e+00> : vector<16x128xf32>
    %19 = tpu.matmul %17, %18, %cst_14 {dimension_numbers = #tpu.dot_dimension_numbers<[1], [0], [0], [1], [0, 0, 1, 1], [], []>} : vector<16x128xbf16>, vector<128x128xbf16>, vector<16x128xf32> -> vector<16x128xf32>
    %c0_15 = arith.constant 0 : index
    %c0_16 = arith.constant 0 : index
    %20 = vector.load %arg7[%c0_15, %c0_16] : memref<1x128xf32, #tpu.memory_space<vmem>>, vector<1x128xf32>
    %21 = vector.broadcast %20 : vector<1x128xf32> to vector<16x128xf32>
    %22 = arith.addf %19, %21 : vector<16x128xf32>
    %cst_17 = arith.constant 0.000000e+00 : f32
    %23 = vector.broadcast %cst_17 : f32 to vector<16x128xf32>
    %24 = arith.maximumf %22, %23 : vector<16x128xf32>
    %25 = arith.truncf %24 : vector<16x128xf32> to vector<16x128xbf16>
    %c0_18 = arith.constant 0 : index
    %c0_19 = arith.constant 0 : index
    %26 = vector.load %arg8[%c0_18, %c0_19] : memref<16x128xbf16, #tpu.memory_space<vmem>>, vector<16x128xbf16>
    tpu.vector_store %arg8[%c0_18, %c0_19], %25 {strides = array<i32>} : memref<16x128xbf16, #tpu.memory_space<vmem>>, vector<16x128xbf16>,
    return
  }
  func.func @transform_0(%arg0: i32) -> (i32, i32) {
    %c0_i32 = arith.constant 0 : i32
    %c0_i32_0 = arith.constant 0 : i32
    return %arg0, %c0_i32 : i32, i32
  }
  func.func @transform_1(%arg0: i32) -> (i32, i32) {
    %c0_i32 = arith.constant 0 : i32
    %c0_i32_0 = arith.constant 0 : i32
    %c0_i32_1 = arith.constant 0 : i32
    return %c0_i32, %c0_i32_0 : i32, i32
  }
  func.func @transform_2(%arg0: i32) -> (i32, i32) {
    %c0_i32 = arith.constant 0 : i32
    %c0_i32_0 = arith.constant 0 : i32
    %c0_i32_1 = arith.constant 0 : i32
    return %c0_i32, %c0_i32_0 : i32, i32
  }
  func.func @transform_3(%arg0: i32) -> (i32, i32) {
    %c0_i32 = arith.constant 0 : i32
    %c0_i32_0 = arith.constant 0 : i32
    %c0_i32_1 = arith.constant 0 : i32
    return %c0_i32, %c0_i32_0 : i32, i32
  }
  func.func @transform_4(%arg0: i32) -> (i32, i32) {
    %c0_i32 = arith.constant 0 : i32
    %c0_i32_0 = arith.constant 0 : i32
    %c0_i32_1 = arith.constant 0 : i32
    return %c0_i32, %c0_i32_0 : i32, i32
  }
  func.func @transform_5(%arg0: i32) -> (i32, i32) {
    %c0_i32 = arith.constant 0 : i32
    %c0_i32_0 = arith.constant 0 : i32
    %c0_i32_1 = arith.constant 0 : i32
    return %c0_i32, %c0_i32_0 : i32, i32
  }
  func.func @transform_6(%arg0: i32) -> (i32, i32) {
    %c0_i32 = arith.constant 0 : i32
    %c0_i32_0 = arith.constant 0 : i32
    %c0_i32_1 = arith.constant 0 : i32
    return %c0_i32, %c0_i32_0 : i32, i32
  }
  func.func @transform_7(%arg0: i32) -> (i32, i32) {
    %c0_i32 = arith.constant 0 : i32
    %c0_i32_0 = arith.constant 0 : i32
    return %arg0, %c0_i32 : i32, i32
  }
}

</mosaic_0001>

<llo_original>
// kernel: tpu_custom_call.1
$region0: #{tpu_custom_call.1}
  #allocation0 [shape = 'u32[]', space=smem, size = 0x4, offset = 0x4, fixed_abs, tag = 'smem constant byte address 0x4 - core index']
  #allocation1 [shape = 'u32[144,128]{1,0:T(1,128)}', space=vmem, size = 0x12000, scoped, tag = 'internal scratch']
  %s0 = inlined_call_operand.hbm [shape: f32[2,256], index: 0, kind: input, shape index: {}]
  %s1 = inlined_call_operand.hbm [shape: bf16[256,1536], index: 1, kind: input, shape index: {}]
  %s2 = inlined_call_operand.hbm [shape: f32[1,1536], index: 2, kind: input, shape index: {}]
  %s3 = inlined_call_operand.hbm [shape: bf16[1536,128], index: 3, kind: input, shape index: {}]
  %s4 = inlined_call_operand.vmem [shape: f32[1,128], index: 4, kind: input, shape index: {}]
  %s5 = inlined_call_operand.hbm [shape: bf16[128,128], index: 5, kind: input, shape index: {}]
  %s6 = inlined_call_operand.vmem [shape: f32[1,128], index: 6, kind: input, shape index: {}]
  %s7 = inlined_call_operand.hbm [shape: bf16[2,128], index: 7, kind: output, shape index: {}]
  %s8 = sld [smem:[#allocation0]]
  $region58: #{tpu_custom_call.1} parent=0
    _
  %s10 = ssub.s32 1, %s8
  %s11 = scalar_select 0, %s10, %s8
  $region1: #{tpu_custom_call.1} parent=0
    #allocation2 [shape = 'u8[16384]{0}', space=vmem, size = 0x4000, scoped, tag = 'input window, operand 0, single buffered']
    #allocation3 [shape = 's32[1]{0}', space=sflag, size = 0x4, scoped, tag = 'scoped memory for tpu_custom_call.1']
    #allocation4 [shape = 's32[1]{0}', space=sflag, size = 0x4, scoped, tag = 'scoped memory for tpu_custom_call.1']
    #allocation5 [shape = 'u8[786432]{0}', space=vmem, size = 0xc0000, scoped, tag = 'input window, operand 1, single buffered']
    #allocation6 [shape = 's32[1]{0}', space=sflag, size = 0x4, scoped, tag = 'scoped memory for tpu_custom_call.1']
    #allocation7 [shape = 'u8[6144]{0}', space=vmem, size = 0x1800, scoped, tag = 'input window, operand 2, single buffered']
    #allocation8 [shape = 'u8[393216]{0}', space=vmem, size = 0x60000, scoped, tag = 'input window, operand 3, single buffered']
    #allocation9 [shape = 's32[1]{0}', space=sflag, size = 0x4, scoped, tag = 'scoped memory for tpu_custom_call.1']
    #allocation10 [shape = 'u8[32768]{0}', space=vmem, size = 0x8000, scoped, tag = 'input window, operand 5, single buffered']
    #allocation11 [shape = 'u8[4096]{0}', space=vmem, size = 0x1000, scoped, tag = 'output window, operand 0, single buffered']
    %12 = vsyncpa [#allocation3], 0
    %13 = vsyncpa [#allocation6], 0
    %14 = vsyncpa [#allocation9], 0
    %15 = vsyncpa [#allocation4], 0
    // Predicated region
    $region2: #{tpu_custom_call.1} parent=1 // pred_check
      _
    $region3: #{tpu_custom_call.1} parent=1 // pred_check_branch
      %17 = sbr.rel (0) target = $region5
    $region4: #{tpu_custom_call.1} parent=1 // pred_region
      %s19 = ssub.s32 512, 64
      %20 = vsyncadd [#allocation3], %s19
      %s21 = sshll.u32 [#allocation2], 4
      %s22 = int_to_ptr.vmem [resolvable:$true] %s21
      %27 = dma.hbm_to_vmem [thread:$0]  %s0, 64, %s22, [#allocation3], 64, 64, 4
    $region5: #{tpu_custom_call.1} parent=1 // pred_fallthru
      _
    // Predicated region
    $region6: #{tpu_custom_call.1} parent=1 // pred_check
      _
    $region7: #{tpu_custom_call.1} parent=1 // pred_check_branch
      %29 = sbr.rel (0) target = $region9
    $region8: #{tpu_custom_call.1} parent=1 // pred_region
      %s31 = ssub.s32 24576, 24576
      %32 = vsyncadd [#allocation6], %s31
      %s33 = sshll.u32 [#allocation5], 4
      %s34 = int_to_ptr.vmem [resolvable:$true] %s33
      %39 = dma.hbm_to_vmem [thread:$0]  %s1, 24576, %s34, [#allocation6], 768, 768, 48
    $region9: #{tpu_custom_call.1} parent=1 // pred_fallthru
      _
    // Predicated region
    $region10: #{tpu_custom_call.1} parent=1 // pred_check
      _
    $region11: #{tpu_custom_call.1} parent=1 // pred_check_branch
      %41 = sbr.rel (0) target = $region13
    $region12: #{tpu_custom_call.1} parent=1 // pred_region
      %s43 = ssub.s32 192, 192
      %44 = vsyncadd [#allocation6], %s43
      %s46 = sshll.u32 [#allocation7], 4
      %s47 = int_to_ptr.vmem [resolvable:$true] %s46
      %49 = dma.hbm_to_vmem [thread:$0]  %s2, 192, %s47, [#allocation6]
    $region13: #{tpu_custom_call.1} parent=1 // pred_fallthru
      _
    // Predicated region
    $region14: #{tpu_custom_call.1} parent=1 // pred_check
      _
    $region15: #{tpu_custom_call.1} parent=1 // pred_check_branch
      %51 = sbr.rel (0) target = $region17
    $region16: #{tpu_custom_call.1} parent=1 // pred_region
      %s53 = ssub.s32 12288, 12288
      %54 = vsyncadd [#allocation9], %s53
      %s55 = sshll.u32 [#allocation8], 4
      %s56 = int_to_ptr.vmem [resolvable:$true] %s55
      %61 = dma.hbm_to_vmem [thread:$0]  %s3, 12288, %s56, [#allocation9], 64, 64, 4
    $region17: #{tpu_custom_call.1} parent=1 // pred_fallthru
      _
    // Predicated region
    $region18: #{tpu_custom_call.1} parent=1 // pred_check
      _
    $region19: #{tpu_custom_call.1} parent=1 // pred_check_branch
      %63 = sbr.rel (0) target = $region21
    $region20: #{tpu_custom_call.1} parent=1 // pred_region
      _
    $region21: #{tpu_custom_call.1} parent=1 // pred_fallthru
      _
    // Predicated region
    $region22: #{tpu_custom_call.1} parent=1 // pred_check
      _
    $region23: #{tpu_custom_call.1} parent=1 // pred_check_branch
      %65 = sbr.rel (0) target = $region25
    $region24: #{tpu_custom_call.1} parent=1 // pred_region
      %s67 = ssub.s32 1024, 1024
      %68 = vsyncadd [#allocation9], %s67
      %s69 = sshll.u32 [#allocation10], 4
      %s70 = int_to_ptr.vmem [resolvable:$true] %s69
      %75 = dma.hbm_to_vmem [thread:$0]  %s5, 1024, %s70, [#allocation9], 64, 64, 4
    $region25: #{tpu_custom_call.1} parent=1 // pred_fallthru
      _
    // Predicated region
    $region26: #{tpu_custom_call.1} parent=1 // pred_check
      _
    $region27: #{tpu_custom_call.1} parent=1 // pred_check_branch
      %77 = sbr.rel (0) target = $region29
    $region28: #{tpu_custom_call.1} parent=1 // pred_region
      _
    $region29: #{tpu_custom_call.1} parent=1 // pred_fallthru
      _
    // Predicated region
    $region30: #{tpu_custom_call.1} parent=1 // pred_check
      _
    $region31: #{tpu_custom_call.1} parent=1 // pred_check_branch
      %79 = sbr.rel (0) target = $region33
    $region32: #{tpu_custom_call.1} parent=1 // pred_region
      %80 = dma.done [#allocation3], 512
    $region33: #{tpu_custom_call.1} parent=1 // pred_fallthru
      _
    // Predicated region
    $region34: #{tpu_custom_call.1} parent=1 // pred_check
      _
    $region35: #{tpu_custom_call.1} parent=1 // pred_check_branch
      %82 = sbr.rel (0) target = $region37
    $region36: #{tpu_custom_call.1} parent=1 // pred_region
      %83 = dma.done [#allocation6], 24576
    $region37: #{tpu_custom_call.1} parent=1 // pred_fallthru
      _
    // Predicated region
    $region38: #{tpu_custom_call.1} parent=1 // pred_check
      _
    $region39: #{tpu_custom_call.1} parent=1 // pred_check_branch
      %85 = sbr.rel (0) target = $region41
    $region40: #{tpu_custom_call.1} parent=1 // pred_region
      %86 = dma.done [#allocation6], 192
    $region41: #{tpu_custom_call.1} parent=1 // pred_fallthru
      _
    // Predicated region
    $region42: #{tpu_custom_call.1} parent=1 // pred_check
      _
    $region43: #{tpu_custom_call.1} parent=1 // pred_check_branch
      %88 = sbr.rel (0) target = $region45
    $region44: #{tpu_custom_call.1} parent=1 // pred_region
      %89 = dma.done [#allocation9], 12288
    $region45: #{tpu_custom_call.1} parent=1 // pred_fallthru
      _
    // Predicated region
    $region46: #{tpu_custom_call.1} parent=1 // pred_check
      _
    $region47: #{tpu_custom_call.1} parent=1 // pred_check_branch
      %91 = sbr.rel (0) target = $region49
    $region48: #{tpu_custom_call.1} parent=1 // pred_region
      %92 = dma.done [#allocation9], 1024
    $region49: #{tpu_custom_call.1} parent=1 // pred_fallthru
      _
    %v94 = vld [vmem:[#allocation2] sm:$0xf]
    %v95 = vld [vmem:[#allocation2 + $0x4] sm:$0xf]
    %v96 = vld [vmem:[#allocation2 + $0x8] sm:$0xf]
    %v97 = vld [vmem:[#allocation2 + $0xc] sm:$0xf]
    %v98 = vld [vmem:[#allocation2 + $0x10] sm:$0xf]
    %v99 = vld [vmem:[#allocation2 + $0x14] sm:$0xf]
    %v100 = vld [vmem:[#allocation2 + $0x18] sm:$0xf]
    %v101 = vld [vmem:[#allocation2 + $0x1c] sm:$0xf]
    %v110 = vcombine.low %v94, %v95
    %v111 = vcombine.low %v96, %v97
    %v113 = vunpack.c.l.s4 1983009808
    %v114 = vunpack.c.0.s8 %v113
    %v115 = vlaneseq
    %v116 = vshrl.u32 %v115, 7
    %v117 = vsub.s32 %v114, %v116
    %v118 = vrot.slane %v110, %v117
    %v120 = vunpack.c.l.s4 1983009808
    %v121 = vunpack.c.0.s8 %v120
    %v122 = vlaneseq
    %v123 = vshrl.u32 %v122, 7
    %v124 = vsub.s32 %v121, %v123
    %v125 = vrot.slane %v111, %v124
    %v126 = vcombine.low %v118, %v125
    %v127 = vcombine.high %v118, %v125
    %v128 = vcombine.low %v98, %v99
    %v129 = vcombine.low %v100, %v101
    %v131 = vunpack.c.l.s4 1983009808
    %v132 = vunpack.c.0.s8 %v131
    %v133 = vlaneseq
    %v134 = vshrl.u32 %v133, 7
    %v135 = vsub.s32 %v132, %v134
    %v136 = vrot.slane %v128, %v135
    %v138 = vunpack.c.l.s4 1983009808
    %v139 = vunpack.c.0.s8 %v138
    %v140 = vlaneseq
    %v141 = vshrl.u32 %v140, 7
    %v142 = vsub.s32 %v139, %v141
    %v143 = vrot.slane %v129, %v142
    %v144 = vcombine.low %v136, %v143
    %v145 = vcombine.high %v136, %v143
    %v150 = vpack.c.bf16 %v144, %v126
    %v151 = vpack.c.bf16 %v145, %v127
    %v152 = vld [vmem:[#allocation5] sm:$0xff]
    %v153 = vld [vmem:[#allocation5 + $0x8] sm:$0xff]
    %v154 = vld [vmem:[#allocation5 + $0x10] sm:$0xff]
    %v155 = vld [vmem:[#allocation5 + $0x18] sm:$0xff]
    %v156 = vld [vmem:[#allocation5 + $0x20] sm:$0xff]
    %v157 = vld [vmem:[#allocation5 + $0x28] sm:$0xff]
    %v158 = vld [vmem:[#allocation5 + $0x30] sm:$0xff]
    %v159 = vld [vmem:[#allocation5 + $0x38] sm:$0xff]
    %v160 = vld [vmem:[#allocation5 + $0x40] sm:$0xff]
    %v161 = vld [vmem:[#allocation5 + $0x48] sm:$0xff]
    %v162 = vld [vmem:[#allocation5 + $0x50] sm:$0xff]
    %v163 = vld [vmem:[#allocation5 + $0x58] sm:$0xff]
    %v164 = vld [vmem:[#allocation5 + $0x60] sm:$0xff]
    %v165 = vld [vmem:[#allocation5 + $0x68] sm:$0xff]
    %v166 = vld [vmem:[#allocation5 + $0x70] sm:$0xff]
    %v167 = vld [vmem:[#allocation5 + $0x78] sm:$0xff]
    %v168 = vld [vmem:[#allocation5 + $0x80] sm:$0xff]
    %v169 = vld [vmem:[#allocation5 + $0x88] sm:$0xff]
    %v170 = vld [vmem:[#allocation5 + $0x90] sm:$0xff]
    %v171 = vld [vmem:[#allocation5 + $0x98] sm:$0xff]
    %v172 = vld [vmem:[#allocation5 + $0xa0] sm:$0xff]
    %v173 = vld [vmem:[#allocation5 + $0xa8] sm:$0xff]
    %v174 = vld [vmem:[#allocation5 + $0xb0] sm:$0xff]
    %v175 = vld [vmem:[#allocation5 + $0xb8] sm:$0xff]
    %v176 = vld [vmem:[#allocation5 + $0xc0] sm:$0xff]
    %v177 = vld [vmem:[#allocation5 + $0xc8] sm:$0xff]
    %v178 = vld [vmem:[#allocation5 + $0xd0] sm:$0xff]
    %v179 = vld [vmem:[#allocation5 + $0xd8] sm:$0xff]
    %v180 = vld [vmem:[#allocation5 + $0xe0] sm:$0xff]
    %v181 = vld [vmem:[#allocation5 + $0xe8] sm:$0xff]
    %v182 = vld [vmem:[#allocation5 + $0xf0] sm:$0xff]
    %v183 = vld [vmem:[#allocation5 + $0xf8] sm:$0xff]
    %v184 = vld [vmem:[#allocation5 + $0x100] sm:$0xff]
    %v185 = vld [vmem:[#allocation5 + $0x108] sm:$0xff]
    %v186 = vld [vmem:[#allocation5 + $0x110] sm:$0xff]
    %v187 = vld [vmem:[#allocation5 + $0x118] sm:$0xff]
    %v188 = vld [vmem:[#allocation5 + $0x120] sm:$0xff]
    %v189 = vld [vmem:[#allocation5 + $0x128] sm:$0xff]
    %v190 = vld [vmem:[#allocation5 + $0x130] sm:$0xff]
    %v191 = vld [vmem:[#allocation5 + $0x138] sm:$0xff]
    %v192 = vld [vmem:[#allocation5 + $0x140] sm:$0xff]
    %v193 = vld [vmem:[#allocation5 + $0x148] sm:$0xff]
    %v194 = vld [vmem:[#allocation5 + $0x150] sm:$0xff]
    %v195 = vld [vmem:[#allocation5 + $0x158] sm:$0xff]
    %v196 = vld [vmem:[#allocation5 + $0x160] sm:$0xff]
    %v197 = vld [vmem:[#allocation5 + $0x168] sm:$0xff]
    %v198 = vld [vmem:[#allocation5 + $0x170] sm:$0xff]
    %v199 = vld [vmem:[#allocation5 + $0x178] sm:$0xff]
    %v200 = vld [vmem:[#allocation5 + $0x180] sm:$0xff]
    %v201 = vld [vmem:[#allocation5 + $0x188] sm:$0xff]
    %v202 = vld [vmem:[#allocation5 + $0x190] sm:$0xff]
    %v203 = vld [vmem:[#allocation5 + $0x198] sm:$0xff]
    %v204 = vld [vmem:[#allocation5 + $0x1a0] sm:$0xff]
    %v205 = vld [vmem:[#allocation5 + $0x1a8] sm:$0xff]
    %v206 = vld [vmem:[#allocation5 + $0x1b0] sm:$0xff]
    %v207 = vld [vmem:[#allocation5 + $0x1b8] sm:$0xff]
    %v208 = vld [vmem:[#allocation5 + $0x1c0] sm:$0xff]
    %v209 = vld [vmem:[#allocation5 + $0x1c8] sm:$0xff]
    %v210 = vld [vmem:[#allocation5 + $0x1d0] sm:$0xff]
    %v211 = vld [vmem:[#allocation5 + $0x1d8] sm:$0xff]
    %v212 = vld [vmem:[#allocation5 + $0x1e0] sm:$0xff]
    %v213 = vld [vmem:[#allocation5 + $0x1e8] sm:$0xff]
    %v214 = vld [vmem:[#allocation5 + $0x1f0] sm:$0xff]
    %v215 = vld [vmem:[#allocation5 + $0x1f8] sm:$0xff]
    %v216 = vld [vmem:[#allocation5 + $0x200] sm:$0xff]
    %v217 = vld [vmem:[#allocation5 + $0x208] sm:$0xff]
    %v218 = vld [vmem:[#allocation5 + $0x210] sm:$0xff]
    %v219 = vld [vmem:[#allocation5 + $0x218] sm:$0xff]
    %v220 = vld [vmem:[#allocation5 + $0x220] sm:$0xff]
    %v221 = vld [vmem:[#allocation5 + $0x228] sm:$0xff]
    %v222 = vld [vmem:[#allocation5 + $0x230] sm:$0xff]
    %v223 = vld [vmem:[#allocation5 + $0x238] sm:$0xff]
    %v224 = vld [vmem:[#allocation5 + $0x240] sm:$0xff]
    %v225 = vld [vmem:[#allocation5 + $0x248] sm:$0xff]
    %v226 = vld [vmem:[#allocation5 + $0x250] sm:$0xff]
    %v227 = vld [vmem:[#allocation5 + $0x258] sm:$0xff]
    %v228 = vld [vmem:[#allocation5 + $0x260] sm:$0xff]
    %v229 = vld [vmem:[#allocation5 + $0x268] sm:$0xff]
    %v230 = vld [vmem:[#allocation5 + $0x270] sm:$0xff]
    %v231 = vld [vmem:[#allocation5 + $0x278] sm:$0xff]
    %v232 = vld [vmem:[#allocation5 + $0x280] sm:$0xff]
    %v233 = vld [vmem:[#allocation5 + $0x288] sm:$0xff]
    %v234 = vld [vmem:[#allocation5 + $0x290] sm:$0xff]
    %v235 = vld [vmem:[#allocation5 + $0x298] sm:$0xff]
    %v236 = vld [vmem:[#allocation5 + $0x2a0] sm:$0xff]
    %v237 = vld [vmem:[#allocation5 + $0x2a8] sm:$0xff]
    %v238 = vld [vmem:[#allocation5 + $0x2b0] sm:$0xff]
    %v239 = vld [vmem:[#allocation5 + $0x2b8] sm:$0xff]
    %v240 = vld [vmem:[#allocation5 + $0x2c0] sm:$0xff]
    %v241 = vld [vmem:[#allocation5 + $0x2c8] sm:$0xff]
    %v242 = vld [vmem:[#allocation5 + $0x2d0] sm:$0xff]
    %v243 = vld [vmem:[#allocation5 + $0x2d8] sm:$0xff]
    %v244 = vld [vmem:[#allocation5 + $0x2e0] sm:$0xff]
    %v245 = vld [vmem:[#allocation5 + $0x2e8] sm:$0xff]
    %v246 = vld [vmem:[#allocation5 + $0x2f0] sm:$0xff]
    %v247 = vld [vmem:[#allocation5 + $0x2f8] sm:$0xff]
    %v248 = vld [vmem:[#allocation5 + $0x300] sm:$0xff]
    %v249 = vld [vmem:[#allocation5 + $0x308] sm:$0xff]
    %v250 = vld [vmem:[#allocation5 + $0x310] sm:$0xff]
    %v251 = vld [vmem:[#allocation5 + $0x318] sm:$0xff]
    %v252 = vld [vmem:[#allocation5 + $0x320] sm:$0xff]
    %v253 = vld [vmem:[#allocation5 + $0x328] sm:$0xff]
    %v254 = vld [vmem:[#allocation5 + $0x330] sm:$0xff]
    %v255 = vld [vmem:[#allocation5 + $0x338] sm:$0xff]
    %v256 = vld [vmem:[#allocation5 + $0x340] sm:$0xff]
    %v257 = vld [vmem:[#allocation5 + $0x348] sm:$0xff]
    %v258 = vld [vmem:[#allocation5 + $0x350] sm:$0xff]
    %v259 = vld [vmem:[#allocation5 + $0x358] sm:$0xff]
    %v260 = vld [vmem:[#allocation5 + $0x360] sm:$0xff]
    %v261 = vld [vmem:[#allocation5 + $0x368] sm:$0xff]
    %v262 = vld [vmem:[#allocation5 + $0x370] sm:$0xff]
    %v263 = vld [vmem:[#allocation5 + $0x378] sm:$0xff]
    %v264 = vld [vmem:[#allocation5 + $0x380] sm:$0xff]
    %v265 = vld [vmem:[#allocation5 + $0x388] sm:$0xff]
    %v266 = vld [vmem:[#allocation5 + $0x390] sm:$0xff]
    %v267 = vld [vmem:[#allocation5 + $0x398] sm:$0xff]
    %v268 = vld [vmem:[#allocation5 + $0x3a0] sm:$0xff]
    %v269 = vld [vmem:[#allocation5 + $0x3a8] sm:$0xff]
    %v270 = vld [vmem:[#allocation5 + $0x3b0] sm:$0xff]
    %v271 = vld [vmem:[#allocation5 + $0x3b8] sm:$0xff]
    %v272 = vld [vmem:[#allocation5 + $0x3c0] sm:$0xff]
    %v273 = vld [vmem:[#allocation5 + $0x3c8] sm:$0xff]
    %v274 = vld [vmem:[#allocation5 + $0x3d0] sm:$0xff]
    %v275 = vld [vmem:[#allocation5 + $0x3d8] sm:$0xff]
    %v276 = vld [vmem:[#allocation5 + $0x3e0] sm:$0xff]
    %v277 = vld [vmem:[#allocation5 + $0x3e8] sm:$0xff]
    %v278 = vld [vmem:[#allocation5 + $0x3f0] sm:$0xff]
    %v279 = vld [vmem:[#allocation5 + $0x3f8] sm:$0xff]
    %v280 = vld [vmem:[#allocation5 + $0x400] sm:$0xff]
    %v281 = vld [vmem:[#allocation5 + $0x408] sm:$0xff]
    %v282 = vld [vmem:[#allocation5 + $0x410] sm:$0xff]
    %v283 = vld [vmem:[#allocation5 + $0x418] sm:$0xff]
    %v284 = vld [vmem:[#allocation5 + $0x420] sm:$0xff]
    %v285 = vld [vmem:[#allocation5 + $0x428] sm:$0xff]
    %v286 = vld [vmem:[#allocation5 + $0x430] sm:$0xff]
    %v287 = vld [vmem:[#allocation5 + $0x438] sm:$0xff]
    %v288 = vld [vmem:[#allocation5 + $0x440] sm:$0xff]
    %v289 = vld [vmem:[#allocation5 + $0x448] sm:$0xff]
    %v290 = vld [vmem:[#allocation5 + $0x450] sm:$0xff]
    %v291 = vld [vmem:[#allocation5 + $0x458] sm:$0xff]
    %v292 = vld [vmem:[#allocation5 + $0x460] sm:$0xff]
    %v293 = vld [vmem:[#allocation5 + $0x468] sm:$0xff]
    %v294 = vld [vmem:[#allocation5 + $0x470] sm:$0xff]
    %v295 = vld [vmem:[#allocation5 + $0x478] sm:$0xff]
    %v296 = vld [vmem:[#allocation5 + $0x480] sm:$0xff]
    %v297 = vld [vmem:[#allocation5 + $0x488] sm:$0xff]
    %v298 = vld [vmem:[#allocation5 + $0x490] sm:$0xff]
    %v299 = vld [vmem:[#allocation5 + $0x498] sm:$0xff]
    %v300 = vld [vmem:[#allocation5 + $0x4a0] sm:$0xff]
    %v301 = vld [vmem:[#allocation5 + $0x4a8] sm:$0xff]
    %v302 = vld [vmem:[#allocation5 + $0x4b0] sm:$0xff]
    %v303 = vld [vmem:[#allocation5 + $0x4b8] sm:$0xff]
    %v304 = vld [vmem:[#allocation5 + $0x4c0] sm:$0xff]
    %v305 = vld [vmem:[#allocation5 + $0x4c8] sm:$0xff]
    %v306 = vld [vmem:[#allocation5 + $0x4d0] sm:$0xff]
    %v307 = vld [vmem:[#allocation5 + $0x4d8] sm:$0xff]
    %v308 = vld [vmem:[#allocation5 + $0x4e0] sm:$0xff]
    %v309 = vld [vmem:[#allocation5 + $0x4e8] sm:$0xff]
    %v310 = vld [vmem:[#allocation5 + $0x4f0] sm:$0xff]
    %v311 = vld [vmem:[#allocation5 + $0x4f8] sm:$0xff]
    %v312 = vld [vmem:[#allocation5 + $0x500] sm:$0xff]
    %v313 = vld [vmem:[#allocation5 + $0x508] sm:$0xff]
    %v314 = vld [vmem:[#allocation5 + $0x510] sm:$0xff]
    %v315 = vld [vmem:[#allocation5 + $0x518] sm:$0xff]
    %v316 = vld [vmem:[#allocation5 + $0x520] sm:$0xff]
    %v317 = vld [vmem:[#allocation5 + $0x528] sm:$0xff]
    %v318 = vld [vmem:[#allocation5 + $0x530] sm:$0xff]
    %v319 = vld [vmem:[#allocation5 + $0x538] sm:$0xff]
    %v320 = vld [vmem:[#allocation5 + $0x540] sm:$0xff]
    %v321 = vld [vmem:[#allocation5 + $0x548] sm:$0xff]
    %v322 = vld [vmem:[#allocation5 + $0x550] sm:$0xff]
    %v323 = vld [vmem:[#allocation5 + $0x558] sm:$0xff]
    %v324 = vld [vmem:[#allocation5 + $0x560] sm:$0xff]
    %v325 = vld [vmem:[#allocation5 + $0x568] sm:$0xff]
    %v326 = vld [vmem:[#allocation5 + $0x570] sm:$0xff]
    %v327 = vld [vmem:[#allocation5 + $0x578] sm:$0xff]
    %v328 = vld [vmem:[#allocation5 + $0x580] sm:$0xff]
    %v329 = vld [vmem:[#allocation5 + $0x588] sm:$0xff]
    %v330 = vld [vmem:[#allocation5 + $0x590] sm:$0xff]
    %v331 = vld [vmem:[#allocation5 + $0x598] sm:$0xff]
    %v332 = vld [vmem:[#allocation5 + $0x5a0] sm:$0xff]
    %v333 = vld [vmem:[#allocation5 + $0x5a8] sm:$0xff]
    %v334 = vld [vmem:[#allocation5 + $0x5b0] sm:$0xff]
    %v335 = vld [vmem:[#allocation5 + $0x5b8] sm:$0xff]
    %v336 = vld [vmem:[#allocation5 + $0x5c0] sm:$0xff]
    %v337 = vld [vmem:[#allocation5 + $0x5c8] sm:$0xff]
    %v338 = vld [vmem:[#allocation5 + $0x5d0] sm:$0xff]
    %v339 = vld [vmem:[#allocation5 + $0x5d8] sm:$0xff]
    %v340 = vld [vmem:[#allocation5 + $0x5e0] sm:$0xff]
    %v341 = vld [vmem:[#allocation5 + $0x5e8] sm:$0xff]
    %v342 = vld [vmem:[#allocation5 + $0x5f0] sm:$0xff]
    %v343 = vld [vmem:[#allocation5 + $0x5f8] sm:$0xff]
    %v344 = vld [vmem:[#allocation7] sm:$0xff]
    %v345 = vld [vmem:[#allocation7 + $0x8] sm:$0xf]
    %v348 = vlaneseq
    %v349 = vshrl.u32 %v348, 7
    %v350 = vsub.s32 0, %v349
    %v351 = vrot.slane %v344, %v350
    %v352 = vlaneseq
    %v353 = vshrl.u32 %v352, 7
    %v354 = vsub.s32 1, %v353
    %v355 = vrot.slane %v344, %v354
    %v356 = vlaneseq
    %v357 = vshrl.u32 %v356, 7
    %v358 = vsub.s32 2, %v357
    %v359 = vrot.slane %v344, %v358
    %v360 = vlaneseq
    %v361 = vshrl.u32 %v360, 7
    %v362 = vsub.s32 3, %v361
    %v363 = vrot.slane %v344, %v362
    %v364 = vlaneseq
    %v365 = vshrl.u32 %v364, 7
    %v366 = vsub.s32 4, %v365
    %v367 = vrot.slane %v344, %v366
    %v368 = vlaneseq
    %v369 = vshrl.u32 %v368, 7
    %v370 = vsub.s32 5, %v369
    %v371 = vrot.slane %v344, %v370
    %v372 = vlaneseq
    %v373 = vshrl.u32 %v372, 7
    %v374 = vsub.s32 6, %v373
    %v375 = vrot.slane %v344, %v374
    %v376 = vlaneseq
    %v377 = vshrl.u32 %v376, 7
    %v378 = vsub.s32 7, %v377
    %v379 = vrot.slane %v344, %v378
    %v380 = vlaneseq
    %v381 = vshrl.u32 %v380, 7
    %v382 = vsub.s32 0, %v381
    %v383 = vrot.slane %v345, %v382
    %v384 = vlaneseq
    %v385 = vshrl.u32 %v384, 7
    %v386 = vsub.s32 1, %v385
    %v387 = vrot.slane %v345, %v386
    %v388 = vlaneseq
    %v389 = vshrl.u32 %v388, 7
    %v390 = vsub.s32 2, %v389
    %v391 = vrot.slane %v345, %v390
    %v392 = vlaneseq
    %v393 = vshrl.u32 %v392, 7
    %v394 = vsub.s32 3, %v393
    %v395 = vrot.slane %v345, %v394
    %v600 = vunpack.c.l.b16 %v152
    %v601 = vunpack.c.h.b16 %v152
    %v602 = vunpack.c.l.b16 %v153
    %v603 = vunpack.c.h.b16 %v153
    %v604 = vunpack.c.l.b16 %v154
    %v605 = vunpack.c.h.b16 %v154
    %v606 = vunpack.c.l.b16 %v155
    %v607 = vunpack.c.h.b16 %v155
    %v608 = vunpack.c.l.b16 %v156
    %v609 = vunpack.c.h.b16 %v156
    %v610 = vunpack.c.l.b16 %v157
    %v611 = vunpack.c.h.b16 %v157
    %v612 = vunpack.c.l.b16 %v158
    %v613 = vunpack.c.h.b16 %v158
    %v614 = vunpack.c.l.b16 %v159
    %v615 = vunpack.c.h.b16 %v159
    %v616 = vunpack.c.l.b16 %v160
    %v617 = vunpack.c.h.b16 %v160
    %v618 = vunpack.c.l.b16 %v161
    %v619 = vunpack.c.h.b16 %v161
    %v620 = vunpack.c.l.b16 %v162
    %v621 = vunpack.c.h.b16 %v162
    %v622 = vunpack.c.l.b16 %v163
    %v623 = vunpack.c.h.b16 %v163
    %v624 = vunpack.c.l.b16 %v164
    %v625 = vunpack.c.h.b16 %v164
    %v626 = vunpack.c.l.b16 %v165
    %v627 = vunpack.c.h.b16 %v165
    %v628 = vunpack.c.l.b16 %v166
    %v629 = vunpack.c.h.b16 %v166
    %v630 = vunpack.c.l.b16 %v167
    %v631 = vunpack.c.h.b16 %v167
    %v632 = vunpack.c.l.b16 %v168
    %v633 = vunpack.c.h.b16 %v168
    %v634 = vunpack.c.l.b16 %v169
    %v635 = vunpack.c.h.b16 %v169
    %v636 = vunpack.c.l.b16 %v170
    %v637 = vunpack.c.h.b16 %v170
    %v638 = vunpack.c.l.b16 %v171
    %v639 = vunpack.c.h.b16 %v171
    %v640 = vunpack.c.l.b16 %v172
    %v641 = vunpack.c.h.b16 %v172
    %v642 = vunpack.c.l.b16 %v173
    %v643 = vunpack.c.h.b16 %v173
    %v644 = vunpack.c.l.b16 %v174
    %v645 = vunpack.c.h.b16 %v174
    %v646 = vunpack.c.l.b16 %v175
    %v647 = vunpack.c.h.b16 %v175
    %v648 = vunpack.c.l.b16 %v176
    %v649 = vunpack.c.h.b16 %v176
    %v650 = vunpack.c.l.b16 %v177
    %v651 = vunpack.c.h.b16 %v177
    %v652 = vunpack.c.l.b16 %v178
    %v653 = vunpack.c.h.b16 %v178
    %v654 = vunpack.c.l.b16 %v179
    %v655 = vunpack.c.h.b16 %v179
    %v656 = vunpack.c.l.b16 %v180
    %v657 = vunpack.c.h.b16 %v180
    %v658 = vunpack.c.l.b16 %v181
    %v659 = vunpack.c.h.b16 %v181
    %v660 = vunpack.c.l.b16 %v182
    %v661 = vunpack.c.h.b16 %v182
    %v662 = vunpack.c.l.b16 %v183
    %v663 = vunpack.c.h.b16 %v183
    %v664 = vunpack.c.l.b16 %v184
    %v665 = vunpack.c.h.b16 %v184
    %v666 = vunpack.c.l.b16 %v185
    %v667 = vunpack.c.h.b16 %v185
    %v668 = vunpack.c.l.b16 %v186
    %v669 = vunpack.c.h.b16 %v186
    %v670 = vunpack.c.l.b16 %v187
    %v671 = vunpack.c.h.b16 %v187
    %v672 = vunpack.c.l.b16 %v188
    %v673 = vunpack.c.h.b16 %v188
    %v674 = vunpack.c.l.b16 %v189
    %v675 = vunpack.c.h.b16 %v189
    %v676 = vunpack.c.l.b16 %v190
    %v677 = vunpack.c.h.b16 %v190
    %v678 = vunpack.c.l.b16 %v191
    %v679 = vunpack.c.h.b16 %v191
    %v680 = vunpack.c.l.b16 %v192
    %v681 = vunpack.c.h.b16 %v192
    %v682 = vunpack.c.l.b16 %v193
    %v683 = vunpack.c.h.b16 %v193
    %v684 = vunpack.c.l.b16 %v194
    %v685 = vunpack.c.h.b16 %v194
    %v686 = vunpack.c.l.b16 %v195
    %v687 = vunpack.c.h.b16 %v195
    %v688 = vunpack.c.l.b16 %v196
    %v689 = vunpack.c.h.b16 %v196
    %v690 = vunpack.c.l.b16 %v197
    %v691 = vunpack.c.h.b16 %v197
    %v692 = vunpack.c.l.b16 %v198
    %v693 = vunpack.c.h.b16 %v198
    %v694 = vunpack.c.l.b16 %v199
    %v695 = vunpack.c.h.b16 %v199
    %v696 = vunpack.c.l.b16 %v200
    %v697 = vunpack.c.h.b16 %v200
    %v698 = vunpack.c.l.b16 %v201
    %v699 = vunpack.c.h.b16 %v201
    %v700 = vunpack.c.l.b16 %v202
    %v701 = vunpack.c.h.b16 %v202
    %v702 = vunpack.c.l.b16 %v203
    %v703 = vunpack.c.h.b16 %v203
    %v704 = vunpack.c.l.b16 %v204
    %v705 = vunpack.c.h.b16 %v204
    %v706 = vunpack.c.l.b16 %v205
    %v707 = vunpack.c.h.b16 %v205
    %v708 = vunpack.c.l.b16 %v206
    %v709 = vunpack.c.h.b16 %v206
    %v710 = vunpack.c.l.b16 %v207
    %v711 = vunpack.c.h.b16 %v207
    %v712 = vunpack.c.l.b16 %v208
    %v713 = vunpack.c.h.b16 %v208
    %v714 = vunpack.c.l.b16 %v209
    %v715 = vunpack.c.h.b16 %v209
    %v716 = vunpack.c.l.b16 %v210
    %v717 = vunpack.c.h.b16 %v210
    %v718 = vunpack.c.l.b16 %v211
    %v719 = vunpack.c.h.b16 %v211
    %v720 = vunpack.c.l.b16 %v212
    %v721 = vunpack.c.h.b16 %v212
    %v722 = vunpack.c.l.b16 %v213
    %v723 = vunpack.c.h.b16 %v213
    %v724 = vunpack.c.l.b16 %v214
    %v725 = vunpack.c.h.b16 %v214
    %v726 = vunpack.c.l.b16 %v215
    %v727 = vunpack.c.h.b16 %v215
    %v728 = vunpack.c.l.b16 %v216
    %v729 = vunpack.c.h.b16 %v216
    %v730 = vunpack.c.l.b16 %v217
    %v731 = vunpack.c.h.b16 %v217
    %v732 = vunpack.c.l.b16 %v218
    %v733 = vunpack.c.h.b16 %v218
    %v734 = vunpack.c.l.b16 %v219
    %v735 = vunpack.c.h.b16 %v219
    %v736 = vunpack.c.l.b16 %v220
    %v737 = vunpack.c.h.b16 %v220
    %v738 = vunpack.c.l.b16 %v221
    %v739 = vunpack.c.h.b16 %v221
    %v740 = vunpack.c.l.b16 %v222
    %v741 = vunpack.c.h.b16 %v222
    %v742 = vunpack.c.l.b16 %v223
    %v743 = vunpack.c.h.b16 %v223
    %v744 = vunpack.c.l.b16 %v224
    %v745 = vunpack.c.h.b16 %v224
    %v746 = vunpack.c.l.b16 %v225
    %v747 = vunpack.c.h.b16 %v225
    %v748 = vunpack.c.l.b16 %v226
    %v749 = vunpack.c.h.b16 %v226
    %v750 = vunpack.c.l.b16 %v227
    %v751 = vunpack.c.h.b16 %v227
    %v752 = vunpack.c.l.b16 %v228
    %v753 = vunpack.c.h.b16 %v228
    %v754 = vunpack.c.l.b16 %v229
    %v755 = vunpack.c.h.b16 %v229
    %v756 = vunpack.c.l.b16 %v230
    %v757 = vunpack.c.h.b16 %v230
    %v758 = vunpack.c.l.b16 %v231
    %v759 = vunpack.c.h.b16 %v231
    %v760 = vunpack.c.l.b16 %v232
    %v761 = vunpack.c.h.b16 %v232
    %v762 = vunpack.c.l.b16 %v233
    %v763 = vunpack.c.h.b16 %v233
    %v764 = vunpack.c.l.b16 %v234
    %v765 = vunpack.c.h.b16 %v234
    %v766 = vunpack.c.l.b16 %v235
    %v767 = vunpack.c.h.b16 %v235
    %v768 = vunpack.c.l.b16 %v236
    %v769 = vunpack.c.h.b16 %v236
    %v770 = vunpack.c.l.b16 %v237
    %v771 = vunpack.c.h.b16 %v237
    %v772 = vunpack.c.l.b16 %v238
    %v773 = vunpack.c.h.b16 %v238
    %v774 = vunpack.c.l.b16 %v239
    %v775 = vunpack.c.h.b16 %v239
    %v776 = vunpack.c.l.b16 %v240
    %v777 = vunpack.c.h.b16 %v240
    %v778 = vunpack.c.l.b16 %v241
    %v779 = vunpack.c.h.b16 %v241
    %v780 = vunpack.c.l.b16 %v242
    %v781 = vunpack.c.h.b16 %v242
    %v782 = vunpack.c.l.b16 %v243
    %v783 = vunpack.c.h.b16 %v243
    %v784 = vunpack.c.l.b16 %v244
    %v785 = vunpack.c.h.b16 %v244
    %v786 = vunpack.c.l.b16 %v245
    %v787 = vunpack.c.h.b16 %v245
    %v788 = vunpack.c.l.b16 %v246
    %v789 = vunpack.c.h.b16 %v246
    %v790 = vunpack.c.l.b16 %v247
    %v791 = vunpack.c.h.b16 %v247
    %v792 = vunpack.c.l.b16 %v248
    %v793 = vunpack.c.h.b16 %v248
    %v794 = vunpack.c.l.b16 %v249
    %v795 = vunpack.c.h.b16 %v249
    %v796 = vunpack.c.l.b16 %v250
    %v797 = vunpack.c.h.b16 %v250
    %v798 = vunpack.c.l.b16 %v251
    %v799 = vunpack.c.h.b16 %v251
    %v800 = vunpack.c.l.b16 %v252
    %v801 = vunpack.c.h.b16 %v252
    %v802 = vunpack.c.l.b16 %v253
    %v803 = vunpack.c.h.b16 %v253
    %v804 = vunpack.c.l.b16 %v254
    %v805 = vunpack.c.h.b16 %v254
    %v806 = vunpack.c.l.b16 %v255
    %v807 = vunpack.c.h.b16 %v255
    %v808 = vunpack.c.l.b16 %v256
    %v809 = vunpack.c.h.b16 %v256
    %v810 = vunpack.c.l.b16 %v257
    %v811 = vunpack.c.h.b16 %v257
    %v812 = vunpack.c.l.b16 %v258
    %v813 = vunpack.c.h.b16 %v258
    %v814 = vunpack.c.l.b16 %v259
    %v815 = vunpack.c.h.b16 %v259
    %v816 = vunpack.c.l.b16 %v260
    %v817 = vunpack.c.h.b16 %v260
    %v818 = vunpack.c.l.b16 %v261
    %v819 = vunpack.c.h.b16 %v261
    %v820 = vunpack.c.l.b16 %v262
    %v821 = vunpack.c.h.b16 %v262
    %v822 = vunpack.c.l.b16 %v263
    %v823 = vunpack.c.h.b16 %v263
    %v824 = vunpack.c.l.b16 %v264
    %v825 = vunpack.c.h.b16 %v264
    %v826 = vunpack.c.l.b16 %v265
    %v827 = vunpack.c.h.b16 %v265
    %v828 = vunpack.c.l.b16 %v266
    %v829 = vunpack.c.h.b16 %v266
    %v830 = vunpack.c.l.b16 %v267
    %v831 = vunpack.c.h.b16 %v267
    %v832 = vunpack.c.l.b16 %v268
    %v833 = vunpack.c.h.b16 %v268
    %v834 = vunpack.c.l.b16 %v269
    %v835 = vunpack.c.h.b16 %v269
    %v836 = vunpack.c.l.b16 %v270
    %v837 = vunpack.c.h.b16 %v270
    %v838 = vunpack.c.l.b16 %v271
    %v839 = vunpack.c.h.b16 %v271
    %v840 = vunpack.c.l.b16 %v272
    %v841 = vunpack.c.h.b16 %v272
    %v842 = vunpack.c.l.b16 %v273
    %v843 = vunpack.c.h.b16 %v273
    %v844 = vunpack.c.l.b16 %v274
    %v845 = vunpack.c.h.b16 %v274
    %v846 = vunpack.c.l.b16 %v275
    %v847 = vunpack.c.h.b16 %v275
    %v848 = vunpack.c.l.b16 %v276
    %v849 = vunpack.c.h.b16 %v276
    %v850 = vunpack.c.l.b16 %v277
    %v851 = vunpack.c.h.b16 %v277
    %v852 = vunpack.c.l.b16 %v278
    %v853 = vunpack.c.h.b16 %v278
    %v854 = vunpack.c.l.b16 %v279
    %v855 = vunpack.c.h.b16 %v279
    %v856 = vunpack.c.l.b16 %v280
    %v857 = vunpack.c.h.b16 %v280
    %v858 = vunpack.c.l.b16 %v281
    %v859 = vunpack.c.h.b16 %v281
    %v860 = vunpack.c.l.b16 %v282
    %v861 = vunpack.c.h.b16 %v282
    %v862 = vunpack.c.l.b16 %v283
    %v863 = vunpack.c.h.b16 %v283
    %v864 = vunpack.c.l.b16 %v284
    %v865 = vunpack.c.h.b16 %v284
    %v866 = vunpack.c.l.b16 %v285
    %v867 = vunpack.c.h.b16 %v285
    %v868 = vunpack.c.l.b16 %v286
    %v869 = vunpack.c.h.b16 %v286
    %v870 = vunpack.c.l.b16 %v287
    %v871 = vunpack.c.h.b16 %v287
    %v872 = vunpack.c.l.b16 %v288
    %v873 = vunpack.c.h.b16 %v288
    %v874 = vunpack.c.l.b16 %v289
    %v875 = vunpack.c.h.b16 %v289
    %v876 = vunpack.c.l.b16 %v290
    %v877 = vunpack.c.h.b16 %v290
    %v878 = vunpack.c.l.b16 %v291
    %v879 = vunpack.c.h.b16 %v291
    %v880 = vunpack.c.l.b16 %v292
    %v881 = vunpack.c.h.b16 %v292
    %v882 = vunpack.c.l.b16 %v293
    %v883 = vunpack.c.h.b16 %v293
    %v884 = vunpack.c.l.b16 %v294
    %v885 = vunpack.c.h.b16 %v294
    %v886 = vunpack.c.l.b16 %v295
    %v887 = vunpack.c.h.b16 %v295
    %v888 = vunpack.c.l.b16 %v296
    %v889 = vunpack.c.h.b16 %v296
    %v890 = vunpack.c.l.b16 %v297
    %v891 = vunpack.c.h.b16 %v297
    %v892 = vunpack.c.l.b16 %v298
    %v893 = vunpack.c.h.b16 %v298
    %v894 = vunpack.c.l.b16 %v299
    %v895 = vunpack.c.h.b16 %v299
    %v896 = vunpack.c.l.b16 %v300
    %v897 = vunpack.c.h.b16 %v300
    %v898 = vunpack.c.l.b16 %v301
    %v899 = vunpack.c.h.b16 %v301
    %v900 = vunpack.c.l.b16 %v302
    %v901 = vunpack.c.h.b16 %v302
    %v902 = vunpack.c.l.b16 %v303
    %v903 = vunpack.c.h.b16 %v303
    %v904 = vunpack.c.l.b16 %v304
    %v905 = vunpack.c.h.b16 %v304
    %v906 = vunpack.c.l.b16 %v305
    %v907 = vunpack.c.h.b16 %v305
    %v908 = vunpack.c.l.b16 %v306
    %v909 = vunpack.c.h.b16 %v306
    %v910 = vunpack.c.l.b16 %v307
    %v911 = vunpack.c.h.b16 %v307
    %v912 = vunpack.c.l.b16 %v308
    %v913 = vunpack.c.h.b16 %v308
    %v914 = vunpack.c.l.b16 %v309
    %v915 = vunpack.c.h.b16 %v309
    %v916 = vunpack.c.l.b16 %v310
    %v917 = vunpack.c.h.b16 %v310
    %v918 = vunpack.c.l.b16 %v311
    %v919 = vunpack.c.h.b16 %v311
    %v920 = vunpack.c.l.b16 %v312
    %v921 = vunpack.c.h.b16 %v312
    %v922 = vunpack.c.l.b16 %v313
    %v923 = vunpack.c.h.b16 %v313
    %v924 = vunpack.c.l.b16 %v314
    %v925 = vunpack.c.h.b16 %v314
    %v926 = vunpack.c.l.b16 %v315
    %v927 = vunpack.c.h.b16 %v315
    %v928 = vunpack.c.l.b16 %v316
    %v929 = vunpack.c.h.b16 %v316
    %v930 = vunpack.c.l.b16 %v317
    %v931 = vunpack.c.h.b16 %v317
    %v932 = vunpack.c.l.b16 %v318
    %v933 = vunpack.c.h.b16 %v318
    %v934 = vunpack.c.l.b16 %v319
    %v935 = vunpack.c.h.b16 %v319
    %v936 = vunpack.c.l.b16 %v320
    %v937 = vunpack.c.h.b16 %v320
    %v938 = vunpack.c.l.b16 %v321
    %v939 = vunpack.c.h.b16 %v321
    %v940 = vunpack.c.l.b16 %v322
    %v941 = vunpack.c.h.b16 %v322
    %v942 = vunpack.c.l.b16 %v323
    %v943 = vunpack.c.h.b16 %v323
    %v944 = vunpack.c.l.b16 %v324
    %v945 = vunpack.c.h.b16 %v324
    %v946 = vunpack.c.l.b16 %v325
    %v947 = vunpack.c.h.b16 %v325
    %v948 = vunpack.c.l.b16 %v326
    %v949 = vunpack.c.h.b16 %v326
    %v950 = vunpack.c.l.b16 %v327
    %v951 = vunpack.c.h.b16 %v327
    %v952 = vunpack.c.l.b16 %v328
    %v953 = vunpack.c.h.b16 %v328
    %v954 = vunpack.c.l.b16 %v329
    %v955 = vunpack.c.h.b16 %v329
    %v956 = vunpack.c.l.b16 %v330
    %v957 = vunpack.c.h.b16 %v330
    %v958 = vunpack.c.l.b16 %v331
    %v959 = vunpack.c.h.b16 %v331
    %v960 = vunpack.c.l.b16 %v332
    %v961 = vunpack.c.h.b16 %v332
    %v962 = vunpack.c.l.b16 %v333
    %v963 = vunpack.c.h.b16 %v333
    %v964 = vunpack.c.l.b16 %v334
    %v965 = vunpack.c.h.b16 %v334
    %v966 = vunpack.c.l.b16 %v335
    %v967 = vunpack.c.h.b16 %v335
    %v968 = vunpack.c.l.b16 %v336
    %v969 = vunpack.c.h.b16 %v336
    %v970 = vunpack.c.l.b16 %v337
    %v971 = vunpack.c.h.b16 %v337
    %v972 = vunpack.c.l.b16 %v338
    %v973 = vunpack.c.h.b16 %v338
    %v974 = vunpack.c.l.b16 %v339
    %v975 = vunpack.c.h.b16 %v339
    %v976 = vunpack.c.l.b16 %v340
    %v977 = vunpack.c.h.b16 %v340
    %v978 = vunpack.c.l.b16 %v341
    %v979 = vunpack.c.h.b16 %v341
    %v980 = vunpack.c.l.b16 %v342
    %v981 = vunpack.c.h.b16 %v342
    %v982 = vunpack.c.l.b16 %v343
    %v983 = vunpack.c.h.b16 %v343
    %v984 = vpack.c.b16 %v612, %v600
    %v985 = vpack.c.b16 %v613, %v601
    %v986 = vpack.c.b16 %v614, %v602
    %v987 = vpack.c.b16 %v615, %v603
    %v988 = vpack.c.b16 %v616, %v604
    %v989 = vpack.c.b16 %v617, %v605
    %v990 = vpack.c.b16 %v618, %v606
    %v991 = vpack.c.b16 %v619, %v607
    %v992 = vpack.c.b16 %v620, %v608
    %v993 = vpack.c.b16 %v621, %v609
    %v994 = vpack.c.b16 %v622, %v610
    %v995 = vpack.c.b16 %v623, %v611
    %v996 = vpack.c.b16 %v636, %v624
    %v997 = vpack.c.b16 %v637, %v625
    %v998 = vpack.c.b16 %v638, %v626
    %v999 = vpack.c.b16 %v639, %v627
    %v1000 = vpack.c.b16 %v640, %v628
    %v1001 = vpack.c.b16 %v641, %v629
    %v1002 = vpack.c.b16 %v642, %v630
    %v1003 = vpack.c.b16 %v643, %v631
    %v1004 = vpack.c.b16 %v644, %v632
    %v1005 = vpack.c.b16 %v645, %v633
    %v1006 = vpack.c.b16 %v646, %v634
    %v1007 = vpack.c.b16 %v647, %v635
    %v1008 = vpack.c.b16 %v660, %v648
    %v1009 = vpack.c.b16 %v661, %v649
    %v1010 = vpack.c.b16 %v662, %v650
    %v1011 = vpack.c.b16 %v663, %v651
    %v1012 = vpack.c.b16 %v664, %v652
    %v1013 = vpack.c.b16 %v665, %v653
    %v1014 = vpack.c.b16 %v666, %v654
    %v1015 = vpack.c.b16 %v667, %v655
    %v1016 = vpack.c.b16 %v668, %v656
    %v1017 = vpack.c.b16 %v669, %v657
    %v1018 = vpack.c.b16 %v670, %v658
    %v1019 = vpack.c.b16 %v671, %v659
    %v1020 = vpack.c.b16 %v684, %v672
    %v1021 = vpack.c.b16 %v685, %v673
    %v1022 = vpack.c.b16 %v686, %v674
    %v1023 = vpack.c.b16 %v687, %v675
    %v1024 = vpack.c.b16 %v688, %v676
    %v1025 = vpack.c.b16 %v689, %v677
    %v1026 = vpack.c.b16 %v690, %v678
    %v1027 = vpack.c.b16 %v691, %v679
    %v1028 = vpack.c.b16 %v692, %v680
    %v1029 = vpack.c.b16 %v693, %v681
    %v1030 = vpack.c.b16 %v694, %v682
    %v1031 = vpack.c.b16 %v695, %v683
    %v1032 = vpack.c.b16 %v708, %v696
    %v1033 = vpack.c.b16 %v709, %v697
    %v1034 = vpack.c.b16 %v710, %v698
    %v1035 = vpack.c.b16 %v711, %v699
    %v1036 = vpack.c.b16 %v712, %v700
    %v1037 = vpack.c.b16 %v713, %v701
    %v1038 = vpack.c.b16 %v714, %v702
    %v1039 = vpack.c.b16 %v715, %v703
    %v1040 = vpack.c.b16 %v716, %v704
    %v1041 = vpack.c.b16 %v717, %v705
    %v1042 = vpack.c.b16 %v718, %v706
    %v1043 = vpack.c.b16 %v719, %v707
    %v1044 = vpack.c.b16 %v732, %v720
    %v1045 = vpack.c.b16 %v733, %v721
    %v1046 = vpack.c.b16 %v734, %v722
    %v1047 = vpack.c.b16 %v735, %v723
    %v1048 = vpack.c.b16 %v736, %v724
    %v1049 = vpack.c.b16 %v737, %v725
    %v1050 = vpack.c.b16 %v738, %v726
    %v1051 = vpack.c.b16 %v739, %v727
    %v1052 = vpack.c.b16 %v740, %v728
    %v1053 = vpack.c.b16 %v741, %v729
    %v1054 = vpack.c.b16 %v742, %v730
    %v1055 = vpack.c.b16 %v743, %v731
    %v1056 = vpack.c.b16 %v756, %v744
    %v1057 = vpack.c.b16 %v757, %v745
    %v1058 = vpack.c.b16 %v758, %v746
    %v1059 = vpack.c.b16 %v759, %v747
    %v1060 = vpack.c.b16 %v760, %v748
    %v1061 = vpack.c.b16 %v761, %v749
    %v1062 = vpack.c.b16 %v762, %v750
    %v1063 = vpack.c.b16 %v763, %v751
    %v1064 = vpack.c.b16 %v764, %v752
    %v1065 = vpack.c.b16 %v765, %v753
    %v1066 = vpack.c.b16 %v766, %v754
    %v1067 = vpack.c.b16 %v767, %v755
    %v1068 = vpack.c.b16 %v780, %v768
    %v1069 = vpack.c.b16 %v781, %v769
    %v1070 = vpack.c.b16 %v782, %v770
    %v1071 = vpack.c.b16 %v783, %v771
    %v1072 = vpack.c.b16 %v784, %v772
    %v1073 = vpack.c.b16 %v785, %v773
    %v1074 = vpack.c.b16 %v786, %v774
    %v1075 = vpack.c.b16 %v787, %v775
    %v1076 = vpack.c.b16 %v788, %v776
    %v1077 = vpack.c.b16 %v789, %v777
    %v1078 = vpack.c.b16 %v790, %v778
    %v1079 = vpack.c.b16 %v791, %v779
    %v1080 = vpack.c.b16 %v804, %v792
    %v1081 = vpack.c.b16 %v805, %v793
    %v1082 = vpack.c.b16 %v806, %v794
    %v1083 = vpack.c.b16 %v807, %v795
    %v1084 = vpack.c.b16 %v808, %v796
    %v1085 = vpack.c.b16 %v809, %v797
    %v1086 = vpack.c.b16 %v810, %v798
    %v1087 = vpack.c.b16 %v811, %v799
    %v1088 = vpack.c.b16 %v812, %v800
    %v1089 = vpack.c.b16 %v813, %v801
    %v1090 = vpack.c.b16 %v814, %v802
    %v1091 = vpack.c.b16 %v815, %v803
    %v1092 = vpack.c.b16 %v828, %v816
    %v1093 = vpack.c.b16 %v829, %v817
    %v1094 = vpack.c.b16 %v830, %v818
    %v1095 = vpack.c.b16 %v831, %v819
    %v1096 = vpack.c.b16 %v832, %v820
    %v1097 = vpack.c.b16 %v833, %v821
    %v1098 = vpack.c.b16 %v834, %v822
    %v1099 = vpack.c.b16 %v835, %v823
    %v1100 = vpack.c.b16 %v836, %v824
    %v1101 = vpack.c.b16 %v837, %v825
    %v1102 = vpack.c.b16 %v838, %v826
    %v1103 = vpack.c.b16 %v839, %v827
    %v1104 = vpack.c.b16 %v852, %v840
    %v1105 = vpack.c.b16 %v853, %v841
    %v1106 = vpack.c.b16 %v854, %v842
    %v1107 = vpack.c.b16 %v855, %v843
    %v1108 = vpack.c.b16 %v856, %v844
    %v1109 = vpack.c.b16 %v857, %v845
    %v1110 = vpack.c.b16 %v858, %v846
    %v1111 = vpack.c.b16 %v859, %v847
    %v1112 = vpack.c.b16 %v860, %v848
    %v1113 = vpack.c.b16 %v861, %v849
    %v1114 = vpack.c.b16 %v862, %v850
    %v1115 = vpack.c.b16 %v863, %v851
    %v1116 = vpack.c.b16 %v876, %v864
    %v1117 = vpack.c.b16 %v877, %v865
    %v1118 = vpack.c.b16 %v878, %v866
    %v1119 = vpack.c.b16 %v879, %v867
    %v1120 = vpack.c.b16 %v880, %v868
    %v1121 = vpack.c.b16 %v881, %v869
    %v1122 = vpack.c.b16 %v882, %v870
    %v1123 = vpack.c.b16 %v883, %v871
    %v1124 = vpack.c.b16 %v884, %v872
    %v1125 = vpack.c.b16 %v885, %v873
    %v1126 = vpack.c.b16 %v886, %v874
    %v1127 = vpack.c.b16 %v887, %v875
    %v1128 = vpack.c.b16 %v900, %v888
    %v1129 = vpack.c.b16 %v901, %v889
    %v1130 = vpack.c.b16 %v902, %v890
    %v1131 = vpack.c.b16 %v903, %v891
    %v1132 = vpack.c.b16 %v904, %v892
    %v1133 = vpack.c.b16 %v905, %v893
    %v1134 = vpack.c.b16 %v906, %v894
    %v1135 = vpack.c.b16 %v907, %v895
    %v1136 = vpack.c.b16 %v908, %v896
    %v1137 = vpack.c.b16 %v909, %v897
    %v1138 = vpack.c.b16 %v910, %v898
    %v1139 = vpack.c.b16 %v911, %v899
    %v1140 = vpack.c.b16 %v924, %v912
    %v1141 = vpack.c.b16 %v925, %v913
    %v1142 = vpack.c.b16 %v926, %v914
    %v1143 = vpack.c.b16 %v927, %v915
    %v1144 = vpack.c.b16 %v928, %v916
    %v1145 = vpack.c.b16 %v929, %v917
    %v1146 = vpack.c.b16 %v930, %v918
    %v1147 = vpack.c.b16 %v931, %v919
    %v1148 = vpack.c.b16 %v932, %v920
    %v1149 = vpack.c.b16 %v933, %v921
    %v1150 = vpack.c.b16 %v934, %v922
    %v1151 = vpack.c.b16 %v935, %v923
    %v1152 = vpack.c.b16 %v948, %v936
    %v1153 = vpack.c.b16 %v949, %v937
    %v1154 = vpack.c.b16 %v950, %v938
    %v1155 = vpack.c.b16 %v951, %v939
    %v1156 = vpack.c.b16 %v952, %v940
    %v1157 = vpack.c.b16 %v953, %v941
    %v1158 = vpack.c.b16 %v954, %v942
    %v1159 = vpack.c.b16 %v955, %v943
    %v1160 = vpack.c.b16 %v956, %v944
    %v1161 = vpack.c.b16 %v957, %v945
    %v1162 = vpack.c.b16 %v958, %v946
    %v1163 = vpack.c.b16 %v959, %v947
    %v1164 = vpack.c.b16 %v972, %v960
    %v1165 = vpack.c.b16 %v973, %v961
    %v1166 = vpack.c.b16 %v974, %v962
    %v1167 = vpack.c.b16 %v975, %v963
    %v1168 = vpack.c.b16 %v976, %v964
    %v1169 = vpack.c.b16 %v977, %v965
    %v1170 = vpack.c.b16 %v978, %v966
    %v1171 = vpack.c.b16 %v979, %v967
    %v1172 = vpack.c.b16 %v980, %v968
    %v1173 = vpack.c.b16 %v981, %v969
    %v1174 = vpack.c.b16 %v982, %v970
    %v1175 = vpack.c.b16 %v983, %v971
    %1368 = vmatprep.subr.bf16.mxu0 %v985
    %1369 = vmatpush1.bf16.msra.mxu0 %v984
    %1370 = vmatprep.subr.bf16.mxu0 %v997
    %1371 = vmatpush1.bf16.msra.mxu0 %v996
    %1372 = vmatprep.subr.bf16.mxu0 %v1009
    %1373 = vmatpush1.bf16.msra.mxu0 %v1008
    %1374 = vmatprep.subr.bf16.mxu0 %v1021
    %1375 = vmatpush1.bf16.msra.mxu0 %v1020
    %1376 = vmatprep.subr.bf16.mxu0 %v1033
    %1377 = vmatpush1.bf16.msra.mxu0 %v1032
    %1378 = vmatprep.subr.bf16.mxu0 %v1045
    %1379 = vmatpush1.bf16.msra.mxu0 %v1044
    %1380 = vmatprep.subr.bf16.mxu0 %v1057
    %1381 = vmatpush1.bf16.msra.mxu0 %v1056
    %1382 = vmatprep.subr.bf16.mxu0 %v1069
    %1383 = vmatpush1.bf16.msra.mxu0 %v1068
    %1384 = vmatprep.subr.bf16.mxu0 %v1081
    %1385 = vmatpush1.bf16.msra.mxu0 %v1080
    %1386 = vmatprep.subr.bf16.mxu0 %v1093
    %1387 = vmatpush1.bf16.msra.mxu0 %v1092
    %1388 = vmatprep.subr.bf16.mxu0 %v1105
    %1389 = vmatpush1.bf16.msra.mxu0 %v1104
    %1390 = vmatprep.subr.bf16.mxu0 %v1117
    %1391 = vmatpush1.bf16.msra.mxu0 %v1116
    %1392 = vmatprep.subr.bf16.mxu0 %v1129
    %1393 = vmatpush1.bf16.msra.mxu0 %v1128
    %1394 = vmatprep.subr.bf16.mxu0 %v1141
    %1395 = vmatpush1.bf16.msra.mxu0 %v1140
    %1396 = vmatprep.subr.bf16.mxu0 %v1153
    %1397 = vmatpush1.bf16.msra.mxu0 %v1152
    %1398 = vmatprep.subr.bf16.mxu0 %v1165
    %1399 = vmatpush1.bf16.msra.mxu0 %v1164
    %1400 = vmatprep.mubr.bf16.mxu0 %v151
    %1401 = vmatmul.mubr.bf16.gmra.mrb[0].mxu0 %v150
    %v1402 = vpop.f32.mrb[0].mxu0
    %v1403 = vadd.f32 %v351, %v1402
    %v1404 = vpop.f32.mrb[0].mxu0
    %v1405 = vadd.f32 %v355, %v1404
    %v1406 = vpop.f32.mrb[0].mxu0
    %v1407 = vadd.f32 %v351, %v1406
    %v1408 = vpop.f32.mrb[0].mxu0
    %v1409 = vadd.f32 %v355, %v1408
    %1410 = vdwg.mxu0
    %1411 = vmatprep.subr.bf16.mxu0 %v987
    %1412 = vmatpush1.bf16.msra.mxu0 %v986
    %1413 = vmatprep.subr.bf16.mxu0 %v999
    %1414 = vmatpush1.bf16.msra.mxu0 %v998
    %1415 = vmatprep.subr.bf16.mxu0 %v1011
    %1416 = vmatpush1.bf16.msra.mxu0 %v1010
    %1417 = vmatprep.subr.bf16.mxu0 %v1023
    %1418 = vmatpush1.bf16.msra.mxu0 %v1022
    %1419 = vmatprep.subr.bf16.mxu0 %v1035
    %1420 = vmatpush1.bf16.msra.mxu0 %v1034
    %1421 = vmatprep.subr.bf16.mxu0 %v1047
    %1422 = vmatpush1.bf16.msra.mxu0 %v1046
    %1423 = vmatprep.subr.bf16.mxu0 %v1059
    %1424 = vmatpush1.bf16.msra.mxu0 %v1058
    %1425 = vmatprep.subr.bf16.mxu0 %v1071
    %1426 = vmatpush1.bf16.msra.mxu0 %v1070
    %1427 = vmatprep.subr.bf16.mxu0 %v1083
    %1428 = vmatpush1.bf16.msra.mxu0 %v1082
    %1429 = vmatprep.subr.bf16.mxu0 %v1095
    %1430 = vmatpush1.bf16.msra.mxu0 %v1094
    %1431 = vmatprep.subr.bf16.mxu0 %v1107
    %1432 = vmatpush1.bf16.msra.mxu0 %v1106
    %1433 = vmatprep.subr.bf16.mxu0 %v1119
    %1434 = vmatpush1.bf16.msra.mxu0 %v1118
    %1435 = vmatprep.subr.bf16.mxu0 %v1131
    %1436 = vmatpush1.bf16.msra.mxu0 %v1130
    %1437 = vmatprep.subr.bf16.mxu0 %v1143
    %1438 = vmatpush1.bf16.msra.mxu0 %v1142
    %1439 = vmatprep.subr.bf16.mxu0 %v1155
    %1440 = vmatpush1.bf16.msra.mxu0 %v1154
    %1441 = vmatprep.subr.bf16.mxu0 %v1167
    %1442 = vmatpush1.bf16.msra.mxu0 %v1166
    %1443 = vmatprep.mubr.bf16.mxu0 %v151
    %1444 = vmatmul.mubr.bf16.gmra.mrb[0].mxu0 %v150
    %v1445 = vpop.f32.mrb[0].mxu0
    %v1446 = vadd.f32 %v359, %v1445
    %v1447 = vpop.f32.mrb[0].mxu0
    %v1448 = vadd.f32 %v363, %v1447
    %v1449 = vpop.f32.mrb[0].mxu0
    %v1450 = vadd.f32 %v359, %v1449
    %v1451 = vpop.f32.mrb[0].mxu0
    %v1452 = vadd.f32 %v363, %v1451
    %1453 = vdwg.mxu0
    %1454 = vmatprep.subr.bf16.mxu0 %v989
    %1455 = vmatpush1.bf16.msra.mxu0 %v988
    %1456 = vmatprep.subr.bf16.mxu0 %v1001
    %1457 = vmatpush1.bf16.msra.mxu0 %v1000
    %1458 = vmatprep.subr.bf16.mxu0 %v1013
    %1459 = vmatpush1.bf16.msra.mxu0 %v1012
    %1460 = vmatprep.subr.bf16.mxu0 %v1025
    %1461 = vmatpush1.bf16.msra.mxu0 %v1024
    %1462 = vmatprep.subr.bf16.mxu0 %v1037
    %1463 = vmatpush1.bf16.msra.mxu0 %v1036
    %1464 = vmatprep.subr.bf16.mxu0 %v1049
    %1465 = vmatpush1.bf16.msra.mxu0 %v1048
    %1466 = vmatprep.subr.bf16.mxu0 %v1061
    %1467 = vmatpush1.bf16.msra.mxu0 %v1060
    %1468 = vmatprep.subr.bf16.mxu0 %v1073
    %1469 = vmatpush1.bf16.msra.mxu0 %v1072
    %1470 = vmatprep.subr.bf16.mxu0 %v1085
    %1471 = vmatpush1.bf16.msra.mxu0 %v1084
    %1472 = vmatprep.subr.bf16.mxu0 %v1097
    %1473 = vmatpush1.bf16.msra.mxu0 %v1096
    %1474 = vmatprep.subr.bf16.mxu0 %v1109
    %1475 = vmatpush1.bf16.msra.mxu0 %v1108
    %1476 = vmatprep.subr.bf16.mxu0 %v1121
    %1477 = vmatpush1.bf16.msra.mxu0 %v1120
    %1478 = vmatprep.subr.bf16.mxu0 %v1133
    %1479 = vmatpush1.bf16.msra.mxu0 %v1132
    %1480 = vmatprep.subr.bf16.mxu0 %v1145
    %1481 = vmatpush1.bf16.msra.mxu0 %v1144
    %1482 = vmatprep.subr.bf16.mxu0 %v1157
    %1483 = vmatpush1.bf16.msra.mxu0 %v1156
    %1484 = vmatprep.subr.bf16.mxu0 %v1169
    %1485 = vmatpush1.bf16.msra.mxu0 %v1168
    %1486 = vmatprep.mubr.bf16.mxu0 %v151
    %1487 = vmatmul.mubr.bf16.gmra.mrb[0].mxu0 %v150
    %v1488 = vpop.f32.mrb[0].mxu0
    %v1489 = vadd.f32 %v367, %v1488
    %v1490 = vpop.f32.mrb[0].mxu0
    %v1491 = vadd.f32 %v371, %v1490
    %v1492 = vpop.f32.mrb[0].mxu0
    %v1493 = vadd.f32 %v367, %v1492
    %v1494 = vpop.f32.mrb[0].mxu0
    %v1495 = vadd.f32 %v371, %v1494
    %1496 = vdwg.mxu0
    %1497 = vmatprep.subr.bf16.mxu0 %v991
    %1498 = vmatpush1.bf16.msra.mxu0 %v990
    %1499 = vmatprep.subr.bf16.mxu0 %v1003
    %1500 = vmatpush1.bf16.msra.mxu0 %v1002
    %1501 = vmatprep.subr.bf16.mxu0 %v1015
    %1502 = vmatpush1.bf16.msra.mxu0 %v1014
    %1503 = vmatprep.subr.bf16.mxu0 %v1027
    %1504 = vmatpush1.bf16.msra.mxu0 %v1026
    %1505 = vmatprep.subr.bf16.mxu0 %v1039
    %1506 = vmatpush1.bf16.msra.mxu0 %v1038
    %1507 = vmatprep.subr.bf16.mxu0 %v1051
    %1508 = vmatpush1.bf16.msra.mxu0 %v1050
    %1509 = vmatprep.subr.bf16.mxu0 %v1063
    %1510 = vmatpush1.bf16.msra.mxu0 %v1062
    %1511 = vmatprep.subr.bf16.mxu0 %v1075
    %1512 = vmatpush1.bf16.msra.mxu0 %v1074
    %1513 = vmatprep.subr.bf16.mxu0 %v1087
    %1514 = vmatpush1.bf16.msra.mxu0 %v1086
    %1515 = vmatprep.subr.bf16.mxu0 %v1099
    %1516 = vmatpush1.bf16.msra.mxu0 %v1098
    %1517 = vmatprep.subr.bf16.mxu0 %v1111
    %1518 = vmatpush1.bf16.msra.mxu0 %v1110
    %1519 = vmatprep.subr.bf16.mxu0 %v1123
    %1520 = vmatpush1.bf16.msra.mxu0 %v1122
    %1521 = vmatprep.subr.bf16.mxu0 %v1135
    %1522 = vmatpush1.bf16.msra.mxu0 %v1134
    %1523 = vmatprep.subr.bf16.mxu0 %v1147
    %1524 = vmatpush1.bf16.msra.mxu0 %v1146
    %1525 = vmatprep.subr.bf16.mxu0 %v1159
    %1526 = vmatpush1.bf16.msra.mxu0 %v1158
    %1527 = vmatprep.subr.bf16.mxu0 %v1171
    %1528 = vmatpush1.bf16.msra.mxu0 %v1170
    %1529 = vmatprep.mubr.bf16.mxu0 %v151
    %1530 = vmatmul.mubr.bf16.gmra.mrb[0].mxu0 %v150
    %v1531 = vpop.f32.mrb[0].mxu0
    %v1532 = vadd.f32 %v375, %v1531
    %v1533 = vpop.f32.mrb[0].mxu0
    %v1534 = vadd.f32 %v379, %v1533
    %v1535 = vpop.f32.mrb[0].mxu0
    %v1536 = vadd.f32 %v375, %v1535
    %v1537 = vpop.f32.mrb[0].mxu0
    %v1538 = vadd.f32 %v379, %v1537
    %1539 = vdwg.mxu0
    %1540 = vmatprep.subr.bf16.mxu0 %v993
    %1541 = vmatpush1.bf16.msra.mxu0 %v992
    %1542 = vmatprep.subr.bf16.mxu0 %v1005
    %1543 = vmatpush1.bf16.msra.mxu0 %v1004
    %1544 = vmatprep.subr.bf16.mxu0 %v1017
    %1545 = vmatpush1.bf16.msra.mxu0 %v1016
    %1546 = vmatprep.subr.bf16.mxu0 %v1029
    %1547 = vmatpush1.bf16.msra.mxu0 %v1028
    %1548 = vmatprep.subr.bf16.mxu0 %v1041
    %1549 = vmatpush1.bf16.msra.mxu0 %v1040
    %1550 = vmatprep.subr.bf16.mxu0 %v1053
    %1551 = vmatpush1.bf16.msra.mxu0 %v1052
    %1552 = vmatprep.subr.bf16.mxu0 %v1065
    %1553 = vmatpush1.bf16.msra.mxu0 %v1064
    %1554 = vmatprep.subr.bf16.mxu0 %v1077
    %1555 = vmatpush1.bf16.msra.mxu0 %v1076
    %1556 = vmatprep.subr.bf16.mxu0 %v1089
    %1557 = vmatpush1.bf16.msra.mxu0 %v1088
    %1558 = vmatprep.subr.bf16.mxu0 %v1101
    %1559 = vmatpush1.bf16.msra.mxu0 %v1100
    %1560 = vmatprep.subr.bf16.mxu0 %v1113
    %1561 = vmatpush1.bf16.msra.mxu0 %v1112
    %1562 = vmatprep.subr.bf16.mxu0 %v1125
    %1563 = vmatpush1.bf16.msra.mxu0 %v1124
    %1564 = vmatprep.subr.bf16.mxu0 %v1137
    %1565 = vmatpush1.bf16.msra.mxu0 %v1136
    %1566 = vmatprep.subr.bf16.mxu0 %v1149
    %1567 = vmatpush1.bf16.msra.mxu0 %v1148
    %1568 = vmatprep.subr.bf16.mxu0 %v1161
    %1569 = vmatpush1.bf16.msra.mxu0 %v1160
    %1570 = vmatprep.subr.bf16.mxu0 %v1173
    %1571 = vmatpush1.bf16.msra.mxu0 %v1172
    %1572 = vmatprep.mubr.bf16.mxu0 %v151
    %1573 = vmatmul.mubr.bf16.gmra.mrb[0].mxu0 %v150
    %v1574 = vpop.f32.mrb[0].mxu0
    %v1575 = vadd.f32 %v383, %v1574
    %v1576 = vpop.f32.mrb[0].mxu0
    %v1577 = vadd.f32 %v387, %v1576
    %v1578 = vpop.f32.mrb[0].mxu0
    %v1579 = vadd.f32 %v383, %v1578
    %v1580 = vpop.f32.mrb[0].mxu0
    %v1581 = vadd.f32 %v387, %v1580
    %1582 = vdwg.mxu0
    %1583 = vmatprep.subr.bf16.mxu0 %v995
    %1584 = vmatpush1.bf16.msra.mxu0 %v994
    %1585 = vmatprep.subr.bf16.mxu0 %v1007
    %1586 = vmatpush1.bf16.msra.mxu0 %v1006
    %1587 = vmatprep.subr.bf16.mxu0 %v1019
    %1588 = vmatpush1.bf16.msra.mxu0 %v1018
    %1589 = vmatprep.subr.bf16.mxu0 %v1031
    %1590 = vmatpush1.bf16.msra.mxu0 %v1030
    %1591 = vmatprep.subr.bf16.mxu0 %v1043
    %1592 = vmatpush1.bf16.msra.mxu0 %v1042
    %1593 = vmatprep.subr.bf16.mxu0 %v1055
    %1594 = vmatpush1.bf16.msra.mxu0 %v1054
    %1595 = vmatprep.subr.bf16.mxu0 %v1067
    %1596 = vmatpush1.bf16.msra.mxu0 %v1066
    %1597 = vmatprep.subr.bf16.mxu0 %v1079
    %1598 = vmatpush1.bf16.msra.mxu0 %v1078
    %1599 = vmatprep.subr.bf16.mxu0 %v1091
    %1600 = vmatpush1.bf16.msra.mxu0 %v1090
    %1601 = vmatprep.subr.bf16.mxu0 %v1103
    %1602 = vmatpush1.bf16.msra.mxu0 %v1102
    %1603 = vmatprep.subr.bf16.mxu0 %v1115
    %1604 = vmatpush1.bf16.msra.mxu0 %v1114
    %1605 = vmatprep.subr.bf16.mxu0 %v1127
    %1606 = vmatpush1.bf16.msra.mxu0 %v1126
    %1607 = vmatprep.subr.bf16.mxu0 %v1139
    %1608 = vmatpush1.bf16.msra.mxu0 %v1138
    %1609 = vmatprep.subr.bf16.mxu0 %v1151
    %1610 = vmatpush1.bf16.msra.mxu0 %v1150
    %1611 = vmatprep.subr.bf16.mxu0 %v1163
    %1612 = vmatpush1.bf16.msra.mxu0 %v1162
    %1613 = vmatprep.subr.bf16.mxu0 %v1175
    %1614 = vmatpush1.bf16.msra.mxu0 %v1174
    %1615 = vmatprep.mubr.bf16.mxu0 %v151
    %1616 = vmatmul.mubr.bf16.gmra.mrb[0].mxu0 %v150
    %v1617 = vpop.f32.mrb[0].mxu0
    %v1618 = vadd.f32 %v391, %v1617
    %v1619 = vpop.f32.mrb[0].mxu0
    %v1620 = vadd.f32 %v395, %v1619
    %v1621 = vpop.f32.mrb[0].mxu0
    %v1622 = vadd.f32 %v391, %v1621
    %v1623 = vpop.f32.mrb[0].mxu0
    %v1624 = vadd.f32 %v395, %v1623
    %1625 = vdwg.mxu0
    %v1626 = vmax.f32 %v1403, 0.0
    %v1627 = vmax.f32 %v1405, 0.0
    %v1628 = vmax.f32 %v1446, 0.0
    %v1629 = vmax.f32 %v1448, 0.0
    %v1630 = vmax.f32 %v1489, 0.0
    %v1631 = vmax.f32 %v1491, 0.0
    %v1632 = vmax.f32 %v1532, 0.0
    %v1633 = vmax.f32 %v1534, 0.0
    %v1634 = vmax.f32 %v1575, 0.0
    %v1635 = vmax.f32 %v1577, 0.0
    %v1636 = vmax.f32 %v1618, 0.0
    %v1637 = vmax.f32 %v1620, 0.0
    %v1638 = vmax.f32 %v1407, 0.0
    %v1639 = vmax.f32 %v1409, 0.0
    %v1640 = vmax.f32 %v1450, 0.0
    %v1641 = vmax.f32 %v1452, 0.0
    %v1642 = vmax.f32 %v1493, 0.0
    %v1643 = vmax.f32 %v1495, 0.0
    %v1644 = vmax.f32 %v1536, 0.0
    %v1645 = vmax.f32 %v1538, 0.0
    %v1646 = vmax.f32 %v1579, 0.0
    %v1647 = vmax.f32 %v1581, 0.0
    %v1648 = vmax.f32 %v1622, 0.0
    %v1649 = vmax.f32 %v1624, 0.0
    %v1650 = vpack.c.bf16 %v1638, %v1626
    %v1651 = vpack.c.bf16 %v1639, %v1627
    %v1652 = vpack.c.bf16 %v1640, %v1628
    %v1653 = vpack.c.bf16 %v1641, %v1629
    %v1654 = vpack.c.bf16 %v1642, %v1630
    %v1655 = vpack.c.bf16 %v1643, %v1631
    %v1656 = vpack.c.bf16 %v1644, %v1632
    %v1657 = vpack.c.bf16 %v1645, %v1633
    %v1658 = vpack.c.bf16 %v1646, %v1634
    %v1659 = vpack.c.bf16 %v1647, %v1635
    %v1660 = vpack.c.bf16 %v1648, %v1636
    %v1661 = vpack.c.bf16 %v1649, %v1637
    %v1662 = vld [vmem:[#allocation8] sm:$0xf]
    %v1663 = vld [vmem:[#allocation8 + $0x4] sm:$0xf]
    %v1664 = vld [vmem:[#allocation8 + $0x8] sm:$0xf]
    %v1665 = vld [vmem:[#allocation8 + $0xc] sm:$0xf]
    %v1666 = vld [vmem:[#allocation8 + $0x10] sm:$0xf]
    %v1667 = vld [vmem:[#allocation8 + $0x14] sm:$0xf]
    %v1668 = vld [vmem:[#allocation8 + $0x18] sm:$0xf]
    %v1669 = vld [vmem:[#allocation8 + $0x1c] sm:$0xf]
    %v1670 = vld [vmem:[#allocation8 + $0x20] sm:$0xf]
    %v1671 = vld [vmem:[#allocation8 + $0x24] sm:$0xf]
    %v1672 = vld [vmem:[#allocation8 + $0x28] sm:$0xf]
    %v1673 = vld [vmem:[#allocation8 + $0x2c] sm:$0xf]
    %v1674 = vld [vmem:[#allocation8 + $0x30] sm:$0xf]
    %v1675 = vld [vmem:[#allocation8 + $0x34] sm:$0xf]
    %v1676 = vld [vmem:[#allocation8 + $0x38] sm:$0xf]
    %v1677 = vld [vmem:[#allocation8 + $0x3c] sm:$0xf]
    %v1678 = vld [vmem:[#allocation8 + $0x40] sm:$0xf]
    %v1679 = vld [vmem:[#allocation8 + $0x44] sm:$0xf]
    %v1680 = vld [vmem:[#allocation8 + $0x48] sm:$0xf]
    %v1681 = vld [vmem:[#allocation8 + $0x4c] sm:$0xf]
    %v1682 = vld [vmem:[#allocation8 + $0x50] sm:$0xf]
    %v1683 = vld [vmem:[#allocation8 + $0x54] sm:$0xf]
    %v1684 = vld [vmem:[#allocation8 + $0x58] sm:$0xf]
    %v1685 = vld [vmem:[#allocation8 + $0x5c] sm:$0xf]
    %v1686 = vld [vmem:[#allocation8 + $0x60] sm:$0xf]
    %v1687 = vld [vmem:[#allocation8 + $0x64] sm:$0xf]
    %v1688 = vld [vmem:[#allocation8 + $0x68] sm:$0xf]
    %v1689 = vld [vmem:[#allocation8 + $0x6c] sm:$0xf]
    %v1690 = vld [vmem:[#allocation8 + $0x70] sm:$0xf]
    %v1691 = vld [vmem:[#allocation8 + $0x74] sm:$0xf]
    %v1692 = vld [vmem:[#allocation8 + $0x78] sm:$0xf]
    %v1693 = vld [vmem:[#allocation8 + $0x7c] sm:$0xf]
    %v1694 = vld [vmem:[#allocation8 + $0x80] sm:$0xf]
    %v1695 = vld [vmem:[#allocation8 + $0x84] sm:$0xf]
    %v1696 = vld [vmem:[#allocation8 + $0x88] sm:$0xf]
    %v1697 = vld [vmem:[#allocation8 + $0x8c] sm:$0xf]
    %v1698 = vld [vmem:[#allocation8 + $0x90] sm:$0xf]
    %v1699 = vld [vmem:[#allocation8 + $0x94] sm:$0xf]
    %v1700 = vld [vmem:[#allocation8 + $0x98] sm:$0xf]
    %v1701 = vld [vmem:[#allocation8 + $0x9c] sm:$0xf]
    %v1702 = vld [vmem:[#allocation8 + $0xa0] sm:$0xf]
    %v1703 = vld [vmem:[#allocation8 + $0xa4] sm:$0xf]
    %v1704 = vld [vmem:[#allocation8 + $0xa8] sm:$0xf]
    %v1705 = vld [vmem:[#allocation8 + $0xac] sm:$0xf]
    %v1706 = vld [vmem:[#allocation8 + $0xb0] sm:$0xf]
    %v1707 = vld [vmem:[#allocation8 + $0xb4] sm:$0xf]
    %v1708 = vld [vmem:[#allocation8 + $0xb8] sm:$0xf]
    %v1709 = vld [vmem:[#allocation8 + $0xbc] sm:$0xf]
    %v1710 = vld [vmem:[#allocation8 + $0xc0] sm:$0xf]
    %v1711 = vld [vmem:[#allocation8 + $0xc4] sm:$0xf]
    %v1712 = vld [vmem:[#allocation8 + $0xc8] sm:$0xf]
    %v1713 = vld [vmem:[#allocation8 + $0xcc] sm:$0xf]
    %v1714 = vld [vmem:[#allocation8 + $0xd0] sm:$0xf]
    %v1715 = vld [vmem:[#allocation8 + $0xd4] sm:$0xf]
    %v1716 = vld [vmem:[#allocation8 + $0xd8] sm:$0xf]
    %v1717 = vld [vmem:[#allocation8 + $0xdc] sm:$0xf]
    %v1718 = vld [vmem:[#allocation8 + $0xe0] sm:$0xf]
    %v1719 = vld [vmem:[#allocation8 + $0xe4] sm:$0xf]
    %v1720 = vld [vmem:[#allocation8 + $0xe8] sm:$0xf]
    %v1721 = vld [vmem:[#allocation8 + $0xec] sm:$0xf]
    %v1722 = vld [vmem:[#allocation8 + $0xf0] sm:$0xf]
    %v1723 = vld [vmem:[#allocation8 + $0xf4] sm:$0xf]
    %v1724 = vld [vmem:[#allocation8 + $0xf8] sm:$0xf]
    %v1725 = vld [vmem:[#allocation8 + $0xfc] sm:$0xf]
    %v1726 = vld [vmem:[#allocation8 + $0x100] sm:$0xf]
    %v1727 = vld [vmem:[#allocation8 + $0x104] sm:$0xf]
    %v1728 = vld [vmem:[#allocation8 + $0x108] sm:$0xf]
    %v1729 = vld [vmem:[#allocation8 + $0x10c] sm:$0xf]
    %v1730 = vld [vmem:[#allocation8 + $0x110] sm:$0xf]
    %v1731 = vld [vmem:[#allocation8 + $0x114] sm:$0xf]
    %v1732 = vld [vmem:[#allocation8 + $0x118] sm:$0xf]
    %v1733 = vld [vmem:[#allocation8 + $0x11c] sm:$0xf]
    %v1734 = vld [vmem:[#allocation8 + $0x120] sm:$0xf]
    %v1735 = vld [vmem:[#allocation8 + $0x124] sm:$0xf]
    %v1736 = vld [vmem:[#allocation8 + $0x128] sm:$0xf]
    %v1737 = vld [vmem:[#allocation8 + $0x12c] sm:$0xf]
    %v1738 = vld [vmem:[#allocation8 + $0x130] sm:$0xf]
    %v1739 = vld [vmem:[#allocation8 + $0x134] sm:$0xf]
    %v1740 = vld [vmem:[#allocation8 + $0x138] sm:$0xf]
    %v1741 = vld [vmem:[#allocation8 + $0x13c] sm:$0xf]
    %v1742 = vld [vmem:[#allocation8 + $0x140] sm:$0xf]
    %v1743 = vld [vmem:[#allocation8 + $0x144] sm:$0xf]
    %v1744 = vld [vmem:[#allocation8 + $0x148] sm:$0xf]
    %v1745 = vld [vmem:[#allocation8 + $0x14c] sm:$0xf]
    %v1746 = vld [vmem:[#allocation8 + $0x150] sm:$0xf]
    %v1747 = vld [vmem:[#allocation8 + $0x154] sm:$0xf]
    %v1748 = vld [vmem:[#allocation8 + $0x158] sm:$0xf]
    %v1749 = vld [vmem:[#allocation8 + $0x15c] sm:$0xf]
    %v1750 = vld [vmem:[#allocation8 + $0x160] sm:$0xf]
    %v1751 = vld [vmem:[#allocation8 + $0x164] sm:$0xf]
    %v1752 = vld [vmem:[#allocation8 + $0x168] sm:$0xf]
    %v1753 = vld [vmem:[#allocation8 + $0x16c] sm:$0xf]
    %v1754 = vld [vmem:[#allocation8 + $0x170] sm:$0xf]
    %v1755 = vld [vmem:[#allocation8 + $0x174] sm:$0xf]
    %v1756 = vld [vmem:[#allocation8 + $0x178] sm:$0xf]
    %v1757 = vld [vmem:[#allocation8 + $0x17c] sm:$0xf]
    %v1758 = vld [vmem:[#allocation8 + $0x180] sm:$0xf]
    %v1759 = vld [vmem:[#allocation8 + $0x184] sm:$0xf]
    %v1760 = vld [vmem:[#allocation8 + $0x188] sm:$0xf]
    %v1761 = vld [vmem:[#allocation8 + $0x18c] sm:$0xf]
    %v1762 = vld [vmem:[#allocation8 + $0x190] sm:$0xf]
    %v1763 = vld [vmem:[#allocation8 + $0x194] sm:$0xf]
    %v1764 = vld [vmem:[#allocation8 + $0x198] sm:$0xf]
    %v1765 = vld [vmem:[#allocation8 + $0x19c] sm:$0xf]
    %v1766 = vld [vmem:[#allocation8 + $0x1a0] sm:$0xf]
    %v1767 = vld [vmem:[#allocation8 + $0x1a4] sm:$0xf]
    %v1768 = vld [vmem:[#allocation8 + $0x1a8] sm:$0xf]
    %v1769 = vld [vmem:[#allocation8 + $0x1ac] sm:$0xf]
    %v1770 = vld [vmem:[#allocation8 + $0x1b0] sm:$0xf]
    %v1771 = vld [vmem:[#allocation8 + $0x1b4] sm:$0xf]
    %v1772 = vld [vmem:[#allocation8 + $0x1b8] sm:$0xf]
    %v1773 = vld [vmem:[#allocation8 + $0x1bc] sm:$0xf]
    %v1774 = vld [vmem:[#allocation8 + $0x1c0] sm:$0xf]
    %v1775 = vld [vmem:[#allocation8 + $0x1c4] sm:$0xf]
    %v1776 = vld [vmem:[#allocation8 + $0x1c8] sm:$0xf]
    %v1777 = vld [vmem:[#allocation8 + $0x1cc] sm:$0xf]
    %v1778 = vld [vmem:[#allocation8 + $0x1d0] sm:$0xf]
    %v1779 = vld [vmem:[#allocation8 + $0x1d4] sm:$0xf]
    %v1780 = vld [vmem:[#allocation8 + $0x1d8] sm:$0xf]
    %v1781 = vld [vmem:[#allocation8 + $0x1dc] sm:$0xf]
    %v1782 = vld [vmem:[#allocation8 + $0x1e0] sm:$0xf]
    %v1783 = vld [vmem:[#allocation8 + $0x1e4] sm:$0xf]
    %v1784 = vld [vmem:[#allocation8 + $0x1e8] sm:$0xf]
    %v1785 = vld [vmem:[#allocation8 + $0x1ec] sm:$0xf]
    %v1786 = vld [vmem:[#allocation8 + $0x1f0] sm:$0xf]
    %v1787 = vld [vmem:[#allocation8 + $0x1f4] sm:$0xf]
    %v1788 = vld [vmem:[#allocation8 + $0x1f8] sm:$0xf]
    %v1789 = vld [vmem:[#allocation8 + $0x1fc] sm:$0xf]
    %v1790 = vld [vmem:[#allocation8 + $0x200] sm:$0xf]
    %v1791 = vld [vmem:[#allocation8 + $0x204] sm:$0xf]
    %v1792 = vld [vmem:[#allocation8 + $0x208] sm:$0xf]
    %v1793 = vld [vmem:[#allocation8 + $0x20c] sm:$0xf]
    %v1794 = vld [vmem:[#allocation8 + $0x210] sm:$0xf]
    %v1795 = vld [vmem:[#allocation8 + $0x214] sm:$0xf]
    %v1796 = vld [vmem:[#allocation8 + $0x218] sm:$0xf]
    %v1797 = vld [vmem:[#allocation8 + $0x21c] sm:$0xf]
    %v1798 = vld [vmem:[#allocation8 + $0x220] sm:$0xf]
    %v1799 = vld [vmem:[#allocation8 + $0x224] sm:$0xf]
    %v1800 = vld [vmem:[#allocation8 + $0x228] sm:$0xf]
    %v1801 = vld [vmem:[#allocation8 + $0x22c] sm:$0xf]
    %v1802 = vld [vmem:[#allocation8 + $0x230] sm:$0xf]
    %v1803 = vld [vmem:[#allocation8 + $0x234] sm:$0xf]
    %v1804 = vld [vmem:[#allocation8 + $0x238] sm:$0xf]
    %v1805 = vld [vmem:[#allocation8 + $0x23c] sm:$0xf]
    %v1806 = vld [vmem:[#allocation8 + $0x240] sm:$0xf]
    %v1807 = vld [vmem:[#allocation8 + $0x244] sm:$0xf]
    %v1808 = vld [vmem:[#allocation8 + $0x248] sm:$0xf]
    %v1809 = vld [vmem:[#allocation8 + $0x24c] sm:$0xf]
    %v1810 = vld [vmem:[#allocation8 + $0x250] sm:$0xf]
    %v1811 = vld [vmem:[#allocation8 + $0x254] sm:$0xf]
    %v1812 = vld [vmem:[#allocation8 + $0x258] sm:$0xf]
    %v1813 = vld [vmem:[#allocation8 + $0x25c] sm:$0xf]
    %v1814 = vld [vmem:[#allocation8 + $0x260] sm:$0xf]
    %v1815 = vld [vmem:[#allocation8 + $0x264] sm:$0xf]
    %v1816 = vld [vmem:[#allocation8 + $0x268] sm:$0xf]
    %v1817 = vld [vmem:[#allocation8 + $0x26c] sm:$0xf]
    %v1818 = vld [vmem:[#allocation8 + $0x270] sm:$0xf]
    %v1819 = vld [vmem:[#allocation8 + $0x274] sm:$0xf]
    %v1820 = vld [vmem:[#allocation8 + $0x278] sm:$0xf]
    %v1821 = vld [vmem:[#allocation8 + $0x27c] sm:$0xf]
    %v1822 = vld [vmem:[#allocation8 + $0x280] sm:$0xf]
    %v1823 = vld [vmem:[#allocation8 + $0x284] sm:$0xf]
    %v1824 = vld [vmem:[#allocation8 + $0x288] sm:$0xf]
    %v1825 = vld [vmem:[#allocation8 + $0x28c] sm:$0xf]
    %v1826 = vld [vmem:[#allocation8 + $0x290] sm:$0xf]
    %v1827 = vld [vmem:[#allocation8 + $0x294] sm:$0xf]
    %v1828 = vld [vmem:[#allocation8 + $0x298] sm:$0xf]
    %v1829 = vld [vmem:[#allocation8 + $0x29c] sm:$0xf]
    %v1830 = vld [vmem:[#allocation8 + $0x2a0] sm:$0xf]
    %v1831 = vld [vmem:[#allocation8 + $0x2a4] sm:$0xf]
    %v1832 = vld [vmem:[#allocation8 + $0x2a8] sm:$0xf]
    %v1833 = vld [vmem:[#allocation8 + $0x2ac] sm:$0xf]
    %v1834 = vld [vmem:[#allocation8 + $0x2b0] sm:$0xf]
    %v1835 = vld [vmem:[#allocation8 + $0x2b4] sm:$0xf]
    %v1836 = vld [vmem:[#allocation8 + $0x2b8] sm:$0xf]
    %v1837 = vld [vmem:[#allocation8 + $0x2bc] sm:$0xf]
    %v1838 = vld [vmem:[#allocation8 + $0x2c0] sm:$0xf]
    %v1839 = vld [vmem:[#allocation8 + $0x2c4] sm:$0xf]
    %v1840 = vld [vmem:[#allocation8 + $0x2c8] sm:$0xf]
    %v1841 = vld [vmem:[#allocation8 + $0x2cc] sm:$0xf]
    %v1842 = vld [vmem:[#allocation8 + $0x2d0] sm:$0xf]
    %v1843 = vld [vmem:[#allocation8 + $0x2d4] sm:$0xf]
    %v1844 = vld [vmem:[#allocation8 + $0x2d8] sm:$0xf]
    %v1845 = vld [vmem:[#allocation8 + $0x2dc] sm:$0xf]
    %v1846 = vld [vmem:[#allocation8 + $0x2e0] sm:$0xf]
    %v1847 = vld [vmem:[#allocation8 + $0x2e4] sm:$0xf]
    %v1848 = vld [vmem:[#allocation8 + $0x2e8] sm:$0xf]
    %v1849 = vld [vmem:[#allocation8 + $0x2ec] sm:$0xf]
    %v1850 = vld [vmem:[#allocation8 + $0x2f0] sm:$0xf]
    %v1851 = vld [vmem:[#allocation8 + $0x2f4] sm:$0xf]
    %v1852 = vld [vmem:[#allocation8 + $0x2f8] sm:$0xf]
    %v1853 = vld [vmem:[#allocation8 + $0x2fc] sm:$0xf]
    %v1854 = vld [vmem:[%s4] sm:$0x1]
    %v1856 = vlaneseq
    %v1857 = vshrl.u32 %v1856, 7
    %v1858 = vsub.s32 0, %v1857
    %v1859 = vrot.slane %v1854, %v1858
    %v2053 = vunpack.c.l.b16 %v1662
    %v2054 = vunpack.c.l.b16 %v1663
    %v2055 = vunpack.c.l.b16 %v1664
    %v2056 = vunpack.c.l.b16 %v1665
    %v2057 = vunpack.c.l.b16 %v1666
    %v2058 = vunpack.c.l.b16 %v1667
    %v2059 = vunpack.c.l.b16 %v1668
    %v2060 = vunpack.c.l.b16 %v1669
    %v2061 = vunpack.c.l.b16 %v1670
    %v2062 = vunpack.c.l.b16 %v1671
    %v2063 = vunpack.c.l.b16 %v1672
    %v2064 = vunpack.c.l.b16 %v1673
    %v2065 = vunpack.c.l.b16 %v1674
    %v2066 = vunpack.c.l.b16 %v1675
    %v2067 = vunpack.c.l.b16 %v1676
    %v2068 = vunpack.c.l.b16 %v1677
    %v2069 = vunpack.c.l.b16 %v1678
    %v2070 = vunpack.c.l.b16 %v1679
    %v2071 = vunpack.c.l.b16 %v1680
    %v2072 = vunpack.c.l.b16 %v1681
    %v2073 = vunpack.c.l.b16 %v1682
    %v2074 = vunpack.c.l.b16 %v1683
    %v2075 = vunpack.c.l.b16 %v1684
    %v2076 = vunpack.c.l.b16 %v1685
    %v2077 = vunpack.c.l.b16 %v1686
    %v2078 = vunpack.c.l.b16 %v1687
    %v2079 = vunpack.c.l.b16 %v1688
    %v2080 = vunpack.c.l.b16 %v1689
    %v2081 = vunpack.c.l.b16 %v1690
    %v2082 = vunpack.c.l.b16 %v1691
    %v2083 = vunpack.c.l.b16 %v1692
    %v2084 = vunpack.c.l.b16 %v1693
    %v2085 = vunpack.c.l.b16 %v1694
    %v2086 = vunpack.c.l.b16 %v1695
    %v2087 = vunpack.c.l.b16 %v1696
    %v2088 = vunpack.c.l.b16 %v1697
    %v2089 = vunpack.c.l.b16 %v1698
    %v2090 = vunpack.c.l.b16 %v1699
    %v2091 = vunpack.c.l.b16 %v1700
    %v2092 = vunpack.c.l.b16 %v1701
    %v2093 = vunpack.c.l.b16 %v1702
    %v2094 = vunpack.c.l.b16 %v1703
    %v2095 = vunpack.c.l.b16 %v1704
    %v2096 = vunpack.c.l.b16 %v1705
    %v2097 = vunpack.c.l.b16 %v1706
    %v2098 = vunpack.c.l.b16 %v1707
    %v2099 = vunpack.c.l.b16 %v1708
    %v2100 = vunpack.c.l.b16 %v1709
    %v2101 = vunpack.c.l.b16 %v1710
    %v2102 = vunpack.c.l.b16 %v1711
    %v2103 = vunpack.c.l.b16 %v1712
    %v2104 = vunpack.c.l.b16 %v1713
    %v2105 = vunpack.c.l.b16 %v1714
    %v2106 = vunpack.c.l.b16 %v1715
    %v2107 = vunpack.c.l.b16 %v1716
    %v2108 = vunpack.c.l.b16 %v1717
    %v2109 = vunpack.c.l.b16 %v1718
    %v2110 = vunpack.c.l.b16 %v1719
    %v2111 = vunpack.c.l.b16 %v1720
    %v2112 = vunpack.c.l.b16 %v1721
    %v2113 = vunpack.c.l.b16 %v1722
    %v2114 = vunpack.c.l.b16 %v1723
    %v2115 = vunpack.c.l.b16 %v1724
    %v2116 = vunpack.c.l.b16 %v1725
    %v2117 = vunpack.c.l.b16 %v1726
    %v2118 = vunpack.c.l.b16 %v1727
    %v2119 = vunpack.c.l.b16 %v1728
    %v2120 = vunpack.c.l.b16 %v1729
    %v2121 = vunpack.c.l.b16 %v1730
    %v2122 = vunpack.c.l.b16 %v1731
    %v2123 = vunpack.c.l.b16 %v1732
    %v2124 = vunpack.c.l.b16 %v1733
    %v2125 = vunpack.c.l.b16 %v1734
    %v2126 = vunpack.c.l.b16 %v1735
    %v2127 = vunpack.c.l.b16 %v1736
    %v2128 = vunpack.c.l.b16 %v1737
    %v2129 = vunpack.c.l.b16 %v1738
    %v2130 = vunpack.c.l.b16 %v1739
    %v2131 = vunpack.c.l.b16 %v1740
    %v2132 = vunpack.c.l.b16 %v1741
    %v2133 = vunpack.c.l.b16 %v1742
    %v2134 = vunpack.c.l.b16 %v1743
    %v2135 = vunpack.c.l.b16 %v1744
    %v2136 = vunpack.c.l.b16 %v1745
    %v2137 = vunpack.c.l.b16 %v1746
    %v2138 = vunpack.c.l.b16 %v1747
    %v2139 = vunpack.c.l.b16 %v1748
    %v2140 = vunpack.c.l.b16 %v1749
    %v2141 = vunpack.c.l.b16 %v1750
    %v2142 = vunpack.c.l.b16 %v1751
    %v2143 = vunpack.c.l.b16 %v1752
    %v2144 = vunpack.c.l.b16 %v1753
    %v2145 = vunpack.c.l.b16 %v1754
    %v2146 = vunpack.c.l.b16 %v1755
    %v2147 = vunpack.c.l.b16 %v1756
    %v2148 = vunpack.c.l.b16 %v1757
    %v2149 = vunpack.c.l.b16 %v1758
    %v2150 = vunpack.c.l.b16 %v1759
    %v2151 = vunpack.c.l.b16 %v1760
    %v2152 = vunpack.c.l.b16 %v1761
    %v2153 = vunpack.c.l.b16 %v1762
    %v2154 = vunpack.c.l.b16 %v1763
    %v2155 = vunpack.c.l.b16 %v1764
    %v2156 = vunpack.c.l.b16 %v1765
    %v2157 = vunpack.c.l.b16 %v1766
    %v2158 = vunpack.c.l.b16 %v1767
    %v2159 = vunpack.c.l.b16 %v1768
    %v2160 = vunpack.c.l.b16 %v1769
    %v2161 = vunpack.c.l.b16 %v1770
    %v2162 = vunpack.c.l.b16 %v1771
    %v2163 = vunpack.c.l.b16 %v1772
    %v2164 = vunpack.c.l.b16 %v1773
    %v2165 = vunpack.c.l.b16 %v1774
    %v2166 = vunpack.c.l.b16 %v1775
    %v2167 = vunpack.c.l.b16 %v1776
    %v2168 = vunpack.c.l.b16 %v1777
    %v2169 = vunpack.c.l.b16 %v1778
    %v2170 = vunpack.c.l.b16 %v1779
    %v2171 = vunpack.c.l.b16 %v1780
    %v2172 = vunpack.c.l.b16 %v1781
    %v2173 = vunpack.c.l.b16 %v1782
    %v2174 = vunpack.c.l.b16 %v1783
    %v2175 = vunpack.c.l.b16 %v1784
    %v2176 = vunpack.c.l.b16 %v1785
    %v2177 = vunpack.c.l.b16 %v1786
    %v2178 = vunpack.c.l.b16 %v1787
    %v2179 = vunpack.c.l.b16 %v1788
    %v2180 = vunpack.c.l.b16 %v1789
    %v2181 = vunpack.c.l.b16 %v1790
    %v2182 = vunpack.c.l.b16 %v1791
    %v2183 = vunpack.c.l.b16 %v1792
    %v2184 = vunpack.c.l.b16 %v1793
    %v2185 = vunpack.c.l.b16 %v1794
    %v2186 = vunpack.c.l.b16 %v1795
    %v2187 = vunpack.c.l.b16 %v1796
    %v2188 = vunpack.c.l.b16 %v1797
    %v2189 = vunpack.c.l.b16 %v1798
    %v2190 = vunpack.c.l.b16 %v1799
    %v2191 = vunpack.c.l.b16 %v1800
    %v2192 = vunpack.c.l.b16 %v1801
    %v2193 = vunpack.c.l.b16 %v1802
    %v2194 = vunpack.c.l.b16 %v1803
    %v2195 = vunpack.c.l.b16 %v1804
    %v2196 = vunpack.c.l.b16 %v1805
    %v2197 = vunpack.c.l.b16 %v1806
    %v2198 = vunpack.c.l.b16 %v1807
    %v2199 = vunpack.c.l.b16 %v1808
    %v2200 = vunpack.c.l.b16 %v1809
    %v2201 = vunpack.c.l.b16 %v1810
    %v2202 = vunpack.c.l.b16 %v1811
    %v2203 = vunpack.c.l.b16 %v1812
    %v2204 = vunpack.c.l.b16 %v1813
    %v2205 = vunpack.c.l.b16 %v1814
    %v2206 = vunpack.c.l.b16 %v1815
    %v2207 = vunpack.c.l.b16 %v1816
    %v2208 = vunpack.c.l.b16 %v1817
    %v2209 = vunpack.c.l.b16 %v1818
    %v2210 = vunpack.c.l.b16 %v1819
    %v2211 = vunpack.c.l.b16 %v1820
    %v2212 = vunpack.c.l.b16 %v1821
    %v2213 = vunpack.c.l.b16 %v1822
    %v2214 = vunpack.c.l.b16 %v1823
    %v2215 = vunpack.c.l.b16 %v1824
    %v2216 = vunpack.c.l.b16 %v1825
    %v2217 = vunpack.c.l.b16 %v1826
    %v2218 = vunpack.c.l.b16 %v1827
    %v2219 = vunpack.c.l.b16 %v1828
    %v2220 = vunpack.c.l.b16 %v1829
    %v2221 = vunpack.c.l.b16 %v1830
    %v2222 = vunpack.c.l.b16 %v1831
    %v2223 = vunpack.c.l.b16 %v1832
    %v2224 = vunpack.c.l.b16 %v1833
    %v2225 = vunpack.c.l.b16 %v1834
    %v2226 = vunpack.c.l.b16 %v1835
    %v2227 = vunpack.c.l.b16 %v1836
    %v2228 = vunpack.c.l.b16 %v1837
    %v2229 = vunpack.c.l.b16 %v1838
    %v2230 = vunpack.c.l.b16 %v1839
    %v2231 = vunpack.c.l.b16 %v1840
    %v2232 = vunpack.c.l.b16 %v1841
    %v2233 = vunpack.c.l.b16 %v1842
    %v2234 = vunpack.c.l.b16 %v1843
    %v2235 = vunpack.c.l.b16 %v1844
    %v2236 = vunpack.c.l.b16 %v1845
    %v2237 = vunpack.c.l.b16 %v1846
    %v2238 = vunpack.c.l.b16 %v1847
    %v2239 = vunpack.c.l.b16 %v1848
    %v2240 = vunpack.c.l.b16 %v1849
    %v2241 = vunpack.c.l.b16 %v1850
    %v2242 = vunpack.c.l.b16 %v1851
    %v2243 = vunpack.c.l.b16 %v1852
    %v2244 = vunpack.c.l.b16 %v1853
    %v2245 = vpack.c.b16 %v2054, %v2053
    %v2246 = vpack.c.b16 %v2056, %v2055
    %v2247 = vpack.c.b16 %v2058, %v2057
    %v2248 = vpack.c.b16 %v2060, %v2059
    %v2249 = vpack.c.b16 %v2062, %v2061
    %v2250 = vpack.c.b16 %v2064, %v2063
    %v2251 = vpack.c.b16 %v2066, %v2065
    %v2252 = vpack.c.b16 %v2068, %v2067
    %v2253 = vpack.c.b16 %v2070, %v2069
    %v2254 = vpack.c.b16 %v2072, %v2071
    %v2255 = vpack.c.b16 %v2074, %v2073
    %v2256 = vpack.c.b16 %v2076, %v2075
    %v2257 = vpack.c.b16 %v2078, %v2077
    %v2258 = vpack.c.b16 %v2080, %v2079
    %v2259 = vpack.c.b16 %v2082, %v2081
    %v2260 = vpack.c.b16 %v2084, %v2083
    %v2261 = vpack.c.b16 %v2086, %v2085
    %v2262 = vpack.c.b16 %v2088, %v2087
    %v2263 = vpack.c.b16 %v2090, %v2089
    %v2264 = vpack.c.b16 %v2092, %v2091
    %v2265 = vpack.c.b16 %v2094, %v2093
    %v2266 = vpack.c.b16 %v2096, %v2095
    %v2267 = vpack.c.b16 %v2098, %v2097
    %v2268 = vpack.c.b16 %v2100, %v2099
    %v2269 = vpack.c.b16 %v2102, %v2101
    %v2270 = vpack.c.b16 %v2104, %v2103
    %v2271 = vpack.c.b16 %v2106, %v2105
    %v2272 = vpack.c.b16 %v2108, %v2107
    %v2273 = vpack.c.b16 %v2110, %v2109
    %v2274 = vpack.c.b16 %v2112, %v2111
    %v2275 = vpack.c.b16 %v2114, %v2113
    %v2276 = vpack.c.b16 %v2116, %v2115
    %v2277 = vpack.c.b16 %v2118, %v2117
    %v2278 = vpack.c.b16 %v2120, %v2119
    %v2279 = vpack.c.b16 %v2122, %v2121
    %v2280 = vpack.c.b16 %v2124, %v2123
    %v2281 = vpack.c.b16 %v2126, %v2125
    %v2282 = vpack.c.b16 %v2128, %v2127
    %v2283 = vpack.c.b16 %v2130, %v2129
    %v2284 = vpack.c.b16 %v2132, %v2131
    %v2285 = vpack.c.b16 %v2134, %v2133
    %v2286 = vpack.c.b16 %v2136, %v2135
    %v2287 = vpack.c.b16 %v2138, %v2137
    %v2288 = vpack.c.b16 %v2140, %v2139
    %v2289 = vpack.c.b16 %v2142, %v2141
    %v2290 = vpack.c.b16 %v2144, %v2143
    %v2291 = vpack.c.b16 %v2146, %v2145
    %v2292 = vpack.c.b16 %v2148, %v2147
    %v2293 = vpack.c.b16 %v2150, %v2149
    %v2294 = vpack.c.b16 %v2152, %v2151
    %v2295 = vpack.c.b16 %v2154, %v2153
    %v2296 = vpack.c.b16 %v2156, %v2155
    %v2297 = vpack.c.b16 %v2158, %v2157
    %v2298 = vpack.c.b16 %v2160, %v2159
    %v2299 = vpack.c.b16 %v2162, %v2161
    %v2300 = vpack.c.b16 %v2164, %v2163
    %v2301 = vpack.c.b16 %v2166, %v2165
    %v2302 = vpack.c.b16 %v2168, %v2167
    %v2303 = vpack.c.b16 %v2170, %v2169
    %v2304 = vpack.c.b16 %v2172, %v2171
    %v2305 = vpack.c.b16 %v2174, %v2173
    %v2306 = vpack.c.b16 %v2176, %v2175
    %v2307 = vpack.c.b16 %v2178, %v2177
    %v2308 = vpack.c.b16 %v2180, %v2179
    %v2309 = vpack.c.b16 %v2182, %v2181
    %v2310 = vpack.c.b16 %v2184, %v2183
    %v2311 = vpack.c.b16 %v2186, %v2185
    %v2312 = vpack.c.b16 %v2188, %v2187
    %v2313 = vpack.c.b16 %v2190, %v2189
    %v2314 = vpack.c.b16 %v2192, %v2191
    %v2315 = vpack.c.b16 %v2194, %v2193
    %v2316 = vpack.c.b16 %v2196, %v2195
    %v2317 = vpack.c.b16 %v2198, %v2197
    %v2318 = vpack.c.b16 %v2200, %v2199
    %v2319 = vpack.c.b16 %v2202, %v2201
    %v2320 = vpack.c.b16 %v2204, %v2203
    %v2321 = vpack.c.b16 %v2206, %v2205
    %v2322 = vpack.c.b16 %v2208, %v2207
    %v2323 = vpack.c.b16 %v2210, %v2209
    %v2324 = vpack.c.b16 %v2212, %v2211
    %v2325 = vpack.c.b16 %v2214, %v2213
    %v2326 = vpack.c.b16 %v2216, %v2215
    %v2327 = vpack.c.b16 %v2218, %v2217
    %v2328 = vpack.c.b16 %v2220, %v2219
    %v2329 = vpack.c.b16 %v2222, %v2221
    %v2330 = vpack.c.b16 %v2224, %v2223
    %v2331 = vpack.c.b16 %v2226, %v2225
    %v2332 = vpack.c.b16 %v2228, %v2227
    %v2333 = vpack.c.b16 %v2230, %v2229
    %v2334 = vpack.c.b16 %v2232, %v2231
    %v2335 = vpack.c.b16 %v2234, %v2233
    %v2336 = vpack.c.b16 %v2236, %v2235
    %v2337 = vpack.c.b16 %v2238, %v2237
    %v2338 = vpack.c.b16 %v2240, %v2239
    %v2339 = vpack.c.b16 %v2242, %v2241
    %v2340 = vpack.c.b16 %v2244, %v2243
    %2437 = vmatprep.subr.bf16.mxu0 0
    %2438 = vmatpush1.bf16.msra.mxu0 %v2245
    %2439 = vmatprep.subr.bf16.mxu0 0
    %2440 = vmatpush1.bf16.msra.mxu0 %v2246
    %2441 = vmatprep.subr.bf16.mxu0 0
    %2442 = vmatpush1.bf16.msra.mxu0 %v2247
    %2443 = vmatprep.subr.bf16.mxu0 0
    %2444 = vmatpush1.bf16.msra.mxu0 %v2248
    %2445 = vmatprep.subr.bf16.mxu0 0
    %2446 = vmatpush1.bf16.msra.mxu0 %v2249
    %2447 = vmatprep.subr.bf16.mxu0 0
    %2448 = vmatpush1.bf16.msra.mxu0 %v2250
    %2449 = vmatprep.subr.bf16.mxu0 0
    %2450 = vmatpush1.bf16.msra.mxu0 %v2251
    %2451 = vmatprep.subr.bf16.mxu0 0
    %2452 = vmatpush1.bf16.msra.mxu0 %v2252
    %2453 = vmatprep.subr.bf16.mxu0 0
    %2454 = vmatpush1.bf16.msra.mxu0 %v2253
    %2455 = vmatprep.subr.bf16.mxu0 0
    %2456 = vmatpush1.bf16.msra.mxu0 %v2254
    %2457 = vmatprep.subr.bf16.mxu0 0
    %2458 = vmatpush1.bf16.msra.mxu0 %v2255
    %2459 = vmatprep.subr.bf16.mxu0 0
    %2460 = vmatpush1.bf16.msra.mxu0 %v2256
    %2461 = vmatprep.subr.bf16.mxu0 0
    %2462 = vmatpush1.bf16.msra.mxu0 %v2257
    %2463 = vmatprep.subr.bf16.mxu0 0
    %2464 = vmatpush1.bf16.msra.mxu0 %v2258
    %2465 = vmatprep.subr.bf16.mxu0 0
    %2466 = vmatpush1.bf16.msra.mxu0 %v2259
    %2467 = vmatprep.subr.bf16.mxu0 0
    %2468 = vmatpush1.bf16.msra.mxu0 %v2260
    %2469 = vmatprep.mubr.bf16.mxu0 %v1651
    %2470 = vmatmul.mubr.bf16.gmra.mrb[0].mxu0 %v1650
    %v2471 = vpop.f32.mrb[0].mxu0
    %v2472 = vadd.f32 %v1859, %v2471
    %v2473 = vpop.f32.mrb[0].mxu0
    %v2474 = vpop.f32.mrb[0].mxu0
    %v2475 = vadd.f32 %v1859, %v2474
    %v2476 = vpop.f32.mrb[0].mxu0
    %2477 = vdwg.mxu0
    %2478 = vmatprep.subr.bf16.mxu0 0
    %2479 = vmatpush1.bf16.msra.mxu0 %v2261
    %2480 = vmatprep.subr.bf16.mxu0 0
    %2481 = vmatpush1.bf16.msra.mxu0 %v2262
    %2482 = vmatprep.subr.bf16.mxu0 0
    %2483 = vmatpush1.bf16.msra.mxu0 %v2263
    %2484 = vmatprep.subr.bf16.mxu0 0
    %2485 = vmatpush1.bf16.msra.mxu0 %v2264
    %2486 = vmatprep.subr.bf16.mxu0 0
    %2487 = vmatpush1.bf16.msra.mxu0 %v2265
    %2488 = vmatprep.subr.bf16.mxu0 0
    %2489 = vmatpush1.bf16.msra.mxu0 %v2266
    %2490 = vmatprep.subr.bf16.mxu0 0
    %2491 = vmatpush1.bf16.msra.mxu0 %v2267
    %2492 = vmatprep.subr.bf16.mxu0 0
    %2493 = vmatpush1.bf16.msra.mxu0 %v2268
    %2494 = vmatprep.subr.bf16.mxu0 0
    %2495 = vmatpush1.bf16.msra.mxu0 %v2269
    %2496 = vmatprep.subr.bf16.mxu0 0
    %2497 = vmatpush1.bf16.msra.mxu0 %v2270
    %2498 = vmatprep.subr.bf16.mxu0 0
    %2499 = vmatpush1.bf16.msra.mxu0 %v2271
    %2500 = vmatprep.subr.bf16.mxu0 0
    %2501 = vmatpush1.bf16.msra.mxu0 %v2272
    %2502 = vmatprep.subr.bf16.mxu0 0
    %2503 = vmatpush1.bf16.msra.mxu0 %v2273
    %2504 = vmatprep.subr.bf16.mxu0 0
    %2505 = vmatpush1.bf16.msra.mxu0 %v2274
    %2506 = vmatprep.subr.bf16.mxu0 0
    %2507 = vmatpush1.bf16.msra.mxu0 %v2275
    %2508 = vmatprep.subr.bf16.mxu0 0
    %2509 = vmatpush1.bf16.msra.mxu0 %v2276
    %2510 = vmatprep.mubr.bf16.mxu0 %v1653
    %2511 = vmatmul.mubr.bf16.gmra.mrb[0].mxu0 %v1652
    %v2512 = vpop.f32.mrb[0].mxu0
    %v2513 = vadd.f32 %v2472, %v2512
    %v2514 = vpop.f32.mrb[0].mxu0
    %v2515 = vpop.f32.mrb[0].mxu0
    %v2516 = vadd.f32 %v2475, %v2515
    %v2517 = vpop.f32.mrb[0].mxu0
    %2518 = vdwg.mxu0
    %2519 = vmatprep.subr.bf16.mxu0 0
    %2520 = vmatpush1.bf16.msra.mxu0 %v2277
    %2521 = vmatprep.subr.bf16.mxu0 0
    %2522 = vmatpush1.bf16.msra.mxu0 %v2278
    %2523 = vmatprep.subr.bf16.mxu0 0
    %2524 = vmatpush1.bf16.msra.mxu0 %v2279
    %2525 = vmatprep.subr.bf16.mxu0 0
    %2526 = vmatpush1.bf16.msra.mxu0 %v2280
    %2527 = vmatprep.subr.bf16.mxu0 0
    %2528 = vmatpush1.bf16.msra.mxu0 %v2281
    %2529 = vmatprep.subr.bf16.mxu0 0
    %2530 = vmatpush1.bf16.msra.mxu0 %v2282
    %2531 = vmatprep.subr.bf16.mxu0 0
    %2532 = vmatpush1.bf16.msra.mxu0 %v2283
    %2533 = vmatprep.subr.bf16.mxu0 0
    %2534 = vmatpush1.bf16.msra.mxu0 %v2284
    %2535 = vmatprep.subr.bf16.mxu0 0
    %2536 = vmatpush1.bf16.msra.mxu0 %v2285
    %2537 = vmatprep.subr.bf16.mxu0 0
    %2538 = vmatpush1.bf16.msra.mxu0 %v2286
    %2539 = vmatprep.subr.bf16.mxu0 0
    %2540 = vmatpush1.bf16.msra.mxu0 %v2287
    %2541 = vmatprep.subr.bf16.mxu0 0
    %2542 = vmatpush1.bf16.msra.mxu0 %v2288
    %2543 = vmatprep.subr.bf16.mxu0 0
    %2544 = vmatpush1.bf16.msra.mxu0 %v2289
    %2545 = vmatprep.subr.bf16.mxu0 0
    %2546 = vmatpush1.bf16.msra.mxu0 %v2290
    %2547 = vmatprep.subr.bf16.mxu0 0
    %2548 = vmatpush1.bf16.msra.mxu0 %v2291
    %2549 = vmatprep.subr.bf16.mxu0 0
    %2550 = vmatpush1.bf16.msra.mxu0 %v2292
    %2551 = vmatprep.mubr.bf16.mxu0 %v1655
    %2552 = vmatmul.mubr.bf16.gmra.mrb[0].mxu0 %v1654
    %v2553 = vpop.f32.mrb[0].mxu0
    %v2554 = vadd.f32 %v2513, %v2553
    %v2555 = vpop.f32.mrb[0].mxu0
    %v2556 = vpop.f32.mrb[0].mxu0
    %v2557 = vadd.f32 %v2516, %v2556
    %v2558 = vpop.f32.mrb[0].mxu0
    %2559 = vdwg.mxu0
    %2560 = vmatprep.subr.bf16.mxu0 0
    %2561 = vmatpush1.bf16.msra.mxu0 %v2293
    %2562 = vmatprep.subr.bf16.mxu0 0
    %2563 = vmatpush1.bf16.msra.mxu0 %v2294
    %2564 = vmatprep.subr.bf16.mxu0 0
    %2565 = vmatpush1.bf16.msra.mxu0 %v2295
    %2566 = vmatprep.subr.bf16.mxu0 0
    %2567 = vmatpush1.bf16.msra.mxu0 %v2296
    %2568 = vmatprep.subr.bf16.mxu0 0
    %2569 = vmatpush1.bf16.msra.mxu0 %v2297
    %2570 = vmatprep.subr.bf16.mxu0 0
    %2571 = vmatpush1.bf16.msra.mxu0 %v2298
    %2572 = vmatprep.subr.bf16.mxu0 0
    %2573 = vmatpush1.bf16.msra.mxu0 %v2299
    %2574 = vmatprep.subr.bf16.mxu0 0
    %2575 = vmatpush1.bf16.msra.mxu0 %v2300
    %2576 = vmatprep.subr.bf16.mxu0 0
    %2577 = vmatpush1.bf16.msra.mxu0 %v2301
    %2578 = vmatprep.subr.bf16.mxu0 0
    %2579 = vmatpush1.bf16.msra.mxu0 %v2302
    %2580 = vmatprep.subr.bf16.mxu0 0
    %2581 = vmatpush1.bf16.msra.mxu0 %v2303
    %2582 = vmatprep.subr.bf16.mxu0 0
    %2583 = vmatpush1.bf16.msra.mxu0 %v2304
    %2584 = vmatprep.subr.bf16.mxu0 0
    %2585 = vmatpush1.bf16.msra.mxu0 %v2305
    %2586 = vmatprep.subr.bf16.mxu0 0
    %2587 = vmatpush1.bf16.msra.mxu0 %v2306
    %2588 = vmatprep.subr.bf16.mxu0 0
    %2589 = vmatpush1.bf16.msra.mxu0 %v2307
    %2590 = vmatprep.subr.bf16.mxu0 0
    %2591 = vmatpush1.bf16.msra.mxu0 %v2308
    %2592 = vmatprep.mubr.bf16.mxu0 %v1657
    %2593 = vmatmul.mubr.bf16.gmra.mrb[0].mxu0 %v1656
    %v2594 = vpop.f32.mrb[0].mxu0
    %v2595 = vadd.f32 %v2554, %v2594
    %v2596 = vpop.f32.mrb[0].mxu0
    %v2597 = vpop.f32.mrb[0].mxu0
    %v2598 = vadd.f32 %v2557, %v2597
    %v2599 = vpop.f32.mrb[0].mxu0
    %2600 = vdwg.mxu0
    %2601 = vmatprep.subr.bf16.mxu0 0
    %2602 = vmatpush1.bf16.msra.mxu0 %v2309
    %2603 = vmatprep.subr.bf16.mxu0 0
    %2604 = vmatpush1.bf16.msra.mxu0 %v2310
    %2605 = vmatprep.subr.bf16.mxu0 0
    %2606 = vmatpush1.bf16.msra.mxu0 %v2311
    %2607 = vmatprep.subr.bf16.mxu0 0
    %2608 = vmatpush1.bf16.msra.mxu0 %v2312
    %2609 = vmatprep.subr.bf16.mxu0 0
    %2610 = vmatpush1.bf16.msra.mxu0 %v2313
    %2611 = vmatprep.subr.bf16.mxu0 0
    %2612 = vmatpush1.bf16.msra.mxu0 %v2314
    %2613 = vmatprep.subr.bf16.mxu0 0
    %2614 = vmatpush1.bf16.msra.mxu0 %v2315
    %2615 = vmatprep.subr.bf16.mxu0 0
    %2616 = vmatpush1.bf16.msra.mxu0 %v2316
    %2617 = vmatprep.subr.bf16.mxu0 0
    %2618 = vmatpush1.bf16.msra.mxu0 %v2317
    %2619 = vmatprep.subr.bf16.mxu0 0
    %2620 = vmatpush1.bf16.msra.mxu0 %v2318
    %2621 = vmatprep.subr.bf16.mxu0 0
    %2622 = vmatpush1.bf16.msra.mxu0 %v2319
    %2623 = vmatprep.subr.bf16.mxu0 0
    %2624 = vmatpush1.bf16.msra.mxu0 %v2320
    %2625 = vmatprep.subr.bf16.mxu0 0
    %2626 = vmatpush1.bf16.msra.mxu0 %v2321
    %2627 = vmatprep.subr.bf16.mxu0 0
    %2628 = vmatpush1.bf16.msra.mxu0 %v2322
    %2629 = vmatprep.subr.bf16.mxu0 0
    %2630 = vmatpush1.bf16.msra.mxu0 %v2323
    %2631 = vmatprep.subr.bf16.mxu0 0
    %2632 = vmatpush1.bf16.msra.mxu0 %v2324
    %2633 = vmatprep.mubr.bf16.mxu0 %v1659
    %2634 = vmatmul.mubr.bf16.gmra.mrb[0].mxu0 %v1658
    %v2635 = vpop.f32.mrb[0].mxu0
    %v2636 = vadd.f32 %v2595, %v2635
    %v2637 = vpop.f32.mrb[0].mxu0
    %v2638 = vpop.f32.mrb[0].mxu0
    %v2639 = vadd.f32 %v2598, %v2638
    %v2640 = vpop.f32.mrb[0].mxu0
    %2641 = vdwg.mxu0
    %2642 = vmatprep.subr.bf16.mxu0 0
    %2643 = vmatpush1.bf16.msra.mxu0 %v2325
    %2644 = vmatprep.subr.bf16.mxu0 0
    %2645 = vmatpush1.bf16.msra.mxu0 %v2326
    %2646 = vmatprep.subr.bf16.mxu0 0
    %2647 = vmatpush1.bf16.msra.mxu0 %v2327
    %2648 = vmatprep.subr.bf16.mxu0 0
    %2649 = vmatpush1.bf16.msra.mxu0 %v2328
    %2650 = vmatprep.subr.bf16.mxu0 0
    %2651 = vmatpush1.bf16.msra.mxu0 %v2329
    %2652 = vmatprep.subr.bf16.mxu0 0
    %2653 = vmatpush1.bf16.msra.mxu0 %v2330
    %2654 = vmatprep.subr.bf16.mxu0 0
    %2655 = vmatpush1.bf16.msra.mxu0 %v2331
    %2656 = vmatprep.subr.bf16.mxu0 0
    %2657 = vmatpush1.bf16.msra.mxu0 %v2332
    %2658 = vmatprep.subr.bf16.mxu0 0
    %2659 = vmatpush1.bf16.msra.mxu0 %v2333
    %2660 = vmatprep.subr.bf16.mxu0 0
    %2661 = vmatpush1.bf16.msra.mxu0 %v2334
    %2662 = vmatprep.subr.bf16.mxu0 0
    %2663 = vmatpush1.bf16.msra.mxu0 %v2335
    %2664 = vmatprep.subr.bf16.mxu0 0
    %2665 = vmatpush1.bf16.msra.mxu0 %v2336
    %2666 = vmatprep.subr.bf16.mxu0 0
    %2667 = vmatpush1.bf16.msra.mxu0 %v2337
    %2668 = vmatprep.subr.bf16.mxu0 0
    %2669 = vmatpush1.bf16.msra.mxu0 %v2338
    %2670 = vmatprep.subr.bf16.mxu0 0
    %2671 = vmatpush1.bf16.msra.mxu0 %v2339
    %2672 = vmatprep.subr.bf16.mxu0 0
    %2673 = vmatpush1.bf16.msra.mxu0 %v2340
    %2674 = vmatprep.mubr.bf16.mxu0 %v1661
    %2675 = vmatmul.mubr.bf16.gmra.mrb[0].mxu0 %v1660
    %v2676 = vpop.f32.mrb[0].mxu0
    %v2677 = vadd.f32 %v2636, %v2676
    %v2678 = vpop.f32.mrb[0].mxu0
    %v2679 = vpop.f32.mrb[0].mxu0
    %v2680 = vadd.f32 %v2639, %v2679
    %v2681 = vpop.f32.mrb[0].mxu0
    %2682 = vdwg.mxu0
    %v2683 = vmax.f32 %v2677, 0.0
    %v2684 = vmax.f32 %v2680, 0.0
    %v2685 = vpack.c.bf16 %v2684, %v2683
    %v2686 = vld [vmem:[#allocation10] sm:$0xf]
    %v2687 = vld [vmem:[#allocation10 + $0x4] sm:$0xf]
    %v2688 = vld [vmem:[#allocation10 + $0x8] sm:$0xf]
    %v2689 = vld [vmem:[#allocation10 + $0xc] sm:$0xf]
    %v2690 = vld [vmem:[#allocation10 + $0x10] sm:$0xf]
    %v2691 = vld [vmem:[#allocation10 + $0x14] sm:$0xf]
    %v2692 = vld [vmem:[#allocation10 + $0x18] sm:$0xf]
    %v2693 = vld [vmem:[#allocation10 + $0x1c] sm:$0xf]
    %v2694 = vld [vmem:[#allocation10 + $0x20] sm:$0xf]
    %v2695 = vld [vmem:[#allocation10 + $0x24] sm:$0xf]
    %v2696 = vld [vmem:[#allocation10 + $0x28] sm:$0xf]
    %v2697 = vld [vmem:[#allocation10 + $0x2c] sm:$0xf]
    %v2698 = vld [vmem:[#allocation10 + $0x30] sm:$0xf]
    %v2699 = vld [vmem:[#allocation10 + $0x34] sm:$0xf]
    %v2700 = vld [vmem:[#allocation10 + $0x38] sm:$0xf]
    %v2701 = vld [vmem:[#allocation10 + $0x3c] sm:$0xf]
    %v2702 = vld [vmem:[%s6] sm:$0x1]
    %v2704 = vlaneseq
    %v2705 = vshrl.u32 %v2704, 7
    %v2706 = vsub.s32 0, %v2705
    %v2707 = vrot.slane %v2702, %v2706
    %v2725 = vunpack.c.l.b16 %v2686
    %v2726 = vunpack.c.l.b16 %v2687
    %v2727 = vunpack.c.l.b16 %v2688
    %v2728 = vunpack.c.l.b16 %v2689
    %v2729 = vunpack.c.l.b16 %v2690
    %v2730 = vunpack.c.l.b16 %v2691
    %v2731 = vunpack.c.l.b16 %v2692
    %v2732 = vunpack.c.l.b16 %v2693
    %v2733 = vunpack.c.l.b16 %v2694
    %v2734 = vunpack.c.l.b16 %v2695
    %v2735 = vunpack.c.l.b16 %v2696
    %v2736 = vunpack.c.l.b16 %v2697
    %v2737 = vunpack.c.l.b16 %v2698
    %v2738 = vunpack.c.l.b16 %v2699
    %v2739 = vunpack.c.l.b16 %v2700
    %v2740 = vunpack.c.l.b16 %v2701
    %v2741 = vpack.c.b16 %v2726, %v2725
    %v2742 = vpack.c.b16 %v2728, %v2727
    %v2743 = vpack.c.b16 %v2730, %v2729
    %v2744 = vpack.c.b16 %v2732, %v2731
    %v2745 = vpack.c.b16 %v2734, %v2733
    %v2746 = vpack.c.b16 %v2736, %v2735
    %v2747 = vpack.c.b16 %v2738, %v2737
    %v2748 = vpack.c.b16 %v2740, %v2739
    %2757 = vmatprep.subr.bf16.mxu0 0
    %2758 = vmatpush1.bf16.msra.mxu0 %v2741
    %2759 = vmatprep.subr.bf16.mxu0 0
    %2760 = vmatpush1.bf16.msra.mxu0 %v2742
    %2761 = vmatprep.subr.bf16.mxu0 0
    %2762 = vmatpush1.bf16.msra.mxu0 %v2743
    %2763 = vmatprep.subr.bf16.mxu0 0
    %2764 = vmatpush1.bf16.msra.mxu0 %v2744
    %2765 = vmatprep.subr.bf16.mxu0 0
    %2766 = vmatpush1.bf16.msra.mxu0 %v2745
    %2767 = vmatprep.subr.bf16.mxu0 0
    %2768 = vmatpush1.bf16.msra.mxu0 %v2746
    %2769 = vmatprep.subr.bf16.mxu0 0
    %2770 = vmatpush1.bf16.msra.mxu0 %v2747
    %2771 = vmatprep.subr.bf16.mxu0 0
    %2772 = vmatpush1.bf16.msra.mxu0 %v2748
    %2773 = vmatprep.subr.bf16.mxu0 0
    %2774 = vmatpush1.bf16.msra.mxu0 0
    %2775 = vmatprep.subr.bf16.mxu0 0
    %2776 = vmatpush1.bf16.msra.mxu0 0
    %2777 = vmatprep.subr.bf16.mxu0 0
    %2778 = vmatpush1.bf16.msra.mxu0 0
    %2779 = vmatprep.subr.bf16.mxu0 0
    %2780 = vmatpush1.bf16.msra.mxu0 0
    %2781 = vmatprep.subr.bf16.mxu0 0
    %2782 = vmatpush1.bf16.msra.mxu0 0
    %2783 = vmatprep.subr.bf16.mxu0 0
    %2784 = vmatpush1.bf16.msra.mxu0 0
    %2785 = vmatprep.subr.bf16.mxu0 0
    %2786 = vmatpush1.bf16.msra.mxu0 0
    %2787 = vmatprep.subr.bf16.mxu0 0
    %2788 = vmatpush1.bf16.msra.mxu0 0
    %2789 = vmatprep.mubr.bf16.mxu0 0
    %2790 = vmatmul.mubr.bf16.gmra.mrb[0].mxu0 %v2685
    %v2791 = vpop.f32.mrb[0].mxu0
    %v2792 = vadd.f32 %v2707, %v2791
    %v2793 = vpop.f32.mrb[0].mxu0
    %v2794 = vpop.f32.mrb[0].mxu0
    %v2795 = vadd.f32 %v2707, %v2794
    %v2796 = vpop.f32.mrb[0].mxu0
    %2797 = vdwg.mxu0
    %v2798 = vmax.f32 %v2792, 0.0
    %v2799 = vmax.f32 %v2795, 0.0
    %v2800 = vpack.c.bf16 %v2799, %v2798
    %v2802 = vcombine.high %v2800, %v2800
    %v2804 = vunpack.c.l.s4 1966171168
    %v2805 = vunpack.c.0.s8 %v2804
    %v2806 = vlaneseq
    %v2807 = vshrl.u32 %v2806, 7
    %v2808 = vsub.s32 %v2805, %v2807
    %v2809 = vrot.slane %v2800, %v2808
    %v2811 = vunpack.c.l.s4 1966171168
    %v2812 = vunpack.c.0.s8 %v2811
    %v2813 = vlaneseq
    %v2814 = vshrl.u32 %v2813, 7
    %v2815 = vsub.s32 %v2812, %v2814
    %v2816 = vrot.slane %v2802, %v2815
    %v2817 = vcombine.high %v2809, %v2809
    %v2818 = vcombine.high %v2816, %v2816
    %v2820 = vunpack.c.l.s4 1966171168
    %v2821 = vunpack.c.0.s8 %v2820
    %v2822 = vlaneseq
    %v2823 = vshrl.u32 %v2822, 7
    %v2824 = vsub.s32 %v2821, %v2823
    %v2825 = vrot.slane %v2809, %v2824
    %v2827 = vunpack.c.l.s4 1966171168
    %v2828 = vunpack.c.0.s8 %v2827
    %v2829 = vlaneseq
    %v2830 = vshrl.u32 %v2829, 7
    %v2831 = vsub.s32 %v2828, %v2830
    %v2832 = vrot.slane %v2816, %v2831
    %v2834 = vunpack.c.l.s4 1966171168
    %v2835 = vunpack.c.0.s8 %v2834
    %v2836 = vlaneseq
    %v2837 = vshrl.u32 %v2836, 7
    %v2838 = vsub.s32 %v2835, %v2837
    %v2839 = vrot.slane %v2817, %v2838
    %v2841 = vunpack.c.l.s4 1966171168
    %v2842 = vunpack.c.0.s8 %v2841
    %v2843 = vlaneseq
    %v2844 = vshrl.u32 %v2843, 7
    %v2845 = vsub.s32 %v2842, %v2844
    %v2846 = vrot.slane %v2818, %v2845
    %v2847 = vcombine.high %v2825, %v2825
    %v2848 = vcombine.high %v2832, %v2832
    %v2849 = vcombine.high %v2839, %v2839
    %v2850 = vcombine.high %v2846, %v2846
    %2859 = vst [vmem:[#allocation11] sm:$0x1] %v2825
    %2860 = vst [vmem:[#allocation11 + $0x1] sm:$0x1] %v2839
    %2861 = vst [vmem:[#allocation11 + $0x2] sm:$0x1] %v2847
    %2862 = vst [vmem:[#allocation11 + $0x3] sm:$0x1] %v2849
    %2863 = vst [vmem:[#allocation11 + $0x4] sm:$0x1] %v2832
    %2864 = vst [vmem:[#allocation11 + $0x5] sm:$0x1] %v2846
    %2865 = vst [vmem:[#allocation11 + $0x6] sm:$0x1] %v2848
    %2866 = vst [vmem:[#allocation11 + $0x7] sm:$0x1] %v2850
    // Predicated region
    $region50: #{tpu_custom_call.1} parent=1 // pred_check
      _
    $region51: #{tpu_custom_call.1} parent=1 // pred_check_branch
      %2868 = sbr.rel (0) target = $region53
    $region52: #{tpu_custom_call.1} parent=1 // pred_region
      %s2870 = ssub.s32 128, 16
      %2871 = vsyncadd [#allocation4], %s2870
      %s2872 = sshll.u32 [#allocation11], 4
      %s2873 = int_to_ptr.vmem [resolvable:$true] %s2872
      %2878 = dma.vmem_to_hbm [thread:$0]  %s2873, 16, %s7, [#allocation4], 16, 16, 1
    $region53: #{tpu_custom_call.1} parent=1 // pred_fallthru
      _
    // Predicated region
    $region54: #{tpu_custom_call.1} parent=1 // pred_check
      _
    $region55: #{tpu_custom_call.1} parent=1 // pred_check_branch
      %2880 = sbr.rel (0) target = $region57
    $region56: #{tpu_custom_call.1} parent=1 // pred_region
      %2881 = dma.done [#allocation4], 128
    $region57: #{tpu_custom_call.1} parent=1 // pred_fallthru
      _
    %2882 = vsyncpa [#allocation3], 1
    %2883 = vsyncpa [#allocation6], 1
    %2884 = vsyncpa [#allocation9], 1
    %2885 = vsyncpa [#allocation4], 1

// kernel: tpu_custom_call.1
$region0: #{tpu_custom_call.1}
  #allocation0 [shape = 'u32[]', space=smem, size = 0x4, offset = 0x4, fixed_abs, tag = 'smem constant byte address 0x4 - core index']
  #allocation1 [shape = 'u32[144,128]{1,0:T(1,128)}', space=vmem, size = 0x12000, scoped, tag = 'internal scratch']
  %s0 = inlined_call_operand.hbm [shape: f32[2,256], index: 0, kind: input, shape index: {}]
  %s1 = inlined_call_operand.hbm [shape: bf16[256,1536], index: 1, kind: input, shape index: {}]
  %s2 = inlined_call_operand.hbm [shape: f32[1,1536], index: 2, kind: input, shape index: {}]
  %s3 = inlined_call_operand.hbm [shape: bf16[1536,128], index: 3, kind: input, shape index: {}]
  %s4 = inlined_call_operand.vmem [shape: f32[1,128], index: 4, kind: input, shape index: {}]
  %s5 = inlined_call_operand.hbm [shape: bf16[128,128], index: 5, kind: input, shape index: {}]
  %s6 = inlined_call_operand.vmem [shape: f32[1,128], index: 6, kind: input, shape index: {}]
  %s7 = inlined_call_operand.hbm [shape: bf16[2,128], index: 7, kind: output, shape index: {}]
  %s8 = sld [smem:[#allocation0]]
  $region58: #{tpu_custom_call.1} parent=0
    _
  %s10 = ssub.s32 1, %s8
  %s11 = scalar_select 0, %s10, %s8
  $region1: #{tpu_custom_call.1} parent=0
    #allocation2 [shape = 'u8[16384]{0}', space=vmem, size = 0x4000, scoped, tag = 'input window, operand 0, single buffered']
    #allocation3 [shape = 's32[1]{0}', space=sflag, size = 0x4, scoped, tag = 'scoped memory for tpu_custom_call.1']
    #allocation4 [shape = 's32[1]{0}', space=sflag, size = 0x4, scoped, tag = 'scoped memory for tpu_custom_call.1']
    #allocation5 [shape = 'u8[786432]{0}', space=vmem, size = 0xc0000, scoped, tag = 'input window, operand 1, single buffered']
    #allocation6 [shape = 's32[1]{0}', space=sflag, size = 0x4, scoped, tag = 'scoped memory for tpu_custom_call.1']
    #allocation7 [shape = 'u8[6144]{0}', space=vmem, size = 0x1800, scoped, tag = 'input window, operand 2, single buffered']
    #allocation8 [shape = 'u8[393216]{0}', space=vmem, size = 0x60000, scoped, tag = 'input window, operand 3, single buffered']
    #allocation9 [shape = 's32[1]{0}', space=sflag, size = 0x4, scoped, tag = 'scoped memory for tpu_custom_call.1']
    #allocation10 [shape = 'u8[32768]{0}', space=vmem, size = 0x8000, scoped, tag = 'input window, operand 5, single buffered']
    #allocation11 [shape = 'u8[4096]{0}', space=vmem, size = 0x1000, scoped, tag = 'output window, operand 0, single buffered']
    %12 = vsyncpa [#allocation3], 0
    %13 = vsyncpa [#allocation6], 0
    %14 = vsyncpa [#allocation9], 0
    %15 = vsyncpa [#allocation4], 0
    // Predicated region
    $region2: #{tpu_custom_call.1} parent=1 // pred_check
      _
    $region3: #{tpu_custom_call.1} parent=1 // pred_check_branch
      %17 = sbr.rel (0) target = $region5
    $region4: #{tpu_custom_call.1} parent=1 // pred_region
      %s19 = ssub.s32 512, 64
      %20 = vsyncadd [#allocation3], %s19
      %s21 = sshll.u32 [#allocation2], 4
      %s22 = int_to_ptr.vmem [resolvable:$true] %s21
      %27 = dma.hbm_to_vmem [thread:$0]  %s0, 64, %s22, [#allocation3], 64, 64, 4
    $region5: #{tpu_custom_call.1} parent=1 // pred_fallthru
      _
    // Predicated region
    $region6: #{tpu_custom_call.1} parent=1 // pred_check
      _
    $region7: #{tpu_custom_call.1} parent=1 // pred_check_branch
      %29 = sbr.rel (0) target = $region9
    $region8: #{tpu_custom_call.1} parent=1 // pred_region
      %s31 = ssub.s32 24576, 24576
      %32 = vsyncadd [#allocation6], %s31
      %s33 = sshll.u32 [#allocation5], 4
      %s34 = int_to_ptr.vmem [resolvable:$true] %s33
      %39 = dma.hbm_to_vmem [thread:$0]  %s1, 24576, %s34, [#allocation6], 768, 768, 48
    $region9: #{tpu_custom_call.1} parent=1 // pred_fallthru
      _
    // Predicated region
    $region10: #{tpu_custom_call.1} parent=1 // pred_check
      _
    $region11: #{tpu_custom_call.1} parent=1 // pred_check_branch
      %41 = sbr.rel (0) target = $region13
    $region12: #{tpu_custom_call.1} parent=1 // pred_region
      %s43 = ssub.s32 192, 192
      %44 = vsyncadd [#allocation6], %s43
      %s46 = sshll.u32 [#allocation7], 4
      %s47 = int_to_ptr.vmem [resolvable:$true] %s46
      %49 = dma.hbm_to_vmem [thread:$0]  %s2, 192, %s47, [#allocation6]
    $region13: #{tpu_custom_call.1} parent=1 // pred_fallthru
      _
    // Predicated region
    $region14: #{tpu_custom_call.1} parent=1 // pred_check
      _
    $region15: #{tpu_custom_call.1} parent=1 // pred_check_branch
      %51 = sbr.rel (0) target = $region17
    $region16: #{tpu_custom_call.1} parent=1 // pred_region
      %s53 = ssub.s32 12288, 12288
      %54 = vsyncadd [#allocation9], %s53
      %s55 = sshll.u32 [#allocation8], 4
      %s56 = int_to_ptr.vmem [resolvable:$true] %s55
      %61 = dma.hbm_to_vmem [thread:$0]  %s3, 12288, %s56, [#allocation9], 64, 64, 4
    $region17: #{tpu_custom_call.1} parent=1 // pred_fallthru
      _
    // Predicated region
    $region18: #{tpu_custom_call.1} parent=1 // pred_check
      _
    $region19: #{tpu_custom_call.1} parent=1 // pred_check_branch
      %63 = sbr.rel (0) target = $region21
    $region20: #{tpu_custom_call.1} parent=1 // pred_region
      _
    $region21: #{tpu_custom_call.1} parent=1 // pred_fallthru
      _
    // Predicated region
    $region22: #{tpu_custom_call.1} parent=1 // pred_check
      _
    $region23: #{tpu_custom_call.1} parent=1 // pred_check_branch
      %65 = sbr.rel (0) target = $region25
    $region24: #{tpu_custom_call.1} parent=1 // pred_region
      %s67 = ssub.s32 1024, 1024
      %68 = vsyncadd [#allocation9], %s67
      %s69 = sshll.u32 [#allocation10], 4
      %s70 = int_to_ptr.vmem [resolvable:$true] %s69
      %75 = dma.hbm_to_vmem [thread:$0]  %s5, 1024, %s70, [#allocation9], 64, 64, 4
    $region25: #{tpu_custom_call.1} parent=1 // pred_fallthru
      _
    // Predicated region
    $region26: #{tpu_custom_call.1} parent=1 // pred_check
      _
    $region27: #{tpu_custom_call.1} parent=1 // pred_check_branch
      %77 = sbr.rel (0) target = $region29
    $region28: #{tpu_custom_call.1} parent=1 // pred_region
      _
    $region29: #{tpu_custom_call.1} parent=1 // pred_fallthru
      _
    // Predicated region
    $region30: #{tpu_custom_call.1} parent=1 // pred_check
      _
    $region31: #{tpu_custom_call.1} parent=1 // pred_check_branch
      %79 = sbr.rel (0) target = $region33
    $region32: #{tpu_custom_call.1} parent=1 // pred_region
      %80 = dma.done [#allocation3], 512
    $region33: #{tpu_custom_call.1} parent=1 // pred_fallthru
      _
    // Predicated region
    $region34: #{tpu_custom_call.1} parent=1 // pred_check
      _
    $region35: #{tpu_custom_call.1} parent=1 // pred_check_branch
      %82 = sbr.rel (0) target = $region37
    $region36: #{tpu_custom_call.1} parent=1 // pred_region
      %83 = dma.done [#allocation6], 24576
    $region37: #{tpu_custom_call.1} parent=1 // pred_fallthru
      _
    // Predicated region
    $region38: #{tpu_custom_call.1} parent=1 // pred_check
      _
    $region39: #{tpu_custom_call.1} parent=1 // pred_check_branch
      %85 = sbr.rel (0) target = $region41
    $region40: #{tpu_custom_call.1} parent=1 // pred_region
      %86 = dma.done [#allocation6], 192
    $region41: #{tpu_custom_call.1} parent=1 // pred_fallthru
      _
    // Predicated region
    $region42: #{tpu_custom_call.1} parent=1 // pred_check
      _
    $region43: #{tpu_custom_call.1} parent=1 // pred_check_branch
      %88 = sbr.rel (0) target = $region45
    $region44: #{tpu_custom_call.1} parent=1 // pred_region
      %89 = dma.done [#allocation9], 12288
    $region45: #{tpu_custom_call.1} parent=1 // pred_fallthru
      _
    // Predicated region
    $region46: #{tpu_custom_call.1} parent=1 // pred_check
      _
    $region47: #{tpu_custom_call.1} parent=1 // pred_check_branch
      %91 = sbr.rel (0) target = $region49
    $region48: #{tpu_custom_call.1} parent=1 // pred_region
      %92 = dma.done [#allocation9], 1024
    $region49: #{tpu_custom_call.1} parent=1 // pred_fallthru
      _
    %v94 = vld [vmem:[#allocation2] sm:$0xf]
    %v95 = vld [vmem:[#allocation2 + $0x4] sm:$0xf]
    %v96 = vld [vmem:[#allocation2 + $0x8] sm:$0xf]
    %v97 = vld [vmem:[#allocation2 + $0xc] sm:$0xf]
    %v98 = vld [vmem:[#allocation2 + $0x10] sm:$0xf]
    %v99 = vld [vmem:[#allocation2 + $0x14] sm:$0xf]
    %v100 = vld [vmem:[#allocation2 + $0x18] sm:$0xf]
    %v101 = vld [vmem:[#allocation2 + $0x1c] sm:$0xf]
    %v110 = vcombine.low %v94, %v95
    %v111 = vcombine.low %v96, %v97
    %v113 = vunpack.c.l.s4 1983009808
    %v114 = vunpack.c.0.s8 %v113
    %v115 = vlaneseq
    %v116 = vshrl.u32 %v115, 7
    %v117 = vsub.s32 %v114, %v116
    %v118 = vrot.slane %v110, %v117
    %v120 = vunpack.c.l.s4 1983009808
    %v121 = vunpack.c.0.s8 %v120
    %v122 = vlaneseq
    %v123 = vshrl.u32 %v122, 7
    %v124 = vsub.s32 %v121, %v123
    %v125 = vrot.slane %v111, %v124
    %v126 = vcombine.low %v118, %v125
    %v127 = vcombine.high %v118, %v125
    %v128 = vcombine.low %v98, %v99
    %v129 = vcombine.low %v100, %v101
    %v131 = vunpack.c.l.s4 1983009808
    %v132 = vunpack.c.0.s8 %v131
    %v133 = vlaneseq
    %v134 = vshrl.u32 %v133, 7
    %v135 = vsub.s32 %v132, %v134
    %v136 = vrot.slane %v128, %v135
    %v138 = vunpack.c.l.s4 1983009808
    %v139 = vunpack.c.0.s8 %v138
    %v140 = vlaneseq
    %v141 = vshrl.u32 %v140, 7
    %v142 = vsub.s32 %v139, %v141
    %v143 = vrot.slane %v129, %v142
    %v144 = vcombine.low %v136, %v143
    %v145 = vcombine.high %v136, %v143
    %v150 = vpack.c.bf16 %v144, %v126
    %v151 = vpack.c.bf16 %v145, %v127
    %v152 = vld [vmem:[#allocation5] sm:$0xff]
    %v153 = vld [vmem:[#allocation5 + $0x8] sm:$0xff]
    %v154 = vld [vmem:[#allocation5 + $0x10] sm:$0xff]
    %v155 = vld [vmem:[#allocation5 + $0x18] sm:$0xff]
    %v156 = vld [vmem:[#allocation5 + $0x20] sm:$0xff]
    %v157 = vld [vmem:[#allocation5 + $0x28] sm:$0xff]
    %v158 = vld [vmem:[#allocation5 + $0x30] sm:$0xff]
    %v159 = vld [vmem:[#allocation5 + $0x38] sm:$0xff]
    %v160 = vld [vmem:[#allocation5 + $0x40] sm:$0xff]
    %v161 = vld [vmem:[#allocation5 + $0x48] sm:$0xff]
    %v162 = vld [vmem:[#allocation5 + $0x50] sm:$0xff]
    %v163 = vld [vmem:[#allocation5 + $0x58] sm:$0xff]
    %v164 = vld [vmem:[#allocation5 + $0x60] sm:$0xff]
    %v165 = vld [vmem:[#allocation5 + $0x68] sm:$0xff]
    %v166 = vld [vmem:[#allocation5 + $0x70] sm:$0xff]
    %v167 = vld [vmem:[#allocation5 + $0x78] sm:$0xff]
    %v168 = vld [vmem:[#allocation5 + $0x80] sm:$0xff]
    %v169 = vld [vmem:[#allocation5 + $0x88] sm:$0xff]
    %v170 = vld [vmem:[#allocation5 + $0x90] sm:$0xff]
    %v171 = vld [vmem:[#allocation5 + $0x98] sm:$0xff]
    %v172 = vld [vmem:[#allocation5 + $0xa0] sm:$0xff]
    %v173 = vld [vmem:[#allocation5 + $0xa8] sm:$0xff]
    %v174 = vld [vmem:[#allocation5 + $0xb0] sm:$0xff]
    %v175 = vld [vmem:[#allocation5 + $0xb8] sm:$0xff]
    %v176 = vld [vmem:[#allocation5 + $0xc0] sm:$0xff]
    %v177 = vld [vmem:[#allocation5 + $0xc8] sm:$0xff]
    %v178 = vld [vmem:[#allocation5 + $0xd0] sm:$0xff]
    %v179 = vld [vmem:[#allocation5 + $0xd8] sm:$0xff]
    %v180 = vld [vmem:[#allocation5 + $0xe0] sm:$0xff]
    %v181 = vld [vmem:[#allocation5 + $0xe8] sm:$0xff]
    %v182 = vld [vmem:[#allocation5 + $0xf0] sm:$0xff]
    %v183 = vld [vmem:[#allocation5 + $0xf8] sm:$0xff]
    %v184 = vld [vmem:[#allocation5 + $0x100] sm:$0xff]
    %v185 = vld [vmem:[#allocation5 + $0x108] sm:$0xff]
    %v186 = vld [vmem:[#allocation5 + $0x110] sm:$0xff]
    %v187 = vld [vmem:[#allocation5 + $0x118] sm:$0xff]
    %v188 = vld [vmem:[#allocation5 + $0x120] sm:$0xff]
    %v189 = vld [vmem:[#allocation5 + $0x128] sm:$0xff]
    %v190 = vld [vmem:[#allocation5 + $0x130] sm:$0xff]
    %v191 = vld [vmem:[#allocation5 + $0x138] sm:$0xff]
    %v192 = vld [vmem:[#allocation5 + $0x140] sm:$0xff]
    %v193 = vld [vmem:[#allocation5 + $0x148] sm:$0xff]
    %v194 = vld [vmem:[#allocation5 + $0x150] sm:$0xff]
    %v195 = vld [vmem:[#allocation5 + $0x158] sm:$0xff]
    %v196 = vld [vmem:[#allocation5 + $0x160] sm:$0xff]
    %v197 = vld [vmem:[#allocation5 + $0x168] sm:$0xff]
    %v198 = vld [vmem:[#allocation5 + $0x170] sm:$0xff]
    %v199 = vld [vmem:[#allocation5 + $0x178] sm:$0xff]
    %v200 = vld [vmem:[#allocation5 + $0x180] sm:$0xff]
    %v201 = vld [vmem:[#allocation5 + $0x188] sm:$0xff]
    %v202 = vld [vmem:[#allocation5 + $0x190] sm:$0xff]
    %v203 = vld [vmem:[#allocation5 + $0x198] sm:$0xff]
    %v204 = vld [vmem:[#allocation5 + $0x1a0] sm:$0xff]
    %v205 = vld [vmem:[#allocation5 + $0x1a8] sm:$0xff]
    %v206 = vld [vmem:[#allocation5 + $0x1b0] sm:$0xff]
    %v207 = vld [vmem:[#allocation5 + $0x1b8] sm:$0xff]
    %v208 = vld [vmem:[#allocation5 + $0x1c0] sm:$0xff]
    %v209 = vld [vmem:[#allocation5 + $0x1c8] sm:$0xff]
    %v210 = vld [vmem:[#allocation5 + $0x1d0] sm:$0xff]
    %v211 = vld [vmem:[#allocation5 + $0x1d8] sm:$0xff]
    %v212 = vld [vmem:[#allocation5 + $0x1e0] sm:$0xff]
    %v213 = vld [vmem:[#allocation5 + $0x1e8] sm:$0xff]
    %v214 = vld [vmem:[#allocation5 + $0x1f0] sm:$0xff]
    %v215 = vld [vmem:[#allocation5 + $0x1f8] sm:$0xff]
    %v216 = vld [vmem:[#allocation5 + $0x200] sm:$0xff]
    %v217 = vld [vmem:[#allocation5 + $0x208] sm:$0xff]
    %v218 = vld [vmem:[#allocation5 + $0x210] sm:$0xff]
    %v219 = vld [vmem:[#allocation5 + $0x218] sm:$0xff]
    %v220 = vld [vmem:[#allocation5 + $0x220] sm:$0xff]
    %v221 = vld [vmem:[#allocation5 + $0x228] sm:$0xff]
    %v222 = vld [vmem:[#allocation5 + $0x230] sm:$0xff]
    %v223 = vld [vmem:[#allocation5 + $0x238] sm:$0xff]
    %v224 = vld [vmem:[#allocation5 + $0x240] sm:$0xff]
    %v225 = vld [vmem:[#allocation5 + $0x248] sm:$0xff]
    %v226 = vld [vmem:[#allocation5 + $0x250] sm:$0xff]
    %v227 = vld [vmem:[#allocation5 + $0x258] sm:$0xff]
    %v228 = vld [vmem:[#allocation5 + $0x260] sm:$0xff]
    %v229 = vld [vmem:[#allocation5 + $0x268] sm:$0xff]
    %v230 = vld [vmem:[#allocation5 + $0x270] sm:$0xff]
    %v231 = vld [vmem:[#allocation5 + $0x278] sm:$0xff]
    %v232 = vld [vmem:[#allocation5 + $0x280] sm:$0xff]
    %v233 = vld [vmem:[#allocation5 + $0x288] sm:$0xff]
    %v234 = vld [vmem:[#allocation5 + $0x290] sm:$0xff]
    %v235 = vld [vmem:[#allocation5 + $0x298] sm:$0xff]
    %v236 = vld [vmem:[#allocation5 + $0x2a0] sm:$0xff]
    %v237 = vld [vmem:[#allocation5 + $0x2a8] sm:$0xff]
    %v238 = vld [vmem:[#allocation5 + $0x2b0] sm:$0xff]
    %v239 = vld [vmem:[#allocation5 + $0x2b8] sm:$0xff]
    %v240 = vld [vmem:[#allocation5 + $0x2c0] sm:$0xff]
    %v241 = vld [vmem:[#allocation5 + $0x2c8] sm:$0xff]
    %v242 = vld [vmem:[#allocation5 + $0x2d0] sm:$0xff]
    %v243 = vld [vmem:[#allocation5 + $0x2d8] sm:$0xff]
    %v244 = vld [vmem:[#allocation5 + $0x2e0] sm:$0xff]
    %v245 = vld [vmem:[#allocation5 + $0x2e8] sm:$0xff]
    %v246 = vld [vmem:[#allocation5 + $0x2f0] sm:$0xff]
    %v247 = vld [vmem:[#allocation5 + $0x2f8] sm:$0xff]
    %v248 = vld [vmem:[#allocation5 + $0x300] sm:$0xff]
    %v249 = vld [vmem:[#allocation5 + $0x308] sm:$0xff]
    %v250 = vld [vmem:[#allocation5 + $0x310] sm:$0xff]
    %v251 = vld [vmem:[#allocation5 + $0x318] sm:$0xff]
    %v252 = vld [vmem:[#allocation5 + $0x320] sm:$0xff]
    %v253 = vld [vmem:[#allocation5 + $0x328] sm:$0xff]
    %v254 = vld [vmem:[#allocation5 + $0x330] sm:$0xff]
    %v255 = vld [vmem:[#allocation5 + $0x338] sm:$0xff]
    %v256 = vld [vmem:[#allocation5 + $0x340] sm:$0xff]
    %v257 = vld [vmem:[#allocation5 + $0x348] sm:$0xff]
    %v258 = vld [vmem:[#allocation5 + $0x350] sm:$0xff]
    %v259 = vld [vmem:[#allocation5 + $0x358] sm:$0xff]
    %v260 = vld [vmem:[#allocation5 + $0x360] sm:$0xff]
    %v261 = vld [vmem:[#allocation5 + $0x368] sm:$0xff]
    %v262 = vld [vmem:[#allocation5 + $0x370] sm:$0xff]
    %v263 = vld [vmem:[#allocation5 + $0x378] sm:$0xff]
    %v264 = vld [vmem:[#allocation5 + $0x380] sm:$0xff]
    %v265 = vld [vmem:[#allocation5 + $0x388] sm:$0xff]
    %v266 = vld [vmem:[#allocation5 + $0x390] sm:$0xff]
    %v267 = vld [vmem:[#allocation5 + $0x398] sm:$0xff]
    %v268 = vld [vmem:[#allocation5 + $0x3a0] sm:$0xff]
    %v269 = vld [vmem:[#allocation5 + $0x3a8] sm:$0xff]
    %v270 = vld [vmem:[#allocation5 + $0x3b0] sm:$0xff]
    %v271 = vld [vmem:[#allocation5 + $0x3b8] sm:$0xff]
    %v272 = vld [vmem:[#allocation5 + $0x3c0] sm:$0xff]
    %v273 = vld [vmem:[#allocation5 + $0x3c8] sm:$0xff]
    %v274 = vld [vmem:[#allocation5 + $0x3d0] sm:$0xff]
    %v275 = vld [vmem:[#allocation5 + $0x3d8] sm:$0xff]
    %v276 = vld [vmem:[#allocation5 + $0x3e0] sm:$0xff]
    %v277 = vld [vmem:[#allocation5 + $0x3e8] sm:$0xff]
    %v278 = vld [vmem:[#allocation5 + $0x3f0] sm:$0xff]
    %v279 = vld [vmem:[#allocation5 + $0x3f8] sm:$0xff]
    %v280 = vld [vmem:[#allocation5 + $0x400] sm:$0xff]
    %v281 = vld [vmem:[#allocation5 + $0x408] sm:$0xff]
    %v282 = vld [vmem:[#allocation5 + $0x410] sm:$0xff]
    %v283 = vld [vmem:[#allocation5 + $0x418] sm:$0xff]
    %v284 = vld [vmem:[#allocation5 + $0x420] sm:$0xff]
    %v285 = vld [vmem:[#allocation5 + $0x428] sm:$0xff]
    %v286 = vld [vmem:[#allocation5 + $0x430] sm:$0xff]
    %v287 = vld [vmem:[#allocation5 + $0x438] sm:$0xff]
    %v288 = vld [vmem:[#allocation5 + $0x440] sm:$0xff]
    %v289 = vld [vmem:[#allocation5 + $0x448] sm:$0xff]
    %v290 = vld [vmem:[#allocation5 + $0x450] sm:$0xff]
    %v291 = vld [vmem:[#allocation5 + $0x458] sm:$0xff]
    %v292 = vld [vmem:[#allocation5 + $0x460] sm:$0xff]
    %v293 = vld [vmem:[#allocation5 + $0x468] sm:$0xff]
    %v294 = vld [vmem:[#allocation5 + $0x470] sm:$0xff]
    %v295 = vld [vmem:[#allocation5 + $0x478] sm:$0xff]
    %v296 = vld [vmem:[#allocation5 + $0x480] sm:$0xff]
    %v297 = vld [vmem:[#allocation5 + $0x488] sm:$0xff]
    %v298 = vld [vmem:[#allocation5 + $0x490] sm:$0xff]
    %v299 = vld [vmem:[#allocation5 + $0x498] sm:$0xff]
    %v300 = vld [vmem:[#allocation5 + $0x4a0] sm:$0xff]
    %v301 = vld [vmem:[#allocation5 + $0x4a8] sm:$0xff]
    %v302 = vld [vmem:[#allocation5 + $0x4b0] sm:$0xff]
    %v303 = vld [vmem:[#allocation5 + $0x4b8] sm:$0xff]
    %v304 = vld [vmem:[#allocation5 + $0x4c0] sm:$0xff]
    %v305 = vld [vmem:[#allocation5 + $0x4c8] sm:$0xff]
    %v306 = vld [vmem:[#allocation5 + $0x4d0] sm:$0xff]
    %v307 = vld [vmem:[#allocation5 + $0x4d8] sm:$0xff]
    %v308 = vld [vmem:[#allocation5 + $0x4e0] sm:$0xff]
    %v309 = vld [vmem:[#allocation5 + $0x4e8] sm:$0xff]
    %v310 = vld [vmem:[#allocation5 + $0x4f0] sm:$0xff]
    %v311 = vld [vmem:[#allocation5 + $0x4f8] sm:$0xff]
    %v312 = vld [vmem:[#allocation5 + $0x500] sm:$0xff]
    %v313 = vld [vmem:[#allocation5 + $0x508] sm:$0xff]
    %v314 = vld [vmem:[#allocation5 + $0x510] sm:$0xff]
    %v315 = vld [vmem:[#allocation5 + $0x518] sm:$0xff]
    %v316 = vld [vmem:[#allocation5 + $0x520] sm:$0xff]
    %v317 = vld [vmem:[#allocation5 + $0x528] sm:$0xff]
    %v318 = vld [vmem:[#allocation5 + $0x530] sm:$0xff]
    %v319 = vld [vmem:[#allocation5 + $0x538] sm:$0xff]
    %v320 = vld [vmem:[#allocation5 + $0x540] sm:$0xff]
    %v321 = vld [vmem:[#allocation5 + $0x548] sm:$0xff]
    %v322 = vld [vmem:[#allocation5 + $0x550] sm:$0xff]
    %v323 = vld [vmem:[#allocation5 + $0x558] sm:$0xff]
    %v324 = vld [vmem:[#allocation5 + $0x560] sm:$0xff]
    %v325 = vld [vmem:[#allocation5 + $0x568] sm:$0xff]
    %v326 = vld [vmem:[#allocation5 + $0x570] sm:$0xff]
    %v327 = vld [vmem:[#allocation5 + $0x578] sm:$0xff]
    %v328 = vld [vmem:[#allocation5 + $0x580] sm:$0xff]
    %v329 = vld [vmem:[#allocation5 + $0x588] sm:$0xff]
    %v330 = vld [vmem:[#allocation5 + $0x590] sm:$0xff]
    %v331 = vld [vmem:[#allocation5 + $0x598] sm:$0xff]
    %v332 = vld [vmem:[#allocation5 + $0x5a0] sm:$0xff]
    %v333 = vld [vmem:[#allocation5 + $0x5a8] sm:$0xff]
    %v334 = vld [vmem:[#allocation5 + $0x5b0] sm:$0xff]
    %v335 = vld [vmem:[#allocation5 + $0x5b8] sm:$0xff]
    %v336 = vld [vmem:[#allocation5 + $0x5c0] sm:$0xff]
    %v337 = vld [vmem:[#allocation5 + $0x5c8] sm:$0xff]
    %v338 = vld [vmem:[#allocation5 + $0x5d0] sm:$0xff]
    %v339 = vld [vmem:[#allocation5 + $0x5d8] sm:$0xff]
    %v340 = vld [vmem:[#allocation5 + $0x5e0] sm:$0xff]
    %v341 = vld [vmem:[#allocation5 + $0x5e8] sm:$0xff]
    %v342 = vld [vmem:[#allocation5 + $0x5f0] sm:$0xff]
    %v343 = vld [vmem:[#allocation5 + $0x5f8] sm:$0xff]
    %v344 = vld [vmem:[#allocation7] sm:$0xff]
    %v345 = vld [vmem:[#allocation7 + $0x8] sm:$0xf]
    %v348 = vlaneseq
    %v349 = vshrl.u32 %v348, 7
    %v350 = vsub.s32 0, %v349
    %v351 = vrot.slane %v344, %v350
    %v352 = vlaneseq
    %v353 = vshrl.u32 %v352, 7
    %v354 = vsub.s32 1, %v353
    %v355 = vrot.slane %v344, %v354
    %v356 = vlaneseq
    %v357 = vshrl.u32 %v356, 7
    %v358 = vsub.s32 2, %v357
    %v359 = vrot.slane %v344, %v358
    %v360 = vlaneseq
    %v361 = vshrl.u32 %v360, 7
    %v362 = vsub.s32 3, %v361
    %v363 = vrot.slane %v344, %v362
    %v364 = vlaneseq
    %v365 = vshrl.u32 %v364, 7
    %v366 = vsub.s32 4, %v365
    %v367 = vrot.slane %v344, %v366
    %v368 = vlaneseq
    %v369 = vshrl.u32 %v368, 7
    %v370 = vsub.s32 5, %v369
    %v371 = vrot.slane %v344, %v370
    %v372 = vlaneseq
    %v373 = vshrl.u32 %v372, 7
    %v374 = vsub.s32 6, %v373
    %v375 = vrot.slane %v344, %v374
    %v376 = vlaneseq
    %v377 = vshrl.u32 %v376, 7
    %v378 = vsub.s32 7, %v377
    %v379 = vrot.slane %v344, %v378
    %v380 = vlaneseq
    %v381 = vshrl.u32 %v380, 7
    %v382 = vsub.s32 0, %v381
    %v383 = vrot.slane %v345, %v382
    %v384 = vlaneseq
    %v385 = vshrl.u32 %v384, 7
    %v386 = vsub.s32 1, %v385
    %v387 = vrot.slane %v345, %v386
    %v388 = vlaneseq
    %v389 = vshrl.u32 %v388, 7
    %v390 = vsub.s32 2, %v389
    %v391 = vrot.slane %v345, %v390
    %v392 = vlaneseq
    %v393 = vshrl.u32 %v392, 7
    %v394 = vsub.s32 3, %v393
    %v395 = vrot.slane %v345, %v394
    %v600 = vunpack.c.l.b16 %v152
    %v601 = vunpack.c.h.b16 %v152
    %v602 = vunpack.c.l.b16 %v153
    %v603 = vunpack.c.h.b16 %v153
    %v604 = vunpack.c.l.b16 %v154
    %v605 = vunpack.c.h.b16 %v154
    %v606 = vunpack.c.l.b16 %v155
    %v607 = vunpack.c.h.b16 %v155
    %v608 = vunpack.c.l.b16 %v156
    %v609 = vunpack.c.h.b16 %v156
    %v610 = vunpack.c.l.b16 %v157
    %v611 = vunpack.c.h.b16 %v157
    %v612 = vunpack.c.l.b16 %v158
    %v613 = vunpack.c.h.b16 %v158
    %v614 = vunpack.c.l.b16 %v159
    %v615 = vunpack.c.h.b16 %v159
    %v616 = vunpack.c.l.b16 %v160
    %v617 = vunpack.c.h.b16 %v160
    %v618 = vunpack.c.l.b16 %v161
    %v619 = vunpack.c.h.b16 %v161
    %v620 = vunpack.c.l.b16 %v162
    %v621 = vunpack.c.h.b16 %v162
    %v622 = vunpack.c.l.b16 %v163
    %v623 = vunpack.c.h.b16 %v163
    %v624 = vunpack.c.l.b16 %v164
    %v625 = vunpack.c.h.b16 %v164
    %v626 = vunpack.c.l.b16 %v165
    %v627 = vunpack.c.h.b16 %v165
    %v628 = vunpack.c.l.b16 %v166
    %v629 = vunpack.c.h.b16 %v166
    %v630 = vunpack.c.l.b16 %v167
    %v631 = vunpack.c.h.b16 %v167
    %v632 = vunpack.c.l.b16 %v168
    %v633 = vunpack.c.h.b16 %v168
    %v634 = vunpack.c.l.b16 %v169
    %v635 = vunpack.c.h.b16 %v169
    %v636 = vunpack.c.l.b16 %v170
    %v637 = vunpack.c.h.b16 %v170
    %v638 = vunpack.c.l.b16 %v171
    %v639 = vunpack.c.h.b16 %v171
    %v640 = vunpack.c.l.b16 %v172
    %v641 = vunpack.c.h.b16 %v172
    %v642 = vunpack.c.l.b16 %v173
    %v643 = vunpack.c.h.b16 %v173
    %v644 = vunpack.c.l.b16 %v174
    %v645 = vunpack.c.h.b16 %v174
    %v646 = vunpack.c.l.b16 %v175
    %v647 = vunpack.c.h.b16 %v175
    %v648 = vunpack.c.l.b16 %v176
    %v649 = vunpack.c.h.b16 %v176
    %v650 = vunpack.c.l.b16 %v177
    %v651 = vunpack.c.h.b16 %v177
    %v652 = vunpack.c.l.b16 %v178
    %v653 = vunpack.c.h.b16 %v178
    %v654 = vunpack.c.l.b16 %v179
    %v655 = vunpack.c.h.b16 %v179
    %v656 = vunpack.c.l.b16 %v180
    %v657 = vunpack.c.h.b16 %v180
    %v658 = vunpack.c.l.b16 %v181
    %v659 = vunpack.c.h.b16 %v181
    %v660 = vunpack.c.l.b16 %v182
    %v661 = vunpack.c.h.b16 %v182
    %v662 = vunpack.c.l.b16 %v183
    %v663 = vunpack.c.h.b16 %v183
    %v664 = vunpack.c.l.b16 %v184
    %v665 = vunpack.c.h.b16 %v184
    %v666 = vunpack.c.l.b16 %v185
    %v667 = vunpack.c.h.b16 %v185
    %v668 = vunpack.c.l.b16 %v186
    %v669 = vunpack.c.h.b16 %v186
    %v670 = vunpack.c.l.b16 %v187
    %v671 = vunpack.c.h.b16 %v187
    %v672 = vunpack.c.l.b16 %v188
    %v673 = vunpack.c.h.b16 %v188
    %v674 = vunpack.c.l.b16 %v189
    %v675 = vunpack.c.h.b16 %v189
    %v676 = vunpack.c.l.b16 %v190
    %v677 = vunpack.c.h.b16 %v190
    %v678 = vunpack.c.l.b16 %v191
    %v679 = vunpack.c.h.b16 %v191
    %v680 = vunpack.c.l.b16 %v192
    %v681 = vunpack.c.h.b16 %v192
    %v682 = vunpack.c.l.b16 %v193
    %v683 = vunpack.c.h.b16 %v193
    %v684 = vunpack.c.l.b16 %v194
    %v685 = vunpack.c.h.b16 %v194
    %v686 = vunpack.c.l.b16 %v195
    %v687 = vunpack.c.h.b16 %v195
    %v688 = vunpack.c.l.b16 %v196
    %v689 = vunpack.c.h.b16 %v196
    %v690 = vunpack.c.l.b16 %v197
    %v691 = vunpack.c.h.b16 %v197
    %v692 = vunpack.c.l.b16 %v198
    %v693 = vunpack.c.h.b16 %v198
    %v694 = vunpack.c.l.b16 %v199
    %v695 = vunpack.c.h.b16 %v199
    %v696 = vunpack.c.l.b16 %v200
    %v697 = vunpack.c.h.b16 %v200
    %v698 = vunpack.c.l.b16 %v201
    %v699 = vunpack.c.h.b16 %v201
    %v700 = vunpack.c.l.b16 %v202
    %v701 = vunpack.c.h.b16 %v202
    %v702 = vunpack.c.l.b16 %v203
    %v703 = vunpack.c.h.b16 %v203
    %v704 = vunpack.c.l.b16 %v204
    %v705 = vunpack.c.h.b16 %v204
    %v706 = vunpack.c.l.b16 %v205
    %v707 = vunpack.c.h.b16 %v205
    %v708 = vunpack.c.l.b16 %v206
    %v709 = vunpack.c.h.b16 %v206
    %v710 = vunpack.c.l.b16 %v207
    %v711 = vunpack.c.h.b16 %v207
    %v712 = vunpack.c.l.b16 %v208
    %v713 = vunpack.c.h.b16 %v208
    %v714 = vunpack.c.l.b16 %v209
    %v715 = vunpack.c.h.b16 %v209
    %v716 = vunpack.c.l.b16 %v210
    %v717 = vunpack.c.h.b16 %v210
    %v718 = vunpack.c.l.b16 %v211
    %v719 = vunpack.c.h.b16 %v211
    %v720 = vunpack.c.l.b16 %v212
    %v721 = vunpack.c.h.b16 %v212
    %v722 = vunpack.c.l.b16 %v213
    %v723 = vunpack.c.h.b16 %v213
    %v724 = vunpack.c.l.b16 %v214
    %v725 = vunpack.c.h.b16 %v214
    %v726 = vunpack.c.l.b16 %v215
    %v727 = vunpack.c.h.b16 %v215
    %v728 = vunpack.c.l.b16 %v216
    %v729 = vunpack.c.h.b16 %v216
    %v730 = vunpack.c.l.b16 %v217
    %v731 = vunpack.c.h.b16 %v217
    %v732 = vunpack.c.l.b16 %v218
    %v733 = vunpack.c.h.b16 %v218
    %v734 = vunpack.c.l.b16 %v219
    %v735 = vunpack.c.h.b16 %v219
    %v736 = vunpack.c.l.b16 %v220
    %v737 = vunpack.c.h.b16 %v220
    %v738 = vunpack.c.l.b16 %v221
    %v739 = vunpack.c.h.b16 %v221
    %v740 = vunpack.c.l.b16 %v222
    %v741 = vunpack.c.h.b16 %v222
    %v742 = vunpack.c.l.b16 %v223
    %v743 = vunpack.c.h.b16 %v223
    %v744 = vunpack.c.l.b16 %v224
    %v745 = vunpack.c.h.b16 %v224
    %v746 = vunpack.c.l.b16 %v225
    %v747 = vunpack.c.h.b16 %v225
    %v748 = vunpack.c.l.b16 %v226
    %v749 = vunpack.c.h.b16 %v226
    %v750 = vunpack.c.l.b16 %v227
    %v751 = vunpack.c.h.b16 %v227
    %v752 = vunpack.c.l.b16 %v228
    %v753 = vunpack.c.h.b16 %v228
    %v754 = vunpack.c.l.b16 %v229
    %v755 = vunpack.c.h.b16 %v229
    %v756 = vunpack.c.l.b16 %v230
    %v757 = vunpack.c.h.b16 %v230
    %v758 = vunpack.c.l.b16 %v231
    %v759 = vunpack.c.h.b16 %v231
    %v760 = vunpack.c.l.b16 %v232
    %v761 = vunpack.c.h.b16 %v232
    %v762 = vunpack.c.l.b16 %v233
    %v763 = vunpack.c.h.b16 %v233
    %v764 = vunpack.c.l.b16 %v234
    %v765 = vunpack.c.h.b16 %v234
    %v766 = vunpack.c.l.b16 %v235
    %v767 = vunpack.c.h.b16 %v235
    %v768 = vunpack.c.l.b16 %v236
    %v769 = vunpack.c.h.b16 %v236
    %v770 = vunpack.c.l.b16 %v237
    %v771 = vunpack.c.h.b16 %v237
    %v772 = vunpack.c.l.b16 %v238
    %v773 = vunpack.c.h.b16 %v238
    %v774 = vunpack.c.l.b16 %v239
    %v775 = vunpack.c.h.b16 %v239
    %v776 = vunpack.c.l.b16 %v240
    %v777 = vunpack.c.h.b16 %v240
    %v778 = vunpack.c.l.b16 %v241
    %v779 = vunpack.c.h.b16 %v241
    %v780 = vunpack.c.l.b16 %v242
    %v781 = vunpack.c.h.b16 %v242
    %v782 = vunpack.c.l.b16 %v243
    %v783 = vunpack.c.h.b16 %v243
    %v784 = vunpack.c.l.b16 %v244
    %v785 = vunpack.c.h.b16 %v244
    %v786 = vunpack.c.l.b16 %v245
    %v787 = vunpack.c.h.b16 %v245
    %v788 = vunpack.c.l.b16 %v246
    %v789 = vunpack.c.h.b16 %v246
    %v790 = vunpack.c.l.b16 %v247
    %v791 = vunpack.c.h.b16 %v247
    %v792 = vunpack.c.l.b16 %v248
    %v793 = vunpack.c.h.b16 %v248
    %v794 = vunpack.c.l.b16 %v249
    %v795 = vunpack.c.h.b16 %v249
    %v796 = vunpack.c.l.b16 %v250
    %v797 = vunpack.c.h.b16 %v250
    %v798 = vunpack.c.l.b16 %v251
    %v799 = vunpack.c.h.b16 %v251
    %v800 = vunpack.c.l.b16 %v252
    %v801 = vunpack.c.h.b16 %v252
    %v802 = vunpack.c.l.b16 %v253
    %v803 = vunpack.c.h.b16 %v253
    %v804 = vunpack.c.l.b16 %v254
    %v805 = vunpack.c.h.b16 %v254
    %v806 = vunpack.c.l.b16 %v255
    %v807 = vunpack.c.h.b16 %v255
    %v808 = vunpack.c.l.b16 %v256
    %v809 = vunpack.c.h.b16 %v256
    %v810 = vunpack.c.l.b16 %v257
    %v811 = vunpack.c.h.b16 %v257
    %v812 = vunpack.c.l.b16 %v258
    %v813 = vunpack.c.h.b16 %v258
    %v814 = vunpack.c.l.b16 %v259
    %v815 = vunpack.c.h.b16 %v259
    %v816 = vunpack.c.l.b16 %v260
    %v817 = vunpack.c.h.b16 %v260
    %v818 = vunpack.c.l.b16 %v261
    %v819 = vunpack.c.h.b16 %v261
    %v820 = vunpack.c.l.b16 %v262
    %v821 = vunpack.c.h.b16 %v262
    %v822 = vunpack.c.l.b16 %v263
    %v823 = vunpack.c.h.b16 %v263
    %v824 = vunpack.c.l.b16 %v264
    %v825 = vunpack.c.h.b16 %v264
    %v826 = vunpack.c.l.b16 %v265
    %v827 = vunpack.c.h.b16 %v265
    %v828 = vunpack.c.l.b16 %v266
    %v829 = vunpack.c.h.b16 %v266
    %v830 = vunpack.c.l.b16 %v267
    %v831 = vunpack.c.h.b16 %v267
    %v832 = vunpack.c.l.b16 %v268
    %v833 = vunpack.c.h.b16 %v268
    %v834 = vunpack.c.l.b16 %v269
    %v835 = vunpack.c.h.b16 %v269
    %v836 = vunpack.c.l.b16 %v270
    %v837 = vunpack.c.h.b16 %v270
    %v838 = vunpack.c.l.b16 %v271
    %v839 = vunpack.c.h.b16 %v271
    %v840 = vunpack.c.l.b16 %v272
    %v841 = vunpack.c.h.b16 %v272
    %v842 = vunpack.c.l.b16 %v273
    %v843 = vunpack.c.h.b16 %v273
    %v844 = vunpack.c.l.b16 %v274
    %v845 = vunpack.c.h.b16 %v274
    %v846 = vunpack.c.l.b16 %v275
    %v847 = vunpack.c.h.b16 %v275
    %v848 = vunpack.c.l.b16 %v276
    %v849 = vunpack.c.h.b16 %v276
    %v850 = vunpack.c.l.b16 %v277
    %v851 = vunpack.c.h.b16 %v277
    %v852 = vunpack.c.l.b16 %v278
    %v853 = vunpack.c.h.b16 %v278
    %v854 = vunpack.c.l.b16 %v279
    %v855 = vunpack.c.h.b16 %v279
    %v856 = vunpack.c.l.b16 %v280
    %v857 = vunpack.c.h.b16 %v280
    %v858 = vunpack.c.l.b16 %v281
    %v859 = vunpack.c.h.b16 %v281
    %v860 = vunpack.c.l.b16 %v282
    %v861 = vunpack.c.h.b16 %v282
    %v862 = vunpack.c.l.b16 %v283
    %v863 = vunpack.c.h.b16 %v283
    %v864 = vunpack.c.l.b16 %v284
    %v865 = vunpack.c.h.b16 %v284
    %v866 = vunpack.c.l.b16 %v285
    %v867 = vunpack.c.h.b16 %v285
    %v868 = vunpack.c.l.b16 %v286
    %v869 = vunpack.c.h.b16 %v286
    %v870 = vunpack.c.l.b16 %v287
    %v871 = vunpack.c.h.b16 %v287
    %v872 = vunpack.c.l.b16 %v288
    %v873 = vunpack.c.h.b16 %v288
    %v874 = vunpack.c.l.b16 %v289
    %v875 = vunpack.c.h.b16 %v289
    %v876 = vunpack.c.l.b16 %v290
    %v877 = vunpack.c.h.b16 %v290
    %v878 = vunpack.c.l.b16 %v291
    %v879 = vunpack.c.h.b16 %v291
    %v880 = vunpack.c.l.b16 %v292
    %v881 = vunpack.c.h.b16 %v292
    %v882 = vunpack.c.l.b16 %v293
    %v883 = vunpack.c.h.b16 %v293
    %v884 = vunpack.c.l.b16 %v294
    %v885 = vunpack.c.h.b16 %v294
    %v886 = vunpack.c.l.b16 %v295
    %v887 = vunpack.c.h.b16 %v295
    %v888 = vunpack.c.l.b16 %v296
    %v889 = vunpack.c.h.b16 %v296
    %v890 = vunpack.c.l.b16 %v297
    %v891 = vunpack.c.h.b16 %v297
    %v892 = vunpack.c.l.b16 %v298
    %v893 = vunpack.c.h.b16 %v298
    %v894 = vunpack.c.l.b16 %v299
    %v895 = vunpack.c.h.b16 %v299
    %v896 = vunpack.c.l.b16 %v300
    %v897 = vunpack.c.h.b16 %v300
    %v898 = vunpack.c.l.b16 %v301
    %v899 = vunpack.c.h.b16 %v301
    %v900 = vunpack.c.l.b16 %v302
    %v901 = vunpack.c.h.b16 %v302
    %v902 = vunpack.c.l.b16 %v303
    %v903 = vunpack.c.h.b16 %v303
    %v904 = vunpack.c.l.b16 %v304
    %v905 = vunpack.c.h.b16 %v304
    %v906 = vunpack.c.l.b16 %v305
    %v907 = vunpack.c.h.b16 %v305
    %v908 = vunpack.c.l.b16 %v306
    %v909 = vunpack.c.h.b16 %v306
    %v910 = vunpack.c.l.b16 %v307
    %v911 = vunpack.c.h.b16 %v307
    %v912 = vunpack.c.l.b16 %v308
    %v913 = vunpack.c.h.b16 %v308
    %v914 = vunpack.c.l.b16 %v309
    %v915 = vunpack.c.h.b16 %v309
    %v916 = vunpack.c.l.b16 %v310
    %v917 = vunpack.c.h.b16 %v310
    %v918 = vunpack.c.l.b16 %v311
    %v919 = vunpack.c.h.b16 %v311
    %v920 = vunpack.c.l.b16 %v312
    %v921 = vunpack.c.h.b16 %v312
    %v922 = vunpack.c.l.b16 %v313
    %v923 = vunpack.c.h.b16 %v313
    %v924 = vunpack.c.l.b16 %v314
    %v925 = vunpack.c.h.b16 %v314
    %v926 = vunpack.c.l.b16 %v315
    %v927 = vunpack.c.h.b16 %v315
    %v928 = vunpack.c.l.b16 %v316
    %v929 = vunpack.c.h.b16 %v316
    %v930 = vunpack.c.l.b16 %v317
    %v931 = vunpack.c.h.b16 %v317
    %v932 = vunpack.c.l.b16 %v318
    %v933 = vunpack.c.h.b16 %v318
    %v934 = vunpack.c.l.b16 %v319
    %v935 = vunpack.c.h.b16 %v319
    %v936 = vunpack.c.l.b16 %v320
    %v937 = vunpack.c.h.b16 %v320
    %v938 = vunpack.c.l.b16 %v321
    %v939 = vunpack.c.h.b16 %v321
    %v940 = vunpack.c.l.b16 %v322
    %v941 = vunpack.c.h.b16 %v322
    %v942 = vunpack.c.l.b16 %v323
    %v943 = vunpack.c.h.b16 %v323
    %v944 = vunpack.c.l.b16 %v324
    %v945 = vunpack.c.h.b16 %v324
    %v946 = vunpack.c.l.b16 %v325
    %v947 = vunpack.c.h.b16 %v325
    %v948 = vunpack.c.l.b16 %v326
    %v949 = vunpack.c.h.b16 %v326
    %v950 = vunpack.c.l.b16 %v327
    %v951 = vunpack.c.h.b16 %v327
    %v952 = vunpack.c.l.b16 %v328
    %v953 = vunpack.c.h.b16 %v328
    %v954 = vunpack.c.l.b16 %v329
    %v955 = vunpack.c.h.b16 %v329
    %v956 = vunpack.c.l.b16 %v330
    %v957 = vunpack.c.h.b16 %v330
    %v958 = vunpack.c.l.b16 %v331
    %v959 = vunpack.c.h.b16 %v331
    %v960 = vunpack.c.l.b16 %v332
    %v961 = vunpack.c.h.b16 %v332
    %v962 = vunpack.c.l.b16 %v333
    %v963 = vunpack.c.h.b16 %v333
    %v964 = vunpack.c.l.b16 %v334
    %v965 = vunpack.c.h.b16 %v334
    %v966 = vunpack.c.l.b16 %v335
    %v967 = vunpack.c.h.b16 %v335
    %v968 = vunpack.c.l.b16 %v336
    %v969 = vunpack.c.h.b16 %v336
    %v970 = vunpack.c.l.b16 %v337
    %v971 = vunpack.c.h.b16 %v337
    %v972 = vunpack.c.l.b16 %v338
    %v973 = vunpack.c.h.b16 %v338
    %v974 = vunpack.c.l.b16 %v339
    %v975 = vunpack.c.h.b16 %v339
    %v976 = vunpack.c.l.b16 %v340
    %v977 = vunpack.c.h.b16 %v340
    %v978 = vunpack.c.l.b16 %v341
    %v979 = vunpack.c.h.b16 %v341
    %v980 = vunpack.c.l.b16 %v342
    %v981 = vunpack.c.h.b16 %v342
    %v982 = vunpack.c.l.b16 %v343
    %v983 = vunpack.c.h.b16 %v343
    %v984 = vpack.c.b16 %v612, %v600
    %v985 = vpack.c.b16 %v613, %v601
    %v986 = vpack.c.b16 %v614, %v602
    %v987 = vpack.c.b16 %v615, %v603
    %v988 = vpack.c.b16 %v616, %v604
    %v989 = vpack.c.b16 %v617, %v605
    %v990 = vpack.c.b16 %v618, %v606
    %v991 = vpack.c.b16 %v619, %v607
    %v992 = vpack.c.b16 %v620, %v608
    %v993 = vpack.c.b16 %v621, %v609
    %v994 = vpack.c.b16 %v622, %v610
    %v995 = vpack.c.b16 %v623, %v611
    %v996 = vpack.c.b16 %v636, %v624
    %v997 = vpack.c.b16 %v637, %v625
    %v998 = vpack.c.b16 %v638, %v626
    %v999 = vpack.c.b16 %v639, %v627
    %v1000 = vpack.c.b16 %v640, %v628
    %v1001 = vpack.c.b16 %v641, %v629
    %v1002 = vpack.c.b16 %v642, %v630
    %v1003 = vpack.c.b16 %v643, %v631
    %v1004 = vpack.c.b16 %v644, %v632
    %v1005 = vpack.c.b16 %v645, %v633
    %v1006 = vpack.c.b16 %v646, %v634
    %v1007 = vpack.c.b16 %v647, %v635
    %v1008 = vpack.c.b16 %v660, %v648
    %v1009 = vpack.c.b16 %v661, %v649
    %v1010 = vpack.c.b16 %v662, %v650
    %v1011 = vpack.c.b16 %v663, %v651
    %v1012 = vpack.c.b16 %v664, %v652
    %v1013 = vpack.c.b16 %v665, %v653
    %v1014 = vpack.c.b16 %v666, %v654
    %v1015 = vpack.c.b16 %v667, %v655
    %v1016 = vpack.c.b16 %v668, %v656
    %v1017 = vpack.c.b16 %v669, %v657
    %v1018 = vpack.c.b16 %v670, %v658
    %v1019 = vpack.c.b16 %v671, %v659
    %v1020 = vpack.c.b16 %v684, %v672
    %v1021 = vpack.c.b16 %v685, %v673
    %v1022 = vpack.c.b16 %v686, %v674
    %v1023 = vpack.c.b16 %v687, %v675
    %v1024 = vpack.c.b16 %v688, %v676
    %v1025 = vpack.c.b16 %v689, %v677
    %v1026 = vpack.c.b16 %v690, %v678
    %v1027 = vpack.c.b16 %v691, %v679
    %v1028 = vpack.c.b16 %v692, %v680
    %v1029 = vpack.c.b16 %v693, %v681
    %v1030 = vpack.c.b16 %v694, %v682
    %v1031 = vpack.c.b16 %v695, %v683
    %v1032 = vpack.c.b16 %v708, %v696
    %v1033 = vpack.c.b16 %v709, %v697
    %v1034 = vpack.c.b16 %v710, %v698
    %v1035 = vpack.c.b16 %v711, %v699
    %v1036 = vpack.c.b16 %v712, %v700
    %v1037 = vpack.c.b16 %v713, %v701
    %v1038 = vpack.c.b16 %v714, %v702
    %v1039 = vpack.c.b16 %v715, %v703
    %v1040 = vpack.c.b16 %v716, %v704
    %v1041 = vpack.c.b16 %v717, %v705
    %v1042 = vpack.c.b16 %v718, %v706
    %v1043 = vpack.c.b16 %v719, %v707
    %v1044 = vpack.c.b16 %v732, %v720
    %v1045 = vpack.c.b16 %v733, %v721
    %v1046 = vpack.c.b16 %v734, %v722
    %v1047 = vpack.c.b16 %v735, %v723
    %v1048 = vpack.c.b16 %v736, %v724
    %v1049 = vpack.c.b16 %v737, %v725
    %v1050 = vpack.c.b16 %v738, %v726
    %v1051 = vpack.c.b16 %v739, %v727
    %v1052 = vpack.c.b16 %v740, %v728
    %v1053 = vpack.c.b16 %v741, %v729
    %v1054 = vpack.c.b16 %v742, %v730
    %v1055 = vpack.c.b16 %v743, %v731
    %v1056 = vpack.c.b16 %v756, %v744
    %v1057 = vpack.c.b16 %v757, %v745
    %v1058 = vpack.c.b16 %v758, %v746
    %v1059 = vpack.c.b16 %v759, %v747
    %v1060 = vpack.c.b16 %v760, %v748
    %v1061 = vpack.c.b16 %v761, %v749
    %v1062 = vpack.c.b16 %v762, %v750
    %v1063 = vpack.c.b16 %v763, %v751
    %v1064 = vpack.c.b16 %v764, %v752
    %v1065 = vpack.c.b16 %v765, %v753
    %v1066 = vpack.c.b16 %v766, %v754
    %v1067 = vpack.c.b16 %v767, %v755
    %v1068 = vpack.c.b16 %v780, %v768
    %v1069 = vpack.c.b16 %v781, %v769
    %v1070 = vpack.c.b16 %v782, %v770
    %v1071 = vpack.c.b16 %v783, %v771
    %v1072 = vpack.c.b16 %v784, %v772
    %v1073 = vpack.c.b16 %v785, %v773
    %v1074 = vpack.c.b16 %v786, %v774
    %v1075 = vpack.c.b16 %v787, %v775
    %v1076 = vpack.c.b16 %v788, %v776
    %v1077 = vpack.c.b16 %v789, %v777
    %v1078 = vpack.c.b16 %v790, %v778
    %v1079 = vpack.c.b16 %v791, %v779
    %v1080 = vpack.c.b16 %v804, %v792
    %v1081 = vpack.c.b16 %v805, %v793
    %v1082 = vpack.c.b16 %v806, %v794
    %v1083 = vpack.c.b16 %v807, %v795
    %v1084 = vpack.c.b16 %v808, %v796
    %v1085 = vpack.c.b16 %v809, %v797
    %v1086 = vpack.c.b16 %v810, %v798
    %v1087 = vpack.c.b16 %v811, %v799
    %v1088 = vpack.c.b16 %v812, %v800
    %v1089 = vpack.c.b16 %v813, %v801
    %v1090 = vpack.c.b16 %v814, %v802
    %v1091 = vpack.c.b16 %v815, %v803
    %v1092 = vpack.c.b16 %v828, %v816
    %v1093 = vpack.c.b16 %v829, %v817
    %v1094 = vpack.c.b16 %v830, %v818
    %v1095 = vpack.c.b16 %v831, %v819
    %v1096 = vpack.c.b16 %v832, %v820
    %v1097 = vpack.c.b16 %v833, %v821
    %v1098 = vpack.c.b16 %v834, %v822
    %v1099 = vpack.c.b16 %v835, %v823
    %v1100 = vpack.c.b16 %v836, %v824
    %v1101 = vpack.c.b16 %v837, %v825
    %v1102 = vpack.c.b16 %v838, %v826
    %v1103 = vpack.c.b16 %v839, %v827
    %v1104 = vpack.c.b16 %v852, %v840
    %v1105 = vpack.c.b16 %v853, %v841
    %v1106 = vpack.c.b16 %v854, %v842
    %v1107 = vpack.c.b16 %v855, %v843
    %v1108 = vpack.c.b16 %v856, %v844
    %v1109 = vpack.c.b16 %v857, %v845
    %v1110 = vpack.c.b16 %v858, %v846
    %v1111 = vpack.c.b16 %v859, %v847
    %v1112 = vpack.c.b16 %v860, %v848
    %v1113 = vpack.c.b16 %v861, %v849
    %v1114 = vpack.c.b16 %v862, %v850
    %v1115 = vpack.c.b16 %v863, %v851
    %v1116 = vpack.c.b16 %v876, %v864
    %v1117 = vpack.c.b16 %v877, %v865
    %v1118 = vpack.c.b16 %v878, %v866
    %v1119 = vpack.c.b16 %v879, %v867
    %v1120 = vpack.c.b16 %v880, %v868
    %v1121 = vpack.c.b16 %v881, %v869
    %v1122 = vpack.c.b16 %v882, %v870
    %v1123 = vpack.c.b16 %v883, %v871
    %v1124 = vpack.c.b16 %v884, %v872
    %v1125 = vpack.c.b16 %v885, %v873
    %v1126 = vpack.c.b16 %v886, %v874
    %v1127 = vpack.c.b16 %v887, %v875
    %v1128 = vpack.c.b16 %v900, %v888
    %v1129 = vpack.c.b16 %v901, %v889
    %v1130 = vpack.c.b16 %v902, %v890
    %v1131 = vpack.c.b16 %v903, %v891
    %v1132 = vpack.c.b16 %v904, %v892
    %v1133 = vpack.c.b16 %v905, %v893
    %v1134 = vpack.c.b16 %v906, %v894
    %v1135 = vpack.c.b16 %v907, %v895
    %v1136 = vpack.c.b16 %v908, %v896
    %v1137 = vpack.c.b16 %v909, %v897
    %v1138 = vpack.c.b16 %v910, %v898
    %v1139 = vpack.c.b16 %v911, %v899
    %v1140 = vpack.c.b16 %v924, %v912
    %v1141 = vpack.c.b16 %v925, %v913
    %v1142 = vpack.c.b16 %v926, %v914
    %v1143 = vpack.c.b16 %v927, %v915
    %v1144 = vpack.c.b16 %v928, %v916
    %v1145 = vpack.c.b16 %v929, %v917
    %v1146 = vpack.c.b16 %v930, %v918
    %v1147 = vpack.c.b16 %v931, %v919
    %v1148 = vpack.c.b16 %v932, %v920
    %v1149 = vpack.c.b16 %v933, %v921
    %v1150 = vpack.c.b16 %v934, %v922
    %v1151 = vpack.c.b16 %v935, %v923
    %v1152 = vpack.c.b16 %v948, %v936
    %v1153 = vpack.c.b16 %v949, %v937
    %v1154 = vpack.c.b16 %v950, %v938
    %v1155 = vpack.c.b16 %v951, %v939
    %v1156 = vpack.c.b16 %v952, %v940
    %v1157 = vpack.c.b16 %v953, %v941
    %v1158 = vpack.c.b16 %v954, %v942
    %v1159 = vpack.c.b16 %v955, %v943
    %v1160 = vpack.c.b16 %v956, %v944
    %v1161 = vpack.c.b16 %v957, %v945
    %v1162 = vpack.c.b16 %v958, %v946
    %v1163 = vpack.c.b16 %v959, %v947
    %v1164 = vpack.c.b16 %v972, %v960
    %v1165 = vpack.c.b16 %v973, %v961
    %v1166 = vpack.c.b16 %v974, %v962
    %v1167 = vpack.c.b16 %v975, %v963
    %v1168 = vpack.c.b16 %v976, %v964
    %v1169 = vpack.c.b16 %v977, %v965
    %v1170 = vpack.c.b16 %v978, %v966
    %v1171 = vpack.c.b16 %v979, %v967
    %v1172 = vpack.c.b16 %v980, %v968
    %v1173 = vpack.c.b16 %v981, %v969
    %v1174 = vpack.c.b16 %v982, %v970
    %v1175 = vpack.c.b16 %v983, %v971
    %1368 = vmatprep.subr.bf16.mxu0 %v985
    %1369 = vmatpush1.bf16.msra.mxu0 %v984
    %1370 = vmatprep.subr.bf16.mxu0 %v997
    %1371 = vmatpush1.bf16.msra.mxu0 %v996
    %1372 = vmatprep.subr.bf16.mxu0 %v1009
    %1373 = vmatpush1.bf16.msra.mxu0 %v1008
    %1374 = vmatprep.subr.bf16.mxu0 %v1021
    %1375 = vmatpush1.bf16.msra.mxu0 %v1020
    %1376 = vmatprep.subr.bf16.mxu0 %v1033
    %1377 = vmatpush1.bf16.msra.mxu0 %v1032
    %1378 = vmatprep.subr.bf16.mxu0 %v1045
    %1379 = vmatpush1.bf16.msra.mxu0 %v1044
    %1380 = vmatprep.subr.bf16.mxu0 %v1057
    %1381 = vmatpush1.bf16.msra.mxu0 %v1056
    %1382 = vmatprep.subr.bf16.mxu0 %v1069
    %1383 = vmatpush1.bf16.msra.mxu0 %v1068
    %1384 = vmatprep.subr.bf16.mxu0 %v1081
    %1385 = vmatpush1.bf16.msra.mxu0 %v1080
    %1386 = vmatprep.subr.bf16.mxu0 %v1093
    %1387 = vmatpush1.bf16.msra.mxu0 %v1092
    %1388 = vmatprep.subr.bf16.mxu0 %v1105
    %1389 = vmatpush1.bf16.msra.mxu0 %v1104
    %1390 = vmatprep.subr.bf16.mxu0 %v1117
    %1391 = vmatpush1.bf16.msra.mxu0 %v1116
    %1392 = vmatprep.subr.bf16.mxu0 %v1129
    %1393 = vmatpush1.bf16.msra.mxu0 %v1128
    %1394 = vmatprep.subr.bf16.mxu0 %v1141
    %1395 = vmatpush1.bf16.msra.mxu0 %v1140
    %1396 = vmatprep.subr.bf16.mxu0 %v1153
    %1397 = vmatpush1.bf16.msra.mxu0 %v1152
    %1398 = vmatprep.subr.bf16.mxu0 %v1165
    %1399 = vmatpush1.bf16.msra.mxu0 %v1164
    %1400 = vmatprep.mubr.bf16.mxu0 %v151
    %1401 = vmatmul.mubr.bf16.gmra.mrb[0].mxu0 %v150
    %v1402 = vpop.f32.mrb[0].mxu0
    %v1403 = vadd.f32 %v351, %v1402
    %v1404 = vpop.f32.mrb[0].mxu0
    %v1405 = vadd.f32 %v355, %v1404
    %v1406 = vpop.f32.mrb[0].mxu0
    %v1407 = vadd.f32 %v351, %v1406
    %v1408 = vpop.f32.mrb[0].mxu0
    %v1409 = vadd.f32 %v355, %v1408
    %1410 = vdwg.mxu0
    %1411 = vmatprep.subr.bf16.mxu0 %v987
    %1412 = vmatpush1.bf16.msra.mxu0 %v986
    %1413 = vmatprep.subr.bf16.mxu0 %v999
    %1414 = vmatpush1.bf16.msra.mxu0 %v998
    %1415 = vmatprep.subr.bf16.mxu0 %v1011
    %1416 = vmatpush1.bf16.msra.mxu0 %v1010
    %1417 = vmatprep.subr.bf16.mxu0 %v1023
    %1418 = vmatpush1.bf16.msra.mxu0 %v1022
    %1419 = vmatprep.subr.bf16.mxu0 %v1035
    %1420 = vmatpush1.bf16.msra.mxu0 %v1034
    %1421 = vmatprep.subr.bf16.mxu0 %v1047
    %1422 = vmatpush1.bf16.msra.mxu0 %v1046
    %1423 = vmatprep.subr.bf16.mxu0 %v1059
    %1424 = vmatpush1.bf16.msra.mxu0 %v1058
    %1425 = vmatprep.subr.bf16.mxu0 %v1071
    %1426 = vmatpush1.bf16.msra.mxu0 %v1070
    %1427 = vmatprep.subr.bf16.mxu0 %v1083
    %1428 = vmatpush1.bf16.msra.mxu0 %v1082
    %1429 = vmatprep.subr.bf16.mxu0 %v1095
    %1430 = vmatpush1.bf16.msra.mxu0 %v1094
    %1431 = vmatprep.subr.bf16.mxu0 %v1107
    %1432 = vmatpush1.bf16.msra.mxu0 %v1106
    %1433 = vmatprep.subr.bf16.mxu0 %v1119
    %1434 = vmatpush1.bf16.msra.mxu0 %v1118
    %1435 = vmatprep.subr.bf16.mxu0 %v1131
    %1436 = vmatpush1.bf16.msra.mxu0 %v1130
    %1437 = vmatprep.subr.bf16.mxu0 %v1143
    %1438 = vmatpush1.bf16.msra.mxu0 %v1142
    %1439 = vmatprep.subr.bf16.mxu0 %v1155
    %1440 = vmatpush1.bf16.msra.mxu0 %v1154
    %1441 = vmatprep.subr.bf16.mxu0 %v1167
    %1442 = vmatpush1.bf16.msra.mxu0 %v1166
    %1443 = vmatprep.mubr.bf16.mxu0 %v151
    %1444 = vmatmul.mubr.bf16.gmra.mrb[0].mxu0 %v150
    %v1445 = vpop.f32.mrb[0].mxu0
    %v1446 = vadd.f32 %v359, %v1445
    %v1447 = vpop.f32.mrb[0].mxu0
    %v1448 = vadd.f32 %v363, %v1447
    %v1449 = vpop.f32.mrb[0].mxu0
    %v1450 = vadd.f32 %v359, %v1449
    %v1451 = vpop.f32.mrb[0].mxu0
    %v1452 = vadd.f32 %v363, %v1451
    %1453 = vdwg.mxu0
    %1454 = vmatprep.subr.bf16.mxu0 %v989
    %1455 = vmatpush1.bf16.msra.mxu0 %v988
    %1456 = vmatprep.subr.bf16.mxu0 %v1001
    %1457 = vmatpush1.bf16.msra.mxu0 %v1000
    %1458 = vmatprep.subr.bf16.mxu0 %v1013
    %1459 = vmatpush1.bf16.msra.mxu0 %v1012
    %1460 = vmatprep.subr.bf16.mxu0 %v1025
    %1461 = vmatpush1.bf16.msra.mxu0 %v1024
    %1462 = vmatprep.subr.bf16.mxu0 %v1037
    %1463 = vmatpush1.bf16.msra.mxu0 %v1036
    %1464 = vmatprep.subr.bf16.mxu0 %v1049
    %1465 = vmatpush1.bf16.msra.mxu0 %v1048
    %1466 = vmatprep.subr.bf16.mxu0 %v1061
    %1467 = vmatpush1.bf16.msra.mxu0 %v1060
    %1468 = vmatprep.subr.bf16.mxu0 %v1073
    %1469 = vmatpush1.bf16.msra.mxu0 %v1072
    %1470 = vmatprep.subr.bf16.mxu0 %v1085
    %1471 = vmatpush1.bf16.msra.mxu0 %v1084
    %1472 = vmatprep.subr.bf16.mxu0 %v1097
    %1473 = vmatpush1.bf16.msra.mxu0 %v1096
    %1474 = vmatprep.subr.bf16.mxu0 %v1109
    %1475 = vmatpush1.bf16.msra.mxu0 %v1108
    %1476 = vmatprep.subr.bf16.mxu0 %v1121
    %1477 = vmatpush1.bf16.msra.mxu0 %v1120
    %1478 = vmatprep.subr.bf16.mxu0 %v1133
    %1479 = vmatpush1.bf16.msra.mxu0 %v1132
    %1480 = vmatprep.subr.bf16.mxu0 %v1145
    %1481 = vmatpush1.bf16.msra.mxu0 %v1144
    %1482 = vmatprep.subr.bf16.mxu0 %v1157
    %1483 = vmatpush1.bf16.msra.mxu0 %v1156
    %1484 = vmatprep.subr.bf16.mxu0 %v1169
    %1485 = vmatpush1.bf16.msra.mxu0 %v1168
    %1486 = vmatprep.mubr.bf16.mxu0 %v151
    %1487 = vmatmul.mubr.bf16.gmra.mrb[0].mxu0 %v150
    %v1488 = vpop.f32.mrb[0].mxu0
    %v1489 = vadd.f32 %v367, %v1488
    %v1490 = vpop.f32.mrb[0].mxu0
    %v1491 = vadd.f32 %v371, %v1490
    %v1492 = vpop.f32.mrb[0].mxu0
    %v1493 = vadd.f32 %v367, %v1492
    %v1494 = vpop.f32.mrb[0].mxu0
    %v1495 = vadd.f32 %v371, %v1494
    %1496 = vdwg.mxu0
    %1497 = vmatprep.subr.bf16.mxu0 %v991
    %1498 = vmatpush1.bf16.msra.mxu0 %v990
    %1499 = vmatprep.subr.bf16.mxu0 %v1003
    %1500 = vmatpush1.bf16.msra.mxu0 %v1002
    %1501 = vmatprep.subr.bf16.mxu0 %v1015
    %1502 = vmatpush1.bf16.msra.mxu0 %v1014
    %1503 = vmatprep.subr.bf16.mxu0 %v1027
    %1504 = vmatpush1.bf16.msra.mxu0 %v1026
    %1505 = vmatprep.subr.bf16.mxu0 %v1039
    %1506 = vmatpush1.bf16.msra.mxu0 %v1038
    %1507 = vmatprep.subr.bf16.mxu0 %v1051
    %1508 = vmatpush1.bf16.msra.mxu0 %v1050
    %1509 = vmatprep.subr.bf16.mxu0 %v1063
    %1510 = vmatpush1.bf16.msra.mxu0 %v1062
    %1511 = vmatprep.subr.bf16.mxu0 %v1075
    %1512 = vmatpush1.bf16.msra.mxu0 %v1074
    %1513 = vmatprep.subr.bf16.mxu0 %v1087
    %1514 = vmatpush1.bf16.msra.mxu0 %v1086
    %1515 = vmatprep.subr.bf16.mxu0 %v1099
    %1516 = vmatpush1.bf16.msra.mxu0 %v1098
    %1517 = vmatprep.subr.bf16.mxu0 %v1111
    %1518 = vmatpush1.bf16.msra.mxu0 %v1110
    %1519 = vmatprep.subr.bf16.mxu0 %v1123
    %1520 = vmatpush1.bf16.msra.mxu0 %v1122
    %1521 = vmatprep.subr.bf16.mxu0 %v1135
    %1522 = vmatpush1.bf16.msra.mxu0 %v1134
    %1523 = vmatprep.subr.bf16.mxu0 %v1147
    %1524 = vmatpush1.bf16.msra.mxu0 %v1146
    %1525 = vmatprep.subr.bf16.mxu0 %v1159
    %1526 = vmatpush1.bf16.msra.mxu0 %v1158
    %1527 = vmatprep.subr.bf16.mxu0 %v1171
    %1528 = vmatpush1.bf16.msra.mxu0 %v1170
    %1529 = vmatprep.mubr.bf16.mxu0 %v151
    %1530 = vmatmul.mubr.bf16.gmra.mrb[0].mxu0 %v150
    %v1531 = vpop.f32.mrb[0].mxu0
    %v1532 = vadd.f32 %v375, %v1531
    %v1533 = vpop.f32.mrb[0].mxu0
    %v1534 = vadd.f32 %v379, %v1533
    %v1535 = vpop.f32.mrb[0].mxu0
    %v1536 = vadd.f32 %v375, %v1535
    %v1537 = vpop.f32.mrb[0].mxu0
    %v1538 = vadd.f32 %v379, %v1537
    %1539 = vdwg.mxu0
    %1540 = vmatprep.subr.bf16.mxu0 %v993
    %1541 = vmatpush1.bf16.msra.mxu0 %v992
    %1542 = vmatprep.subr.bf16.mxu0 %v1005
    %1543 = vmatpush1.bf16.msra.mxu0 %v1004
    %1544 = vmatprep.subr.bf16.mxu0 %v1017
    %1545 = vmatpush1.bf16.msra.mxu0 %v1016
    %1546 = vmatprep.subr.bf16.mxu0 %v1029
    %1547 = vmatpush1.bf16.msra.mxu0 %v1028
    %1548 = vmatprep.subr.bf16.mxu0 %v1041
    %1549 = vmatpush1.bf16.msra.mxu0 %v1040
    %1550 = vmatprep.subr.bf16.mxu0 %v1053
    %1551 = vmatpush1.bf16.msra.mxu0 %v1052
    %1552 = vmatprep.subr.bf16.mxu0 %v1065
    %1553 = vmatpush1.bf16.msra.mxu0 %v1064
    %1554 = vmatprep.subr.bf16.mxu0 %v1077
    %1555 = vmatpush1.bf16.msra.mxu0 %v1076
    %1556 = vmatprep.subr.bf16.mxu0 %v1089
    %1557 = vmatpush1.bf16.msra.mxu0 %v1088
    %1558 = vmatprep.subr.bf16.mxu0 %v1101
    %1559 = vmatpush1.bf16.msra.mxu0 %v1100
    %1560 = vmatprep.subr.bf16.mxu0 %v1113
    %1561 = vmatpush1.bf16.msra.mxu0 %v1112
    %1562 = vmatprep.subr.bf16.mxu0 %v1125
    %1563 = vmatpush1.bf16.msra.mxu0 %v1124
    %1564 = vmatprep.subr.bf16.mxu0 %v1137
    %1565 = vmatpush1.bf16.msra.mxu0 %v1136
    %1566 = vmatprep.subr.bf16.mxu0 %v1149
    %1567 = vmatpush1.bf16.msra.mxu0 %v1148
    %1568 = vmatprep.subr.bf16.mxu0 %v1161
    %1569 = vmatpush1.bf16.msra.mxu0 %v1160
    %1570 = vmatprep.subr.bf16.mxu0 %v1173
    %1571 = vmatpush1.bf16.msra.mxu0 %v1172
    %1572 = vmatprep.mubr.bf16.mxu0 %v151
    %1573 = vmatmul.mubr.bf16.gmra.mrb[0].mxu0 %v150
    %v1574 = vpop.f32.mrb[0].mxu0
    %v1575 = vadd.f32 %v383, %v1574
    %v1576 = vpop.f32.mrb[0].mxu0
    %v1577 = vadd.f32 %v387, %v1576
    %v1578 = vpop.f32.mrb[0].mxu0
    %v1579 = vadd.f32 %v383, %v1578
    %v1580 = vpop.f32.mrb[0].mxu0
    %v1581 = vadd.f32 %v387, %v1580
    %1582 = vdwg.mxu0
    %1583 = vmatprep.subr.bf16.mxu0 %v995
    %1584 = vmatpush1.bf16.msra.mxu0 %v994
    %1585 = vmatprep.subr.bf16.mxu0 %v1007
    %1586 = vmatpush1.bf16.msra.mxu0 %v1006
    %1587 = vmatprep.subr.bf16.mxu0 %v1019
    %1588 = vmatpush1.bf16.msra.mxu0 %v1018
    %1589 = vmatprep.subr.bf16.mxu0 %v1031
    %1590 = vmatpush1.bf16.msra.mxu0 %v1030
    %1591 = vmatprep.subr.bf16.mxu0 %v1043
    %1592 = vmatpush1.bf16.msra.mxu0 %v1042
    %1593 = vmatprep.subr.bf16.mxu0 %v1055
    %1594 = vmatpush1.bf16.msra.mxu0 %v1054
    %1595 = vmatprep.subr.bf16.mxu0 %v1067
    %1596 = vmatpush1.bf16.msra.mxu0 %v1066
    %1597 = vmatprep.subr.bf16.mxu0 %v1079
    %1598 = vmatpush1.bf16.msra.mxu0 %v1078
    %1599 = vmatprep.subr.bf16.mxu0 %v1091
    %1600 = vmatpush1.bf16.msra.mxu0 %v1090
    %1601 = vmatprep.subr.bf16.mxu0 %v1103
    %1602 = vmatpush1.bf16.msra.mxu0 %v1102
    %1603 = vmatprep.subr.bf16.mxu0 %v1115
    %1604 = vmatpush1.bf16.msra.mxu0 %v1114
    %1605 = vmatprep.subr.bf16.mxu0 %v1127
    %1606 = vmatpush1.bf16.msra.mxu0 %v1126
    %1607 = vmatprep.subr.bf16.mxu0 %v1139
    %1608 = vmatpush1.bf16.msra.mxu0 %v1138
    %1609 = vmatprep.subr.bf16.mxu0 %v1151
    %1610 = vmatpush1.bf16.msra.mxu0 %v1150
    %1611 = vmatprep.subr.bf16.mxu0 %v1163
    %1612 = vmatpush1.bf16.msra.mxu0 %v1162
    %1613 = vmatprep.subr.bf16.mxu0 %v1175
    %1614 = vmatpush1.bf16.msra.mxu0 %v1174
    %1615 = vmatprep.mubr.bf16.mxu0 %v151
    %1616 = vmatmul.mubr.bf16.gmra.mrb[0].mxu0 %v150
    %v1617 = vpop.f32.mrb[0].mxu0
    %v1618 = vadd.f32 %v391, %v1617
    %v1619 = vpop.f32.mrb[0].mxu0
    %v1620 = vadd.f32 %v395, %v1619
    %v1621 = vpop.f32.mrb[0].mxu0
    %v1622 = vadd.f32 %v391, %v1621
    %v1623 = vpop.f32.mrb[0].mxu0
    %v1624 = vadd.f32 %v395, %v1623
    %1625 = vdwg.mxu0
    %v1626 = vmax.f32 %v1403, 0.0
    %v1627 = vmax.f32 %v1405, 0.0
    %v1628 = vmax.f32 %v1446, 0.0
    %v1629 = vmax.f32 %v1448, 0.0
    %v1630 = vmax.f32 %v1489, 0.0
    %v1631 = vmax.f32 %v1491, 0.0
    %v1632 = vmax.f32 %v1532, 0.0
    %v1633 = vmax.f32 %v1534, 0.0
    %v1634 = vmax.f32 %v1575, 0.0
    %v1635 = vmax.f32 %v1577, 0.0
    %v1636 = vmax.f32 %v1618, 0.0
    %v1637 = vmax.f32 %v1620, 0.0
    %v1638 = vmax.f32 %v1407, 0.0
    %v1639 = vmax.f32 %v1409, 0.0
    %v1640 = vmax.f32 %v1450, 0.0
    %v1641 = vmax.f32 %v1452, 0.0
    %v1642 = vmax.f32 %v1493, 0.0
    %v1643 = vmax.f32 %v1495, 0.0
    %v1644 = vmax.f32 %v1536, 0.0
    %v1645 = vmax.f32 %v1538, 0.0
    %v1646 = vmax.f32 %v1579, 0.0
    %v1647 = vmax.f32 %v1581, 0.0
    %v1648 = vmax.f32 %v1622, 0.0
    %v1649 = vmax.f32 %v1624, 0.0
    %v1650 = vpack.c.bf16 %v1638, %v1626
    %v1651 = vpack.c.bf16 %v1639, %v1627
    %v1652 = vpack.c.bf16 %v1640, %v1628
    %v1653 = vpack.c.bf16 %v1641, %v1629
    %v1654 = vpack.c.bf16 %v1642, %v1630
    %v1655 = vpack.c.bf16 %v1643, %v1631
    %v1656 = vpack.c.bf16 %v1644, %v1632
    %v1657 = vpack.c.bf16 %v1645, %v1633
    %v1658 = vpack.c.bf16 %v1646, %v1634
    %v1659 = vpack.c.bf16 %v1647, %v1635
    %v1660 = vpack.c.bf16 %v1648, %v1636
    %v1661 = vpack.c.bf16 %v1649, %v1637
    %v1662 = vld [vmem:[#allocation8] sm:$0xf]
    %v1663 = vld [vmem:[#allocation8 + $0x4] sm:$0xf]
    %v1664 = vld [vmem:[#allocation8 + $0x8] sm:$0xf]
    %v1665 = vld [vmem:[#allocation8 + $0xc] sm:$0xf]
    %v1666 = vld [vmem:[#allocation8 + $0x10] sm:$0xf]
    %v1667 = vld [vmem:[#allocation8 + $0x14] sm:$0xf]
    %v1668 = vld [vmem:[#allocation8 + $0x18] sm:$0xf]
    %v1669 = vld [vmem:[#allocation8 + $0x1c] sm:$0xf]
    %v1670 = vld [vmem:[#allocation8 + $0x20] sm:$0xf]
    %v1671 = vld [vmem:[#allocation8 + $0x24] sm:$0xf]
    %v1672 = vld [vmem:[#allocation8 + $0x28] sm:$0xf]
    %v1673 = vld [vmem:[#allocation8 + $0x2c] sm:$0xf]
    %v1674 = vld [vmem:[#allocation8 + $0x30] sm:$0xf]
    %v1675 = vld [vmem:[#allocation8 + $0x34] sm:$0xf]
    %v1676 = vld [vmem:[#allocation8 + $0x38] sm:$0xf]
    %v1677 = vld [vmem:[#allocation8 + $0x3c] sm:$0xf]
    %v1678 = vld [vmem:[#allocation8 + $0x40] sm:$0xf]
    %v1679 = vld [vmem:[#allocation8 + $0x44] sm:$0xf]
    %v1680 = vld [vmem:[#allocation8 + $0x48] sm:$0xf]
    %v1681 = vld [vmem:[#allocation8 + $0x4c] sm:$0xf]
    %v1682 = vld [vmem:[#allocation8 + $0x50] sm:$0xf]
    %v1683 = vld [vmem:[#allocation8 + $0x54] sm:$0xf]
    %v1684 = vld [vmem:[#allocation8 + $0x58] sm:$0xf]
    %v1685 = vld [vmem:[#allocation8 + $0x5c] sm:$0xf]
    %v1686 = vld [vmem:[#allocation8 + $0x60] sm:$0xf]
    %v1687 = vld [vmem:[#allocation8 + $0x64] sm:$0xf]
    %v1688 = vld [vmem:[#allocation8 + $0x68] sm:$0xf]
    %v1689 = vld [vmem:[#allocation8 + $0x6c] sm:$0xf]
    %v1690 = vld [vmem:[#allocation8 + $0x70] sm:$0xf]
    %v1691 = vld [vmem:[#allocation8 + $0x74] sm:$0xf]
    %v1692 = vld [vmem:[#allocation8 + $0x78] sm:$0xf]
    %v1693 = vld [vmem:[#allocation8 + $0x7c] sm:$0xf]
    %v1694 = vld [vmem:[#allocation8 + $0x80] sm:$0xf]
    %v1695 = vld [vmem:[#allocation8 + $0x84] sm:$0xf]
    %v1696 = vld [vmem:[#allocation8 + $0x88] sm:$0xf]
    %v1697 = vld [vmem:[#allocation8 + $0x8c] sm:$0xf]
    %v1698 = vld [vmem:[#allocation8 + $0x90] sm:$0xf]
    %v1699 = vld [vmem:[#allocation8 + $0x94] sm:$0xf]
    %v1700 = vld [vmem:[#allocation8 + $0x98] sm:$0xf]
    %v1701 = vld [vmem:[#allocation8 + $0x9c] sm:$0xf]
    %v1702 = vld [vmem:[#allocation8 + $0xa0] sm:$0xf]
    %v1703 = vld [vmem:[#allocation8 + $0xa4] sm:$0xf]
    %v1704 = vld [vmem:[#allocation8 + $0xa8] sm:$0xf]
    %v1705 = vld [vmem:[#allocation8 + $0xac] sm:$0xf]
    %v1706 = vld [vmem:[#allocation8 + $0xb0] sm:$0xf]
    %v1707 = vld [vmem:[#allocation8 + $0xb4] sm:$0xf]
    %v1708 = vld [vmem:[#allocation8 + $0xb8] sm:$0xf]
    %v1709 = vld [vmem:[#allocation8 + $0xbc] sm:$0xf]
    %v1710 = vld [vmem:[#allocation8 + $0xc0] sm:$0xf]
    %v1711 = vld [vmem:[#allocation8 + $0xc4] sm:$0xf]
    %v1712 = vld [vmem:[#allocation8 + $0xc8] sm:$0xf]
    %v1713 = vld [vmem:[#allocation8 + $0xcc] sm:$0xf]
    %v1714 = vld [vmem:[#allocation8 + $0xd0] sm:$0xf]
    %v1715 = vld [vmem:[#allocation8 + $0xd4] sm:$0xf]
    %v1716 = vld [vmem:[#allocation8 + $0xd8] sm:$0xf]
    %v1717 = vld [vmem:[#allocation8 + $0xdc] sm:$0xf]
    %v1718 = vld [vmem:[#allocation8 + $0xe0] sm:$0xf]
    %v1719 = vld [vmem:[#allocation8 + $0xe4] sm:$0xf]
    %v1720 = vld [vmem:[#allocation8 + $0xe8] sm:$0xf]
    %v1721 = vld [vmem:[#allocation8 + $0xec] sm:$0xf]
    %v1722 = vld [vmem:[#allocation8 + $0xf0] sm:$0xf]
    %v1723 = vld [vmem:[#allocation8 + $0xf4] sm:$0xf]
    %v1724 = vld [vmem:[#allocation8 + $0xf8] sm:$0xf]
    %v1725 = vld [vmem:[#allocation8 + $0xfc] sm:$0xf]
    %v1726 = vld [vmem:[#allocation8 + $0x100] sm:$0xf]
    %v1727 = vld [vmem:[#allocation8 + $0x104] sm:$0xf]
    %v1728 = vld [vmem:[#allocation8 + $0x108] sm:$0xf]
    %v1729 = vld [vmem:[#allocation8 + $0x10c] sm:$0xf]
    %v1730 = vld [vmem:[#allocation8 + $0x110] sm:$0xf]
    %v1731 = vld [vmem:[#allocation8 + $0x114] sm:$0xf]
    %v1732 = vld [vmem:[#allocation8 + $0x118] sm:$0xf]
    %v1733 = vld [vmem:[#allocation8 + $0x11c] sm:$0xf]
    %v1734 = vld [vmem:[#allocation8 + $0x120] sm:$0xf]
    %v1735 = vld [vmem:[#allocation8 + $0x124] sm:$0xf]
    %v1736 = vld [vmem:[#allocation8 + $0x128] sm:$0xf]
    %v1737 = vld [vmem:[#allocation8 + $0x12c] sm:$0xf]
    %v1738 = vld [vmem:[#allocation8 + $0x130] sm:$0xf]
    %v1739 = vld [vmem:[#allocation8 + $0x134] sm:$0xf]
    %v1740 = vld [vmem:[#allocation8 + $0x138] sm:$0xf]
    %v1741 = vld [vmem:[#allocation8 + $0x13c] sm:$0xf]
    %v1742 = vld [vmem:[#allocation8 + $0x140] sm:$0xf]
    %v1743 = vld [vmem:[#allocation8 + $0x144] sm:$0xf]
    %v1744 = vld [vmem:[#allocation8 + $0x148] sm:$0xf]
    %v1745 = vld [vmem:[#allocation8 + $0x14c] sm:$0xf]
    %v1746 = vld [vmem:[#allocation8 + $0x150] sm:$0xf]
    %v1747 = vld [vmem:[#allocation8 + $0x154] sm:$0xf]
    %v1748 = vld [vmem:[#allocation8 + $0x158] sm:$0xf]
    %v1749 = vld [vmem:[#allocation8 + $0x15c] sm:$0xf]
    %v1750 = vld [vmem:[#allocation8 + $0x160] sm:$0xf]
    %v1751 = vld [vmem:[#allocation8 + $0x164] sm:$0xf]
    %v1752 = vld [vmem:[#allocation8 + $0x168] sm:$0xf]
    %v1753 = vld [vmem:[#allocation8 + $0x16c] sm:$0xf]
    %v1754 = vld [vmem:[#allocation8 + $0x170] sm:$0xf]
    %v1755 = vld [vmem:[#allocation8 + $0x174] sm:$0xf]
    %v1756 = vld [vmem:[#allocation8 + $0x178] sm:$0xf]
    %v1757 = vld [vmem:[#allocation8 + $0x17c] sm:$0xf]
    %v1758 = vld [vmem:[#allocation8 + $0x180] sm:$0xf]
    %v1759 = vld [vmem:[#allocation8 + $0x184] sm:$0xf]
    %v1760 = vld [vmem:[#allocation8 + $0x188] sm:$0xf]
    %v1761 = vld [vmem:[#allocation8 + $0x18c] sm:$0xf]
    %v1762 = vld [vmem:[#allocation8 + $0x190] sm:$0xf]
    %v1763 = vld [vmem:[#allocation8 + $0x194] sm:$0xf]
    %v1764 = vld [vmem:[#allocation8 + $0x198] sm:$0xf]
    %v1765 = vld [vmem:[#allocation8 + $0x19c] sm:$0xf]
    %v1766 = vld [vmem:[#allocation8 + $0x1a0] sm:$0xf]
    %v1767 = vld [vmem:[#allocation8 + $0x1a4] sm:$0xf]
    %v1768 = vld [vmem:[#allocation8 + $0x1a8] sm:$0xf]
    %v1769 = vld [vmem:[#allocation8 + $0x1ac] sm:$0xf]
    %v1770 = vld [vmem:[#allocation8 + $0x1b0] sm:$0xf]
    %v1771 = vld [vmem:[#allocation8 + $0x1b4] sm:$0xf]
    %v1772 = vld [vmem:[#allocation8 + $0x1b8] sm:$0xf]
    %v1773 = vld [vmem:[#allocation8 + $0x1bc] sm:$0xf]
    %v1774 = vld [vmem:[#allocation8 + $0x1c0] sm:$0xf]
    %v1775 = vld [vmem:[#allocation8 + $0x1c4] sm:$0xf]
    %v1776 = vld [vmem:[#allocation8 + $0x1c8] sm:$0xf]
    %v1777 = vld [vmem:[#allocation8 + $0x1cc] sm:$0xf]
    %v1778 = vld [vmem:[#allocation8 + $0x1d0] sm:$0xf]
    %v1779 = vld [vmem:[#allocation8 + $0x1d4] sm:$0xf]
    %v1780 = vld [vmem:[#allocation8 + $0x1d8] sm:$0xf]
    %v1781 = vld [vmem:[#allocation8 + $0x1dc] sm:$0xf]
    %v1782 = vld [vmem:[#allocation8 + $0x1e0] sm:$0xf]
    %v1783 = vld [vmem:[#allocation8 + $0x1e4] sm:$0xf]
    %v1784 = vld [vmem:[#allocation8 + $0x1e8] sm:$0xf]
    %v1785 = vld [vmem:[#allocation8 + $0x1ec] sm:$0xf]
    %v1786 = vld [vmem:[#allocation8 + $0x1f0] sm:$0xf]
    %v1787 = vld [vmem:[#allocation8 + $0x1f4] sm:$0xf]
    %v1788 = vld [vmem:[#allocation8 + $0x1f8] sm:$0xf]
    %v1789 = vld [vmem:[#allocation8 + $0x1fc] sm:$0xf]
    %v1790 = vld [vmem:[#allocation8 + $0x200] sm:$0xf]
    %v1791 = vld [vmem:[#allocation8 + $0x204] sm:$0xf]
    %v1792 = vld [vmem:[#allocation8 + $0x208] sm:$0xf]
    %v1793 = vld [vmem:[#allocation8 + $0x20c] sm:$0xf]
    %v1794 = vld [vmem:[#allocation8 + $0x210] sm:$0xf]
    %v1795 = vld [vmem:[#allocation8 + $0x214] sm:$0xf]
    %v1796 = vld [vmem:[#allocation8 + $0x218] sm:$0xf]
    %v1797 = vld [vmem:[#allocation8 + $0x21c] sm:$0xf]
    %v1798 = vld [vmem:[#allocation8 + $0x220] sm:$0xf]
    %v1799 = vld [vmem:[#allocation8 + $0x224] sm:$0xf]
    %v1800 = vld [vmem:[#allocation8 + $0x228] sm:$0xf]
    %v1801 = vld [vmem:[#allocation8 + $0x22c] sm:$0xf]
    %v1802 = vld [vmem:[#allocation8 + $0x230] sm:$0xf]
    %v1803 = vld [vmem:[#allocation8 + $0x234] sm:$0xf]
    %v1804 = vld [vmem:[#allocation8 + $0x238] sm:$0xf]
    %v1805 = vld [vmem:[#allocation8 + $0x23c] sm:$0xf]
    %v1806 = vld [vmem:[#allocation8 + $0x240] sm:$0xf]
    %v1807 = vld [vmem:[#allocation8 + $0x244] sm:$0xf]
    %v1808 = vld [vmem:[#allocation8 + $0x248] sm:$0xf]
    %v1809 = vld [vmem:[#allocation8 + $0x24c] sm:$0xf]
    %v1810 = vld [vmem:[#allocation8 + $0x250] sm:$0xf]
    %v1811 = vld [vmem:[#allocation8 + $0x254] sm:$0xf]
    %v1812 = vld [vmem:[#allocation8 + $0x258] sm:$0xf]
    %v1813 = vld [vmem:[#allocation8 + $0x25c] sm:$0xf]
    %v1814 = vld [vmem:[#allocation8 + $0x260] sm:$0xf]
    %v1815 = vld [vmem:[#allocation8 + $0x264] sm:$0xf]
    %v1816 = vld [vmem:[#allocation8 + $0x268] sm:$0xf]
    %v1817 = vld [vmem:[#allocation8 + $0x26c] sm:$0xf]
    %v1818 = vld [vmem:[#allocation8 + $0x270] sm:$0xf]
    %v1819 = vld [vmem:[#allocation8 + $0x274] sm:$0xf]
    %v1820 = vld [vmem:[#allocation8 + $0x278] sm:$0xf]
    %v1821 = vld [vmem:[#allocation8 + $0x27c] sm:$0xf]
    %v1822 = vld [vmem:[#allocation8 + $0x280] sm:$0xf]
    %v1823 = vld [vmem:[#allocation8 + $0x284] sm:$0xf]
    %v1824 = vld [vmem:[#allocation8 + $0x288] sm:$0xf]
    %v1825 = vld [vmem:[#allocation8 + $0x28c] sm:$0xf]
    %v1826 = vld [vmem:[#allocation8 + $0x290] sm:$0xf]
    %v1827 = vld [vmem:[#allocation8 + $0x294] sm:$0xf]
    %v1828 = vld [vmem:[#allocation8 + $0x298] sm:$0xf]
    %v1829 = vld [vmem:[#allocation8 + $0x29c] sm:$0xf]
    %v1830 = vld [vmem:[#allocation8 + $0x2a0] sm:$0xf]
    %v1831 = vld [vmem:[#allocation8 + $0x2a4] sm:$0xf]
    %v1832 = vld [vmem:[#allocation8 + $0x2a8] sm:$0xf]
    %v1833 = vld [vmem:[#allocation8 + $0x2ac] sm:$0xf]
    %v1834 = vld [vmem:[#allocation8 + $0x2b0] sm:$0xf]
    %v1835 = vld [vmem:[#allocation8 + $0x2b4] sm:$0xf]
    %v1836 = vld [vmem:[#allocation8 + $0x2b8] sm:$0xf]
    %v1837 = vld [vmem:[#allocation8 + $0x2bc] sm:$0xf]
    %v1838 = vld [vmem:[#allocation8 + $0x2c0] sm:$0xf]
    %v1839 = vld [vmem:[#allocation8 + $0x2c4] sm:$0xf]
    %v1840 = vld [vmem:[#allocation8 + $0x2c8] sm:$0xf]
    %v1841 = vld [vmem:[#allocation8 + $0x2cc] sm:$0xf]
    %v1842 = vld [vmem:[#allocation8 + $0x2d0] sm:$0xf]
    %v1843 = vld [vmem:[#allocation8 + $0x2d4] sm:$0xf]
    %v1844 = vld [vmem:[#allocation8 + $0x2d8] sm:$0xf]
    %v1845 = vld [vmem:[#allocation8 + $0x2dc] sm:$0xf]
    %v1846 = vld [vmem:[#allocation8 + $0x2e0] sm:$0xf]
    %v1847 = vld [vmem:[#allocation8 + $0x2e4] sm:$0xf]
    %v1848 = vld [vmem:[#allocation8 + $0x2e8] sm:$0xf]
    %v1849 = vld [vmem:[#allocation8 + $0x2ec] sm:$0xf]
    %v1850 = vld [vmem:[#allocation8 + $0x2f0] sm:$0xf]
    %v1851 = vld [vmem:[#allocation8 + $0x2f4] sm:$0xf]
    %v1852 = vld [vmem:[#allocation8 + $0x2f8] sm:$0xf]
    %v1853 = vld [vmem:[#allocation8 + $0x2fc] sm:$0xf]
    %v1854 = vld [vmem:[%s4] sm:$0x1]
    %v1856 = vlaneseq
    %v1857 = vshrl.u32 %v1856, 7
    %v1858 = vsub.s32 0, %v1857
    %v1859 = vrot.slane %v1854, %v1858
    %v2053 = vunpack.c.l.b16 %v1662
    %v2054 = vunpack.c.l.b16 %v1663
    %v2055 = vunpack.c.l.b16 %v1664
    %v2056 = vunpack.c.l.b16 %v1665
    %v2057 = vunpack.c.l.b16 %v1666
    %v2058 = vunpack.c.l.b16 %v1667
    %v2059 = vunpack.c.l.b16 %v1668
    %v2060 = vunpack.c.l.b16 %v1669
    %v2061 = vunpack.c.l.b16 %v1670
    %v2062 = vunpack.c.l.b16 %v1671
    %v2063 = vunpack.c.l.b16 %v1672
    %v2064 = vunpack.c.l.b16 %v1673
    %v2065 = vunpack.c.l.b16 %v1674
    %v2066 = vunpack.c.l.b16 %v1675
    %v2067 = vunpack.c.l.b16 %v1676
    %v2068 = vunpack.c.l.b16 %v1677
    %v2069 = vunpack.c.l.b16 %v1678
    %v2070 = vunpack.c.l.b16 %v1679
    %v2071 = vunpack.c.l.b16 %v1680
    %v2072 = vunpack.c.l.b16 %v1681
    %v2073 = vunpack.c.l.b16 %v1682
    %v2074 = vunpack.c.l.b16 %v1683
    %v2075 = vunpack.c.l.b16 %v1684
    %v2076 = vunpack.c.l.b16 %v1685
    %v2077 = vunpack.c.l.b16 %v1686
    %v2078 = vunpack.c.l.b16 %v1687
    %v2079 = vunpack.c.l.b16 %v1688
    %v2080 = vunpack.c.l.b16 %v1689
    %v2081 = vunpack.c.l.b16 %v1690
    %v2082 = vunpack.c.l.b16 %v1691
    %v2083 = vunpack.c.l.b16 %v1692
    %v2084 = vunpack.c.l.b16 %v1693
    %v2085 = vunpack.c.l.b16 %v1694
    %v2086 = vunpack.c.l.b16 %v1695
    %v2087 = vunpack.c.l.b16 %v1696
    %v2088 = vunpack.c.l.b16 %v1697
    %v2089 = vunpack.c.l.b16 %v1698
    %v2090 = vunpack.c.l.b16 %v1699
    %v2091 = vunpack.c.l.b16 %v1700
    %v2092 = vunpack.c.l.b16 %v1701
    %v2093 = vunpack.c.l.b16 %v1702
    %v2094 = vunpack.c.l.b16 %v1703
    %v2095 = vunpack.c.l.b16 %v1704
    %v2096 = vunpack.c.l.b16 %v1705
    %v2097 = vunpack.c.l.b16 %v1706
    %v2098 = vunpack.c.l.b16 %v1707
    %v2099 = vunpack.c.l.b16 %v1708
    %v2100 = vunpack.c.l.b16 %v1709
    %v2101 = vunpack.c.l.b16 %v1710
    %v2102 = vunpack.c.l.b16 %v1711
    %v2103 = vunpack.c.l.b16 %v1712
    %v2104 = vunpack.c.l.b16 %v1713
    %v2105 = vunpack.c.l.b16 %v1714
    %v2106 = vunpack.c.l.b16 %v1715
    %v2107 = vunpack.c.l.b16 %v1716
    %v2108 = vunpack.c.l.b16 %v1717
    %v2109 = vunpack.c.l.b16 %v1718
    %v2110 = vunpack.c.l.b16 %v1719
    %v2111 = vunpack.c.l.b16 %v1720
    %v2112 = vunpack.c.l.b16 %v1721
    %v2113 = vunpack.c.l.b16 %v1722
    %v2114 = vunpack.c.l.b16 %v1723
    %v2115 = vunpack.c.l.b16 %v1724
    %v2116 = vunpack.c.l.b16 %v1725
    %v2117 = vunpack.c.l.b16 %v1726
    %v2118 = vunpack.c.l.b16 %v1727
    %v2119 = vunpack.c.l.b16 %v1728
    %v2120 = vunpack.c.l.b16 %v1729
    %v2121 = vunpack.c.l.b16 %v1730
    %v2122 = vunpack.c.l.b16 %v1731
    %v2123 = vunpack.c.l.b16 %v1732
    %v2124 = vunpack.c.l.b16 %v1733
    %v2125 = vunpack.c.l.b16 %v1734
    %v2126 = vunpack.c.l.b16 %v1735
    %v2127 = vunpack.c.l.b16 %v1736
    %v2128 = vunpack.c.l.b16 %v1737
    %v2129 = vunpack.c.l.b16 %v1738
    %v2130 = vunpack.c.l.b16 %v1739
    %v2131 = vunpack.c.l.b16 %v1740
    %v2132 = vunpack.c.l.b16 %v1741
    %v2133 = vunpack.c.l.b16 %v1742
    %v2134 = vunpack.c.l.b16 %v1743
    %v2135 = vunpack.c.l.b16 %v1744
    %v2136 = vunpack.c.l.b16 %v1745
    %v2137 = vunpack.c.l.b16 %v1746
    %v2138 = vunpack.c.l.b16 %v1747
    %v2139 = vunpack.c.l.b16 %v1748
    %v2140 = vunpack.c.l.b16 %v1749
    %v2141 = vunpack.c.l.b16 %v1750
    %v2142 = vunpack.c.l.b16 %v1751
    %v2143 = vunpack.c.l.b16 %v1752
    %v2144 = vunpack.c.l.b16 %v1753
    %v2145 = vunpack.c.l.b16 %v1754
    %v2146 = vunpack.c.l.b16 %v1755
    %v2147 = vunpack.c.l.b16 %v1756
    %v2148 = vunpack.c.l.b16 %v1757
    %v2149 = vunpack.c.l.b16 %v1758
    %v2150 = vunpack.c.l.b16 %v1759
    %v2151 = vunpack.c.l.b16 %v1760
    %v2152 = vunpack.c.l.b16 %v1761
    %v2153 = vunpack.c.l.b16 %v1762
    %v2154 = vunpack.c.l.b16 %v1763
    %v2155 = vunpack.c.l.b16 %v1764
    %v2156 = vunpack.c.l.b16 %v1765
    %v2157 = vunpack.c.l.b16 %v1766
    %v2158 = vunpack.c.l.b16 %v1767
    %v2159 = vunpack.c.l.b16 %v1768
    %v2160 = vunpack.c.l.b16 %v1769
    %v2161 = vunpack.c.l.b16 %v1770
    %v2162 = vunpack.c.l.b16 %v1771
    %v2163 = vunpack.c.l.b16 %v1772
    %v2164 = vunpack.c.l.b16 %v1773
    %v2165 = vunpack.c.l.b16 %v1774
    %v2166 = vunpack.c.l.b16 %v1775
    %v2167 = vunpack.c.l.b16 %v1776
    %v2168 = vunpack.c.l.b16 %v1777
    %v2169 = vunpack.c.l.b16 %v1778
    %v2170 = vunpack.c.l.b16 %v1779
    %v2171 = vunpack.c.l.b16 %v1780
    %v2172 = vunpack.c.l.b16 %v1781
    %v2173 = vunpack.c.l.b16 %v1782
    %v2174 = vunpack.c.l.b16 %v1783
    %v2175 = vunpack.c.l.b16 %v1784
    %v2176 = vunpack.c.l.b16 %v1785
    %v2177 = vunpack.c.l.b16 %v1786
    %v2178 = vunpack.c.l.b16 %v1787
    %v2179 = vunpack.c.l.b16 %v1788
    %v2180 = vunpack.c.l.b16 %v1789
    %v2181 = vunpack.c.l.b16 %v1790
    %v2182 = vunpack.c.l.b16 %v1791
    %v2183 = vunpack.c.l.b16 %v1792
    %v2184 = vunpack.c.l.b16 %v1793
    %v2185 = vunpack.c.l.b16 %v1794
    %v2186 = vunpack.c.l.b16 %v1795
    %v2187 = vunpack.c.l.b16 %v1796
    %v2188 = vunpack.c.l.b16 %v1797
    %v2189 = vunpack.c.l.b16 %v1798
    %v2190 = vunpack.c.l.b16 %v1799
    %v2191 = vunpack.c.l.b16 %v1800
    %v2192 = vunpack.c.l.b16 %v1801
    %v2193 = vunpack.c.l.b16 %v1802
    %v2194 = vunpack.c.l.b16 %v1803
    %v2195 = vunpack.c.l.b16 %v1804
    %v2196 = vunpack.c.l.b16 %v1805
    %v2197 = vunpack.c.l.b16 %v1806
    %v2198 = vunpack.c.l.b16 %v1807
    %v2199 = vunpack.c.l.b16 %v1808
    %v2200 = vunpack.c.l.b16 %v1809
    %v2201 = vunpack.c.l.b16 %v1810
    %v2202 = vunpack.c.l.b16 %v1811
    %v2203 = vunpack.c.l.b16 %v1812
    %v2204 = vunpack.c.l.b16 %v1813
    %v2205 = vunpack.c.l.b16 %v1814
    %v2206 = vunpack.c.l.b16 %v1815
    %v2207 = vunpack.c.l.b16 %v1816
    %v2208 = vunpack.c.l.b16 %v1817
    %v2209 = vunpack.c.l.b16 %v1818
    %v2210 = vunpack.c.l.b16 %v1819
    %v2211 = vunpack.c.l.b16 %v1820
    %v2212 = vunpack.c.l.b16 %v1821
    %v2213 = vunpack.c.l.b16 %v1822
    %v2214 = vunpack.c.l.b16 %v1823
    %v2215 = vunpack.c.l.b16 %v1824
    %v2216 = vunpack.c.l.b16 %v1825
    %v2217 = vunpack.c.l.b16 %v1826
    %v2218 = vunpack.c.l.b16 %v1827
    %v2219 = vunpack.c.l.b16 %v1828
    %v2220 = vunpack.c.l.b16 %v1829
    %v2221 = vunpack.c.l.b16 %v1830
    %v2222 = vunpack.c.l.b16 %v1831
    %v2223 = vunpack.c.l.b16 %v1832
    %v2224 = vunpack.c.l.b16 %v1833
    %v2225 = vunpack.c.l.b16 %v1834
    %v2226 = vunpack.c.l.b16 %v1835
    %v2227 = vunpack.c.l.b16 %v1836
    %v2228 = vunpack.c.l.b16 %v1837
    %v2229 = vunpack.c.l.b16 %v1838
    %v2230 = vunpack.c.l.b16 %v1839
    %v2231 = vunpack.c.l.b16 %v1840
    %v2232 = vunpack.c.l.b16 %v1841
    %v2233 = vunpack.c.l.b16 %v1842
    %v2234 = vunpack.c.l.b16 %v1843
    %v2235 = vunpack.c.l.b16 %v1844
    %v2236 = vunpack.c.l.b16 %v1845
    %v2237 = vunpack.c.l.b16 %v1846
    %v2238 = vunpack.c.l.b16 %v1847
    %v2239 = vunpack.c.l.b16 %v1848
    %v2240 = vunpack.c.l.b16 %v1849
    %v2241 = vunpack.c.l.b16 %v1850
    %v2242 = vunpack.c.l.b16 %v1851
    %v2243 = vunpack.c.l.b16 %v1852
    %v2244 = vunpack.c.l.b16 %v1853
    %v2245 = vpack.c.b16 %v2054, %v2053
    %v2246 = vpack.c.b16 %v2056, %v2055
    %v2247 = vpack.c.b16 %v2058, %v2057
    %v2248 = vpack.c.b16 %v2060, %v2059
    %v2249 = vpack.c.b16 %v2062, %v2061
    %v2250 = vpack.c.b16 %v2064, %v2063
    %v2251 = vpack.c.b16 %v2066, %v2065
    %v2252 = vpack.c.b16 %v2068, %v2067
    %v2253 = vpack.c.b16 %v2070, %v2069
    %v2254 = vpack.c.b16 %v2072, %v2071
    %v2255 = vpack.c.b16 %v2074, %v2073
    %v2256 = vpack.c.b16 %v2076, %v2075
    %v2257 = vpack.c.b16 %v2078, %v2077
    %v2258 = vpack.c.b16 %v2080, %v2079
    %v2259 = vpack.c.b16 %v2082, %v2081
    %v2260 = vpack.c.b16 %v2084, %v2083
    %v2261 = vpack.c.b16 %v2086, %v2085
    %v2262 = vpack.c.b16 %v2088, %v2087
    %v2263 = vpack.c.b16 %v2090, %v2089
    %v2264 = vpack.c.b16 %v2092, %v2091
    %v2265 = vpack.c.b16 %v2094, %v2093
    %v2266 = vpack.c.b16 %v2096, %v2095
    %v2267 = vpack.c.b16 %v2098, %v2097
    %v2268 = vpack.c.b16 %v2100, %v2099
    %v2269 = vpack.c.b16 %v2102, %v2101
    %v2270 = vpack.c.b16 %v2104, %v2103
    %v2271 = vpack.c.b16 %v2106, %v2105
    %v2272 = vpack.c.b16 %v2108, %v2107
    %v2273 = vpack.c.b16 %v2110, %v2109
    %v2274 = vpack.c.b16 %v2112, %v2111
    %v2275 = vpack.c.b16 %v2114, %v2113
    %v2276 = vpack.c.b16 %v2116, %v2115
    %v2277 = vpack.c.b16 %v2118, %v2117
    %v2278 = vpack.c.b16 %v2120, %v2119
    %v2279 = vpack.c.b16 %v2122, %v2121
    %v2280 = vpack.c.b16 %v2124, %v2123
    %v2281 = vpack.c.b16 %v2126, %v2125
    %v2282 = vpack.c.b16 %v2128, %v2127
    %v2283 = vpack.c.b16 %v2130, %v2129
    %v2284 = vpack.c.b16 %v2132, %v2131
    %v2285 = vpack.c.b16 %v2134, %v2133
    %v2286 = vpack.c.b16 %v2136, %v2135
    %v2287 = vpack.c.b16 %v2138, %v2137
    %v2288 = vpack.c.b16 %v2140, %v2139
    %v2289 = vpack.c.b16 %v2142, %v2141
    %v2290 = vpack.c.b16 %v2144, %v2143
    %v2291 = vpack.c.b16 %v2146, %v2145
    %v2292 = vpack.c.b16 %v2148, %v2147
    %v2293 = vpack.c.b16 %v2150, %v2149
    %v2294 = vpack.c.b16 %v2152, %v2151
    %v2295 = vpack.c.b16 %v2154, %v2153
    %v2296 = vpack.c.b16 %v2156, %v2155
    %v2297 = vpack.c.b16 %v2158, %v2157
    %v2298 = vpack.c.b16 %v2160, %v2159
    %v2299 = vpack.c.b16 %v2162, %v2161
    %v2300 = vpack.c.b16 %v2164, %v2163
    %v2301 = vpack.c.b16 %v2166, %v2165
    %v2302 = vpack.c.b16 %v2168, %v2167
    %v2303 = vpack.c.b16 %v2170, %v2169
    %v2304 = vpack.c.b16 %v2172, %v2171
    %v2305 = vpack.c.b16 %v2174, %v2173
    %v2306 = vpack.c.b16 %v2176, %v2175
    %v2307 = vpack.c.b16 %v2178, %v2177
    %v2308 = vpack.c.b16 %v2180, %v2179
    %v2309 = vpack.c.b16 %v2182, %v2181
    %v2310 = vpack.c.b16 %v2184, %v2183
    %v2311 = vpack.c.b16 %v2186, %v2185
    %v2312 = vpack.c.b16 %v2188, %v2187
    %v2313 = vpack.c.b16 %v2190, %v2189
    %v2314 = vpack.c.b16 %v2192, %v2191
    %v2315 = vpack.c.b16 %v2194, %v2193
    %v2316 = vpack.c.b16 %v2196, %v2195
    %v2317 = vpack.c.b16 %v2198, %v2197
    %v2318 = vpack.c.b16 %v2200, %v2199
    %v2319 = vpack.c.b16 %v2202, %v2201
    %v2320 = vpack.c.b16 %v2204, %v2203
    %v2321 = vpack.c.b16 %v2206, %v2205
    %v2322 = vpack.c.b16 %v2208, %v2207
    %v2323 = vpack.c.b16 %v2210, %v2209
    %v2324 = vpack.c.b16 %v2212, %v2211
    %v2325 = vpack.c.b16 %v2214, %v2213
    %v2326 = vpack.c.b16 %v2216, %v2215
    %v2327 = vpack.c.b16 %v2218, %v2217
    %v2328 = vpack.c.b16 %v2220, %v2219
    %v2329 = vpack.c.b16 %v2222, %v2221
    %v2330 = vpack.c.b16 %v2224, %v2223
    %v2331 = vpack.c.b16 %v2226, %v2225
    %v2332 = vpack.c.b16 %v2228, %v2227
    %v2333 = vpack.c.b16 %v2230, %v2229
    %v2334 = vpack.c.b16 %v2232, %v2231
    %v2335 = vpack.c.b16 %v2234, %v2233
    %v2336 = vpack.c.b16 %v2236, %v2235
    %v2337 = vpack.c.b16 %v2238, %v2237
    %v2338 = vpack.c.b16 %v2240, %v2239
    %v2339 = vpack.c.b16 %v2242, %v2241
    %v2340 = vpack.c.b16 %v2244, %v2243
    %2437 = vmatprep.subr.bf16.mxu0 0
    %2438 = vmatpush1.bf16.msra.mxu0 %v2245
    %2439 = vmatprep.subr.bf16.mxu0 0
    %2440 = vmatpush1.bf16.msra.mxu0 %v2246
    %2441 = vmatprep.subr.bf16.mxu0 0
    %2442 = vmatpush1.bf16.msra.mxu0 %v2247
    %2443 = vmatprep.subr.bf16.mxu0 0
    %2444 = vmatpush1.bf16.msra.mxu0 %v2248
    %2445 = vmatprep.subr.bf16.mxu0 0
    %2446 = vmatpush1.bf16.msra.mxu0 %v2249
    %2447 = vmatprep.subr.bf16.mxu0 0
    %2448 = vmatpush1.bf16.msra.mxu0 %v2250
    %2449 = vmatprep.subr.bf16.mxu0 0
    %2450 = vmatpush1.bf16.msra.mxu0 %v2251
    %2451 = vmatprep.subr.bf16.mxu0 0
    %2452 = vmatpush1.bf16.msra.mxu0 %v2252
    %2453 = vmatprep.subr.bf16.mxu0 0
    %2454 = vmatpush1.bf16.msra.mxu0 %v2253
    %2455 = vmatprep.subr.bf16.mxu0 0
    %2456 = vmatpush1.bf16.msra.mxu0 %v2254
    %2457 = vmatprep.subr.bf16.mxu0 0
    %2458 = vmatpush1.bf16.msra.mxu0 %v2255
    %2459 = vmatprep.subr.bf16.mxu0 0
    %2460 = vmatpush1.bf16.msra.mxu0 %v2256
    %2461 = vmatprep.subr.bf16.mxu0 0
    %2462 = vmatpush1.bf16.msra.mxu0 %v2257
    %2463 = vmatprep.subr.bf16.mxu0 0
    %2464 = vmatpush1.bf16.msra.mxu0 %v2258
    %2465 = vmatprep.subr.bf16.mxu0 0
    %2466 = vmatpush1.bf16.msra.mxu0 %v2259
    %2467 = vmatprep.subr.bf16.mxu0 0
    %2468 = vmatpush1.bf16.msra.mxu0 %v2260
    %2469 = vmatprep.mubr.bf16.mxu0 %v1651
    %2470 = vmatmul.mubr.bf16.gmra.mrb[0].mxu0 %v1650
    %v2471 = vpop.f32.mrb[0].mxu0
    %v2472 = vadd.f32 %v1859, %v2471
    %v2473 = vpop.f32.mrb[0].mxu0
    %v2474 = vpop.f32.mrb[0].mxu0
    %v2475 = vadd.f32 %v1859, %v2474
    %v2476 = vpop.f32.mrb[0].mxu0
    %2477 = vdwg.mxu0
    %2478 = vmatprep.subr.bf16.mxu0 0
    %2479 = vmatpush1.bf16.msra.mxu0 %v2261
    %2480 = vmatprep.subr.bf16.mxu0 0
    %2481 = vmatpush1.bf16.msra.mxu0 %v2262
    %2482 = vmatprep.subr.bf16.mxu0 0
    %2483 = vmatpush1.bf16.msra.mxu0 %v2263
    %2484 = vmatprep.subr.bf16.mxu0 0
    %2485 = vmatpush1.bf16.msra.mxu0 %v2264
    %2486 = vmatprep.subr.bf16.mxu0 0
    %2487 = vmatpush1.bf16.msra.mxu0 %v2265
    %2488 = vmatprep.subr.bf16.mxu0 0
    %2489 = vmatpush1.bf16.msra.mxu0 %v2266
    %2490 = vmatprep.subr.bf16.mxu0 0
    %2491 = vmatpush1.bf16.msra.mxu0 %v2267
    %2492 = vmatprep.subr.bf16.mxu0 0
    %2493 = vmatpush1.bf16.msra.mxu0 %v2268
    %2494 = vmatprep.subr.bf16.mxu0 0
    %2495 = vmatpush1.bf16.msra.mxu0 %v2269
    %2496 = vmatprep.subr.bf16.mxu0 0
    %2497 = vmatpush1.bf16.msra.mxu0 %v2270
    %2498 = vmatprep.subr.bf16.mxu0 0
    %2499 = vmatpush1.bf16.msra.mxu0 %v2271
    %2500 = vmatprep.subr.bf16.mxu0 0
    %2501 = vmatpush1.bf16.msra.mxu0 %v2272
    %2502 = vmatprep.subr.bf16.mxu0 0
    %2503 = vmatpush1.bf16.msra.mxu0 %v2273
    %2504 = vmatprep.subr.bf16.mxu0 0
    %2505 = vmatpush1.bf16.msra.mxu0 %v2274
    %2506 = vmatprep.subr.bf16.mxu0 0
    %2507 = vmatpush1.bf16.msra.mxu0 %v2275
    %2508 = vmatprep.subr.bf16.mxu0 0
    %2509 = vmatpush1.bf16.msra.mxu0 %v2276
    %2510 = vmatprep.mubr.bf16.mxu0 %v1653
    %2511 = vmatmul.mubr.bf16.gmra.mrb[0].mxu0 %v1652
    %v2512 = vpop.f32.mrb[0].mxu0
    %v2513 = vadd.f32 %v2472, %v2512
    %v2514 = vpop.f32.mrb[0].mxu0
    %v2515 = vpop.f32.mrb[0].mxu0
    %v2516 = vadd.f32 %v2475, %v2515
    %v2517 = vpop.f32.mrb[0].mxu0
    %2518 = vdwg.mxu0
    %2519 = vmatprep.subr.bf16.mxu0 0
    %2520 = vmatpush1.bf16.msra.mxu0 %v2277
    %2521 = vmatprep.subr.bf16.mxu0 0
    %2522 = vmatpush1.bf16.msra.mxu0 %v2278
    %2523 = vmatprep.subr.bf16.mxu0 0
    %2524 = vmatpush1.bf16.msra.mxu0 %v2279
    %2525 = vmatprep.subr.bf16.mxu0 0
    %2526 = vmatpush1.bf16.msra.mxu0 %v2280
    %2527 = vmatprep.subr.bf16.mxu0 0
    %2528 = vmatpush1.bf16.msra.mxu0 %v2281
    %2529 = vmatprep.subr.bf16.mxu0 0
    %2530 = vmatpush1.bf16.msra.mxu0 %v2282
    %2531 = vmatprep.subr.bf16.mxu0 0
    %2532 = vmatpush1.bf16.msra.mxu0 %v2283
    %2533 = vmatprep.subr.bf16.mxu0 0
    %2534 = vmatpush1.bf16.msra.mxu0 %v2284
    %2535 = vmatprep.subr.bf16.mxu0 0
    %2536 = vmatpush1.bf16.msra.mxu0 %v2285
    %2537 = vmatprep.subr.bf16.mxu0 0
    %2538 = vmatpush1.bf16.msra.mxu0 %v2286
    %2539 = vmatprep.subr.bf16.mxu0 0
    %2540 = vmatpush1.bf16.msra.mxu0 %v2287
    %2541 = vmatprep.subr.bf16.mxu0 0
    %2542 = vmatpush1.bf16.msra.mxu0 %v2288
    %2543 = vmatprep.subr.bf16.mxu0 0
    %2544 = vmatpush1.bf16.msra.mxu0 %v2289
    %2545 = vmatprep.subr.bf16.mxu0 0
    %2546 = vmatpush1.bf16.msra.mxu0 %v2290
    %2547 = vmatprep.subr.bf16.mxu0 0
    %2548 = vmatpush1.bf16.msra.mxu0 %v2291
    %2549 = vmatprep.subr.bf16.mxu0 0
    %2550 = vmatpush1.bf16.msra.mxu0 %v2292
    %2551 = vmatprep.mubr.bf16.mxu0 %v1655
    %2552 = vmatmul.mubr.bf16.gmra.mrb[0].mxu0 %v1654
    %v2553 = vpop.f32.mrb[0].mxu0
    %v2554 = vadd.f32 %v2513, %v2553
    %v2555 = vpop.f32.mrb[0].mxu0
    %v2556 = vpop.f32.mrb[0].mxu0
    %v2557 = vadd.f32 %v2516, %v2556
    %v2558 = vpop.f32.mrb[0].mxu0
    %2559 = vdwg.mxu0
    %2560 = vmatprep.subr.bf16.mxu0 0
    %2561 = vmatpush1.bf16.msra.mxu0 %v2293
    %2562 = vmatprep.subr.bf16.mxu0 0
    %2563 = vmatpush1.bf16.msra.mxu0 %v2294
    %2564 = vmatprep.subr.bf16.mxu0 0
    %2565 = vmatpush1.bf16.msra.mxu0 %v2295
    %2566 = vmatprep.subr.bf16.mxu0 0
    %2567 = vmatpush1.bf16.msra.mxu0 %v2296
    %2568 = vmatprep.subr.bf16.mxu0 0
    %2569 = vmatpush1.bf16.msra.mxu0 %v2297
    %2570 = vmatprep.subr.bf16.mxu0 0
    %2571 = vmatpush1.bf16.msra.mxu0 %v2298
    %2572 = vmatprep.subr.bf16.mxu0 0
    %2573 = vmatpush1.bf16.msra.mxu0 %v2299
    %2574 = vmatprep.subr.bf16.mxu0 0
    %2575 = vmatpush1.bf16.msra.mxu0 %v2300
    %2576 = vmatprep.subr.bf16.mxu0 0
    %2577 = vmatpush1.bf16.msra.mxu0 %v2301
    %2578 = vmatprep.subr.bf16.mxu0 0
    %2579 = vmatpush1.bf16.msra.mxu0 %v2302
    %2580 = vmatprep.subr.bf16.mxu0 0
    %2581 = vmatpush1.bf16.msra.mxu0 %v2303
    %2582 = vmatprep.subr.bf16.mxu0 0
    %2583 = vmatpush1.bf16.msra.mxu0 %v2304
    %2584 = vmatprep.subr.bf16.mxu0 0
    %2585 = vmatpush1.bf16.msra.mxu0 %v2305
    %2586 = vmatprep.subr.bf16.mxu0 0
    %2587 = vmatpush1.bf16.msra.mxu0 %v2306
    %2588 = vmatprep.subr.bf16.mxu0 0
    %2589 = vmatpush1.bf16.msra.mxu0 %v2307
    %2590 = vmatprep.subr.bf16.mxu0 0
    %2591 = vmatpush1.bf16.msra.mxu0 %v2308
    %2592 = vmatprep.mubr.bf16.mxu0 %v1657
    %2593 = vmatmul.mubr.bf16.gmra.mrb[0].mxu0 %v1656
    %v2594 = vpop.f32.mrb[0].mxu0
    %v2595 = vadd.f32 %v2554, %v2594
    %v2596 = vpop.f32.mrb[0].mxu0
    %v2597 = vpop.f32.mrb[0].mxu0
    %v2598 = vadd.f32 %v2557, %v2597
    %v2599 = vpop.f32.mrb[0].mxu0
    %2600 = vdwg.mxu0
    %2601 = vmatprep.subr.bf16.mxu0 0
    %2602 = vmatpush1.bf16.msra.mxu0 %v2309
    %2603 = vmatprep.subr.bf16.mxu0 0
    %2604 = vmatpush1.bf16.msra.mxu0 %v2310
    %2605 = vmatprep.subr.bf16.mxu0 0
    %2606 = vmatpush1.bf16.msra.mxu0 %v2311
    %2607 = vmatprep.subr.bf16.mxu0 0
    %2608 = vmatpush1.bf16.msra.mxu0 %v2312
    %2609 = vmatprep.subr.bf16.mxu0 0
    %2610 = vmatpush1.bf16.msra.mxu0 %v2313
    %2611 = vmatprep.subr.bf16.mxu0 0
    %2612 = vmatpush1.bf16.msra.mxu0 %v2314
    %2613 = vmatprep.subr.bf16.mxu0 0
    %2614 = vmatpush1.bf16.msra.mxu0 %v2315
    %2615 = vmatprep.subr.bf16.mxu0 0
    %2616 = vmatpush1.bf16.msra.mxu0 %v2316
    %2617 = vmatprep.subr.bf16.mxu0 0
    %2618 = vmatpush1.bf16.msra.mxu0 %v2317
    %2619 = vmatprep.subr.bf16.mxu0 0
    %2620 = vmatpush1.bf16.msra.mxu0 %v2318
    %2621 = vmatprep.subr.bf16.mxu0 0
    %2622 = vmatpush1.bf16.msra.mxu0 %v2319
    %2623 = vmatprep.subr.bf16.mxu0 0
    %2624 = vmatpush1.bf16.msra.mxu0 %v2320
    %2625 = vmatprep.subr.bf16.mxu0 0
    %2626 = vmatpush1.bf16.msra.mxu0 %v2321
    %2627 = vmatprep.subr.bf16.mxu0 0
    %2628 = vmatpush1.bf16.msra.mxu0 %v2322
    %2629 = vmatprep.subr.bf16.mxu0 0
    %2630 = vmatpush1.bf16.msra.mxu0 %v2323
    %2631 = vmatprep.subr.bf16.mxu0 0
    %2632 = vmatpush1.bf16.msra.mxu0 %v2324
    %2633 = vmatprep.mubr.bf16.mxu0 %v1659
    %2634 = vmatmul.mubr.bf16.gmra.mrb[0].mxu0 %v1658
    %v2635 = vpop.f32.mrb[0].mxu0
    %v2636 = vadd.f32 %v2595, %v2635
    %v2637 = vpop.f32.mrb[0].mxu0
    %v2638 = vpop.f32.mrb[0].mxu0
    %v2639 = vadd.f32 %v2598, %v2638
    %v2640 = vpop.f32.mrb[0].mxu0
    %2641 = vdwg.mxu0
    %2642 = vmatprep.subr.bf16.mxu0 0
    %2643 = vmatpush1.bf16.msra.mxu0 %v2325
    %2644 = vmatprep.subr.bf16.mxu0 0
    %2645 = vmatpush1.bf16.msra.mxu0 %v2326
    %2646 = vmatprep.subr.bf16.mxu0 0
    %2647 = vmatpush1.bf16.msra.mxu0 %v2327
    %2648 = vmatprep.subr.bf16.mxu0 0
    %2649 = vmatpush1.bf16.msra.mxu0 %v2328
    %2650 = vmatprep.subr.bf16.mxu0 0
    %2651 = vmatpush1.bf16.msra.mxu0 %v2329
    %2652 = vmatprep.subr.bf16.mxu0 0
    %2653 = vmatpush1.bf16.msra.mxu0 %v2330
    %2654 = vmatprep.subr.bf16.mxu0 0
    %2655 = vmatpush1.bf16.msra.mxu0 %v2331
    %2656 = vmatprep.subr.bf16.mxu0 0
    %2657 = vmatpush1.bf16.msra.mxu0 %v2332
    %2658 = vmatprep.subr.bf16.mxu0 0
    %2659 = vmatpush1.bf16.msra.mxu0 %v2333
    %2660 = vmatprep.subr.bf16.mxu0 0
    %2661 = vmatpush1.bf16.msra.mxu0 %v2334
    %2662 = vmatprep.subr.bf16.mxu0 0
    %2663 = vmatpush1.bf16.msra.mxu0 %v2335
    %2664 = vmatprep.subr.bf16.mxu0 0
    %2665 = vmatpush1.bf16.msra.mxu0 %v2336
    %2666 = vmatprep.subr.bf16.mxu0 0
    %2667 = vmatpush1.bf16.msra.mxu0 %v2337
    %2668 = vmatprep.subr.bf16.mxu0 0
    %2669 = vmatpush1.bf16.msra.mxu0 %v2338
    %2670 = vmatprep.subr.bf16.mxu0 0
    %2671 = vmatpush1.bf16.msra.mxu0 %v2339
    %2672 = vmatprep.subr.bf16.mxu0 0
    %2673 = vmatpush1.bf16.msra.mxu0 %v2340
    %2674 = vmatprep.mubr.bf16.mxu0 %v1661
    %2675 = vmatmul.mubr.bf16.gmra.mrb[0].mxu0 %v1660
    %v2676 = vpop.f32.mrb[0].mxu0
    %v2677 = vadd.f32 %v2636, %v2676
    %v2678 = vpop.f32.mrb[0].mxu0
    %v2679 = vpop.f32.mrb[0].mxu0
    %v2680 = vadd.f32 %v2639, %v2679
    %v2681 = vpop.f32.mrb[0].mxu0
    %2682 = vdwg.mxu0
    %v2683 = vmax.f32 %v2677, 0.0
    %v2684 = vmax.f32 %v2680, 0.0
    %v2685 = vpack.c.bf16 %v2684, %v2683
    %v2686 = vld [vmem:[#allocation10] sm:$0xf]
    %v2687 = vld [vmem:[#allocation10 + $0x4] sm:$0xf]
    %v2688 = vld [vmem:[#allocation10 + $0x8] sm:$0xf]
    %v2689 = vld [vmem:[#allocation10 + $0xc] sm:$0xf]
    %v2690 = vld [vmem:[#allocation10 + $0x10] sm:$0xf]
    %v2691 = vld [vmem:[#allocation10 + $0x14] sm:$0xf]
    %v2692 = vld [vmem:[#allocation10 + $0x18] sm:$0xf]
    %v2693 = vld [vmem:[#allocation10 + $0x1c] sm:$0xf]
    %v2694 = vld [vmem:[#allocation10 + $0x20] sm:$0xf]
    %v2695 = vld [vmem:[#allocation10 + $0x24] sm:$0xf]
    %v2696 = vld [vmem:[#allocation10 + $0x28] sm:$0xf]
    %v2697 = vld [vmem:[#allocation10 + $0x2c] sm:$0xf]
    %v2698 = vld [vmem:[#allocation10 + $0x30] sm:$0xf]
    %v2699 = vld [vmem:[#allocation10 + $0x34] sm:$0xf]
    %v2700 = vld [vmem:[#allocation10 + $0x38] sm:$0xf]
    %v2701 = vld [vmem:[#allocation10 + $0x3c] sm:$0xf]
    %v2702 = vld [vmem:[%s6] sm:$0x1]
    %v2704 = vlaneseq
    %v2705 = vshrl.u32 %v2704, 7
    %v2706 = vsub.s32 0, %v2705
    %v2707 = vrot.slane %v2702, %v2706
    %v2725 = vunpack.c.l.b16 %v2686
    %v2726 = vunpack.c.l.b16 %v2687
    %v2727 = vunpack.c.l.b16 %v2688
    %v2728 = vunpack.c.l.b16 %v2689
    %v2729 = vunpack.c.l.b16 %v2690
    %v2730 = vunpack.c.l.b16 %v2691
    %v2731 = vunpack.c.l.b16 %v2692
    %v2732 = vunpack.c.l.b16 %v2693
    %v2733 = vunpack.c.l.b16 %v2694
    %v2734 = vunpack.c.l.b16 %v2695
    %v2735 = vunpack.c.l.b16 %v2696
    %v2736 = vunpack.c.l.b16 %v2697
    %v2737 = vunpack.c.l.b16 %v2698
    %v2738 = vunpack.c.l.b16 %v2699
    %v2739 = vunpack.c.l.b16 %v2700
    %v2740 = vunpack.c.l.b16 %v2701
    %v2741 = vpack.c.b16 %v2726, %v2725
    %v2742 = vpack.c.b16 %v2728, %v2727
    %v2743 = vpack.c.b16 %v2730, %v2729
    %v2744 = vpack.c.b16 %v2732, %v2731
    %v2745 = vpack.c.b16 %v2734, %v2733
    %v2746 = vpack.c.b16 %v2736, %v2735
    %v2747 = vpack.c.b16 %v2738, %v2737
    %v2748 = vpack.c.b16 %v2740, %v2739
    %2757 = vmatprep.subr.bf16.mxu0 0
    %2758 = vmatpush1.bf16.msra.mxu0 %v2741
    %2759 = vmatprep.subr.bf16.mxu0 0
    %2760 = vmatpush1.bf16.msra.mxu0 %v2742
    %2761 = vmatprep.subr.bf16.mxu0 0
    %2762 = vmatpush1.bf16.msra.mxu0 %v2743
    %2763 = vmatprep.subr.bf16.mxu0 0
    %2764 = vmatpush1.bf16.msra.mxu0 %v2744
    %2765 = vmatprep.subr.bf16.mxu0 0
    %2766 = vmatpush1.bf16.msra.mxu0 %v2745
    %2767 = vmatprep.subr.bf16.mxu0 0
    %2768 = vmatpush1.bf16.msra.mxu0 %v2746
    %2769 = vmatprep.subr.bf16.mxu0 0
    %2770 = vmatpush1.bf16.msra.mxu0 %v2747
    %2771 = vmatprep.subr.bf16.mxu0 0
    %2772 = vmatpush1.bf16.msra.mxu0 %v2748
    %2773 = vmatprep.subr.bf16.mxu0 0
    %2774 = vmatpush1.bf16.msra.mxu0 0
    %2775 = vmatprep.subr.bf16.mxu0 0
    %2776 = vmatpush1.bf16.msra.mxu0 0
    %2777 = vmatprep.subr.bf16.mxu0 0
    %2778 = vmatpush1.bf16.msra.mxu0 0
    %2779 = vmatprep.subr.bf16.mxu0 0
    %2780 = vmatpush1.bf16.msra.mxu0 0
    %2781 = vmatprep.subr.bf16.mxu0 0
    %2782 = vmatpush1.bf16.msra.mxu0 0
    %2783 = vmatprep.subr.bf16.mxu0 0
    %2784 = vmatpush1.bf16.msra.mxu0 0
    %2785 = vmatprep.subr.bf16.mxu0 0
    %2786 = vmatpush1.bf16.msra.mxu0 0
    %2787 = vmatprep.subr.bf16.mxu0 0
    %2788 = vmatpush1.bf16.msra.mxu0 0
    %2789 = vmatprep.mubr.bf16.mxu0 0
    %2790 = vmatmul.mubr.bf16.gmra.mrb[0].mxu0 %v2685
    %v2791 = vpop.f32.mrb[0].mxu0
    %v2792 = vadd.f32 %v2707, %v2791
    %v2793 = vpop.f32.mrb[0].mxu0
    %v2794 = vpop.f32.mrb[0].mxu0
    %v2795 = vadd.f32 %v2707, %v2794
    %v2796 = vpop.f32.mrb[0].mxu0
    %2797 = vdwg.mxu0
    %v2798 = vmax.f32 %v2792, 0.0
    %v2799 = vmax.f32 %v2795, 0.0
    %v2800 = vpack.c.bf16 %v2799, %v2798
    %v2802 = vcombine.high %v2800, %v2800
    %v2804 = vunpack.c.l.s4 1966171168
    %v2805 = vunpack.c.0.s8 %v2804
    %v2806 = vlaneseq
    %v2807 = vshrl.u32 %v2806, 7
    %v2808 = vsub.s32 %v2805, %v2807
    %v2809 = vrot.slane %v2800, %v2808
    %v2811 = vunpack.c.l.s4 1966171168
    %v2812 = vunpack.c.0.s8 %v2811
    %v2813 = vlaneseq
    %v2814 = vshrl.u32 %v2813, 7
    %v2815 = vsub.s32 %v2812, %v2814
    %v2816 = vrot.slane %v2802, %v2815
    %v2817 = vcombine.high %v2809, %v2809
    %v2818 = vcombine.high %v2816, %v2816
    %v2820 = vunpack.c.l.s4 1966171168
    %v2821 = vunpack.c.0.s8 %v2820
    %v2822 = vlaneseq
    %v2823 = vshrl.u32 %v2822, 7
    %v2824 = vsub.s32 %v2821, %v2823
    %v2825 = vrot.slane %v2809, %v2824
    %v2827 = vunpack.c.l.s4 1966171168
    %v2828 = vunpack.c.0.s8 %v2827
    %v2829 = vlaneseq
    %v2830 = vshrl.u32 %v2829, 7
    %v2831 = vsub.s32 %v2828, %v2830
    %v2832 = vrot.slane %v2816, %v2831
    %v2834 = vunpack.c.l.s4 1966171168
    %v2835 = vunpack.c.0.s8 %v2834
    %v2836 = vlaneseq
    %v2837 = vshrl.u32 %v2836, 7
    %v2838 = vsub.s32 %v2835, %v2837
    %v2839 = vrot.slane %v2817, %v2838
    %v2841 = vunpack.c.l.s4 1966171168
    %v2842 = vunpack.c.0.s8 %v2841
    %v2843 = vlaneseq
    %v2844 = vshrl.u32 %v2843, 7
    %v2845 = vsub.s32 %v2842, %v2844
    %v2846 = vrot.slane %v2818, %v2845
    %v2847 = vcombine.high %v2825, %v2825
    %v2848 = vcombine.high %v2832, %v2832
    %v2849 = vcombine.high %v2839, %v2839
    %v2850 = vcombine.high %v2846, %v2846
    %2859 = vst [vmem:[#allocation11] sm:$0x1] %v2825
    %2860 = vst [vmem:[#allocation11 + $0x1] sm:$0x1] %v2839
    %2861 = vst [vmem:[#allocation11 + $0x2] sm:$0x1] %v2847
    %2862 = vst [vmem:[#allocation11 + $0x3] sm:$0x1] %v2849
    %2863 = vst [vmem:[#allocation11 + $0x4] sm:$0x1] %v2832
    %2864 = vst [vmem:[#allocation11 + $0x5] sm:$0x1] %v2846
    %2865 = vst [vmem:[#allocation11 + $0x6] sm:$0x1] %v2848
    %2866 = vst [vmem:[#allocation11 + $0x7] sm:$0x1] %v2850
    // Predicated region
    $region50: #{tpu_custom_call.1} parent=1 // pred_check
      _
    $region51: #{tpu_custom_call.1} parent=1 // pred_check_branch
      %2868 = sbr.rel (0) target = $region53
    $region52: #{tpu_custom_call.1} parent=1 // pred_region
      %s2870 = ssub.s32 128, 16
      %2871 = vsyncadd [#allocation4], %s2870
      %s2872 = sshll.u32 [#allocation11], 4
      %s2873 = int_to_ptr.vmem [resolvable:$true] %s2872
      %2878 = dma.vmem_to_hbm [thread:$0]  %s2873, 16, %s7, [#allocation4], 16, 16, 1
    $region53: #{tpu_custom_call.1} parent=1 // pred_fallthru
      _
    // Predicated region
    $region54: #{tpu_custom_call.1} parent=1 // pred_check
      _
    $region55: #{tpu_custom_call.1} parent=1 // pred_check_branch
      %2880 = sbr.rel (0) target = $region57
    $region56: #{tpu_custom_call.1} parent=1 // pred_region
      %2881 = dma.done [#allocation4], 128
    $region57: #{tpu_custom_call.1} parent=1 // pred_fallthru
      _
    %2882 = vsyncpa [#allocation3], 1
    %2883 = vsyncpa [#allocation6], 1
    %2884 = vsyncpa [#allocation9], 1
    %2885 = vsyncpa [#allocation4], 1

</llo_original>
